<compile_context>
chip_gen: v7x
topology: tpu7x:2x2x1
jax: 0.10.0
libtpu: 0.0.40
codegen_flags: <defaults>
</compile_context>

<pallas_src>
import functools

import jax
import jax.numpy as jnp
from jax.experimental import pallas as pl
from jax.experimental.pallas import tpu as pltpu


def _round_up(x, m):
    return ((x + m - 1) // m) * m


# ----------------------------------------------------------------------------
# Pallas kernels
# ----------------------------------------------------------------------------
def _stem_head_gap_kernel(patches_ref, stem_w_ref, stem_shift_ref,
                          head_w_ref, head_shift_ref, o_ref, acc_ref,
                          *, hw, mpad, tm):
    """Fused stem conv + BN + swish -> head 1x1 + BN + swish -> GAP accumulate.

    Grid = (B, N_tiles, M_tiles).  M (flattened spatial rows) is the innermost,
    "arbitrary" reduction axis.  GAP partial sums accumulate into an (8, tn)
    sublane-dense f32 scratch; the output block (b, j) is written once at the
    end of each M sweep (P3 accumulator pattern).
    """
    m = pl.program_id(2)
    last = pl.num_programs(2) - 1

    @pl.when(m == 0)
    def _():
        acc_ref[...] = jnp.zeros_like(acc_ref)

    # ---- stem: [tm, Kp] @ [Kp, stem_ch]   (BN scale pre-folded into weights)
    x = patches_ref[0]                                           # bf16 [tm, Kp]
    s = jnp.dot(x, stem_w_ref[...], preferred_element_type=jnp.float32)
    s = s + stem_shift_ref[...]
    s = s * jax.nn.sigmoid(s)                                    # swish, f32

    # ---- head 1x1: [tm, stem_ch] @ [stem_ch, tn]  (BN scale pre-folded)
    h = jnp.dot(s.astype(jnp.bfloat16), head_w_ref[...],
                preferred_element_type=jnp.float32)
    h = h + head_shift_ref[...]
    h = h * jax.nn.sigmoid(h)                                    # swish, f32

    tn = h.shape[-1]

    def _accumulate(hv):
        # [tm, tn] -> [tm//8, 8, tn] sum over the major axis: pure vreg VPU
        # adds into the 8-sublane-tall accumulator (no per-step partial store,
        # no per-step cross-sublane reduce).
        acc_ref[...] += hv.reshape(tm // 8, 8, tn).sum(axis=0)

    if mpad > hw:
        # Zero-padded patch rows do NOT give zero head activations (they yield
        # swish(swish(stem_shift)@head_w + head_shift)), so mask them out --
        # but only the tail M-tile contains such rows.
        @pl.when(m != last)
        def _():
            _accumulate(h)

        @pl.when(m == last)
        def _():
            row = jax.lax.broadcasted_iota(jnp.int32, (tm, 1), 0) + m * tm
            _accumulate(jnp.where(row < hw, h, 0.0))
    else:
        _accumulate(h)

    @pl.when(m == last)
    def _():
        pooled = jnp.sum(acc_ref[...], axis=0) * (1.0 / hw)      # [tn] f32
        o_ref[...] = pooled[None, None, :]


def stem_head_gap(patches, stem_w, stem_shift, head_w, head_shift,
                  *, hw, tm, tn):
    """patches: [B, Mpad, Kp] bf16 (zero-padded rows/cols),
    stem_w: [Kp, stem_ch] bf16, stem_shift: [1, stem_ch] f32,
    head_w: [stem_ch, head_ch] bf16, head_shift: [1, head_ch] f32
    -> pooled features [B, head_ch] f32."""
    B, Mpad, Kp = patches.shape
    stem_ch = stem_w.shape[1]
    head_ch = head_w.shape[1]
    assert Mpad % tm == 0 and head_ch % tn == 0 and tm % 8 == 0
    n_j = head_ch // tn

    # Advisory cost estimate so XLA can schedule the wrapper-side im2col /
    # transpose / pad around the custom call.
    flops = int(2 * B * Mpad * (n_j * Kp * stem_ch + stem_ch * head_ch))
    transcendentals = int(B * Mpad * (n_j * stem_ch + head_ch))
    bytes_accessed = int(B * n_j * Mpad * Kp * 2
                         + (Kp * stem_ch + stem_ch * head_ch) * 2
                         + B * head_ch * 4)

    kern = functools.partial(_stem_head_gap_kernel, hw=hw, mpad=Mpad, tm=tm)
    feats = pl.pallas_call(
        kern,
        out_shape=jax.ShapeDtypeStruct((B, 1, head_ch), jnp.float32),
        grid_spec=pltpu.PrefetchScalarGridSpec(
            num_scalar_prefetch=0,
            grid=(B, n_j, Mpad // tm),
            in_specs=[
                pl.BlockSpec((1, tm, Kp), lambda b, j, m: (b, m, 0)),
                pl.BlockSpec((Kp, stem_ch), lambda b, j, m: (0, 0)),
                pl.BlockSpec((1, stem_ch), lambda b, j, m: (0, 0)),
                pl.BlockSpec((stem_ch, tn), lambda b, j, m: (0, j)),
                pl.BlockSpec((1, tn), lambda b, j, m: (0, j)),
            ],
            out_specs=pl.BlockSpec((1, 1, tn), lambda b, j, m: (b, 0, j)),
            scratch_shapes=[pltpu.VMEM((8, tn), jnp.float32)],
        ),
        compiler_params=pltpu.CompilerParams(
            dimension_semantics=("parallel", "parallel", "arbitrary"),
            vmem_limit_bytes=32 * 1024 * 1024),
        cost_estimate=pl.CostEstimate(flops=flops,
                                      transcendentals=transcendentals,
                                      bytes_accessed=bytes_accessed),
    )(patches, stem_w, stem_shift, head_w, head_shift)
    return feats.reshape(B, head_ch)


def _fc_kernel(x_ref, w_ref, b_ref, o_ref):
    acc = jnp.dot(x_ref[...], w_ref[...], preferred_element_type=jnp.float32)
    o_ref[...] = (acc + b_ref[...]).astype(o_ref.dtype)


def fc_matmul_bias(x, w, b):
    """x: [Bp, K] bf16 (Bp padded to 8 sublanes), w: [K, Np] bf16 (Np padded to
    128 lanes), b: [1, Np] f32."""
    Bp, K = x.shape
    _, Np = w.shape
    return pl.pallas_call(
        _fc_kernel,
        out_shape=jax.ShapeDtypeStruct((Bp, Np), jnp.float32),
        grid_spec=pltpu.PrefetchScalarGridSpec(
            num_scalar_prefetch=0,
            grid=(1,),
            in_specs=[
                pl.BlockSpec((Bp, K), lambda i: (0, 0)),
                pl.BlockSpec((K, Np), lambda i: (0, 0)),
                pl.BlockSpec((1, Np), lambda i: (0, 0)),
            ],
            out_specs=pl.BlockSpec((Bp, Np), lambda i: (0, 0)),
        ),
        compiler_params=pltpu.CompilerParams(
            dimension_semantics=("arbitrary",),
            vmem_limit_bytes=32 * 1024 * 1024),
    )(x, w, b)


# ----------------------------------------------------------------------------
# Glue (reshapes / patch extraction / parameter setup) in plain JAX
# ----------------------------------------------------------------------------
def im2col_same(x_nhwc, kh, kw, stride):
    """TF-style 'same' padding (Conv2dStaticSamePadding) + patch extraction.
    Returns [B, out_h, out_w, kh*kw*C] with (kh, kw, cin) fastest-varying,
    matching the weight reshape below.  Keeps the input dtype (bf16 here)."""
    B, H, W, C = x_nhwc.shape
    out_h = -(-H // stride)
    out_w = -(-W // stride)
    pad_h = max((out_h - 1) * stride + kh - H, 0)
    pad_w = max((out_w - 1) * stride + kw - W, 0)
    xp = jnp.pad(
        x_nhwc,
        ((0, 0),
         (pad_h // 2, pad_h - pad_h // 2),
         (pad_w // 2, pad_w - pad_w // 2),
         (0, 0)))
    patches = []
    for i in range(kh):
        for j in range(kw):
            patches.append(
                xp[:, i:i + stride * out_h:stride, j:j + stride * out_w:stride, :])
    return jnp.concatenate(patches, axis=-1), out_h, out_w


def fold_bn(gamma, beta, mean, var, eps=1e-3):
    scale = gamma / jnp.sqrt(var + eps)
    shift = beta - mean * scale
    return scale[None, :], shift[None, :]


def init_params(key, num_classes, stem_ch=32, head_ch=2560, in_ch=3):
    ks = jax.random.split(key, 8)
    p = {}
    # stem conv 3x3 (stored [kh, kw, cin, cout] to match the im2col order)
    p["stem_w"] = jax.random.normal(ks[0], (3, 3, in_ch, stem_ch), jnp.float32) * 0.05
    p["stem_gamma"] = 1.0 + 0.01 * jax.random.normal(ks[1], (stem_ch,), jnp.float32)
    p["stem_beta"] = 0.01 * jax.random.normal(ks[2], (stem_ch,), jnp.float32)
    p["stem_mean"] = jnp.zeros((stem_ch,), jnp.float32)
    p["stem_var"] = jnp.ones((stem_ch,), jnp.float32)
    # head 1x1 conv -> 2560 channels (the feature width the FC expects)
    p["head_w"] = jax.random.normal(ks[3], (stem_ch, head_ch), jnp.float32) * 0.05
    p["head_gamma"] = 1.0 + 0.01 * jax.random.normal(ks[4], (head_ch,), jnp.float32)
    p["head_beta"] = 0.01 * jax.random.normal(ks[5], (head_ch,), jnp.float32)
    p["head_mean"] = jnp.zeros((head_ch,), jnp.float32)
    p["head_var"] = jnp.ones((head_ch,), jnp.float32)
    # self.extract._fc = nn.Linear(2560, num_classes)
    p["fc_w"] = jax.random.normal(ks[6], (head_ch, num_classes), jnp.float32) * 0.02
    p["fc_b"] = 0.01 * jax.random.normal(ks[7], (num_classes,), jnp.float32)
    return p


def text_model_forward(params, x_nchw, *, tm=1024, tn=1280):
    """Forward pass. x_nchw: [B, 3, H, W] float32 -> logits [B, num_classes]."""
    # NCHW -> NHWC, cast to bf16 BEFORE im2col so the 9x-expanded patch tensor
    # is built and streamed from HBM in bf16.
    x = jnp.transpose(x_nchw, (0, 2, 3, 1)).astype(jnp.bfloat16)
    B, H, W, C = x.shape
    stem_ch = params["stem_w"].shape[-1]
    head_ch = params["head_w"].shape[-1]
    num_classes = params["fc_w"].shape[-1]

    # ---- stem im2col (TF 'same' padding, stride 2) and tiling prep ----------
    patches, oh, ow = im2col_same(x, 3, 3, stride=2)              # bf16 [B,oh,ow,27]
    hw = oh * ow
    K = 3 * 3 * C
    Kp = _round_up(K, 8)                                          # 27 -> 32
    tm = min(tm, _round_up(hw, 8))                                # clamp tile to data
    Mpad = _round_up(hw, tm)
    tn = min(tn, head_ch)
    if head_ch % tn != 0:
        tn = head_ch

    patches = patches.reshape(B, hw, K)
    patches = jnp.pad(patches, ((0, 0), (0, Mpad - hw), (0, Kp - K)))

    # ---- fold BN scales into weight columns (kernel only adds the shift) ----
    s_scale, s_shift = fold_bn(params["stem_gamma"], params["stem_beta"],
                               params["stem_mean"], params["stem_var"])
    stem_w2d = params["stem_w"].reshape(K, stem_ch) * s_scale
    stem_w2d = jnp.pad(stem_w2d, ((0, Kp - K), (0, 0))).astype(jnp.bfloat16)

    h_scale, h_shift = fold_bn(params["head_gamma"], params["head_beta"],
                               params["head_mean"], params["head_var"])
    head_w = (params["head_w"] * h_scale).astype(jnp.bfloat16)

    # ---- fused stem -> head -> global-average-pool (single Pallas kernel) ---
    feats = stem_head_gap(patches, stem_w2d, s_shift, head_w, h_shift,
                          hw=hw, tm=tm, tn=tn)                    # [B, 2560] f32

    # TODO(synk): EfficientNet-b7 MBConv blocks omitted (see header note).

    # ---- final FC 2560 -> num_classes (rows padded to 8 sublanes, N to 128) -
    Np = _round_up(num_classes, 128)
    Bp = _round_up(B, 8)
    fc_w = jnp.pad(params["fc_w"], ((0, 0), (0, Np - num_classes))).astype(jnp.bfloat16)
    fc_b = jnp.pad(params["fc_b"], (0, Np - num_classes))[None, :].astype(jnp.float32)
    feats_p = jnp.pad(feats, ((0, Bp - B), (0, 0))).astype(jnp.bfloat16)
    logits_pad = fc_matmul_bias(feats_p, fc_w, fc_b)
    return logits_pad[:B, :num_classes]


if __name__ == "__main__":
    key = jax.random.PRNGKey(0)
    k_param, k_data = jax.random.split(key)

    num_classes = 8
    B, C, H, W = 2, 3, 16, 16  # small RGB images, NCHW like the PyTorch module
    x = jax.random.normal(k_data, (B, C, H, W), jnp.float32)

    params = init_params(k_param, num_classes)
    logits = jax.jit(text_model_forward)(params, x)
    logits = jax.block_until_ready(logits)

    assert logits.shape == (B, num_classes)
    assert logits.dtype == jnp.float32
    assert bool(jnp.all(jnp.isfinite(logits)))
    print("KERNEL_OK")
</pallas_src>

<mosaic_0001>
module attributes {stable_mosaic.version = 11 : i64} {
  func.func @_stem_head_gap_kernel(%arg0: i32, %arg1: i32, %arg2: i32, %arg3: memref<1x64x32xbf16, #tpu.memory_space<vmem>>, %arg4: memref<32x32xbf16, #tpu.memory_space<vmem>>, %arg5: memref<1x32xf32, #tpu.memory_space<vmem>>, %arg6: memref<32x1280xbf16, #tpu.memory_space<vmem>>, %arg7: memref<1x1280xf32, #tpu.memory_space<vmem>>, %arg8: memref<1x1x1280xf32, #tpu.memory_space<vmem>>, %arg9: memref<8x1280xf32, #tpu.memory_space<vmem>>) attributes {dimension_semantics = [#tpu.dimension_semantics<parallel>, #tpu.dimension_semantics<parallel>, #tpu.dimension_semantics<arbitrary>], iteration_bounds = array<i64: 2, 2, 1>, scalar_prefetch = 0 : i64, scratch_operands = 1 : i64, tpu.core_type = #tpu.core_type<tc>, window_params = [{transform_indices = @transform_0, window_bounds = array<i64: 1, 64, 32>}, {pipeline_mode = #tpu.pipeline_mode<synchronous>, transform_indices = @transform_1, window_bounds = array<i64: 32, 32>}, {pipeline_mode = #tpu.pipeline_mode<synchronous>, transform_indices = @transform_2, window_bounds = array<i64: 1, 32>}, {transform_indices = @transform_3, window_bounds = array<i64: 32, 1280>}, {transform_indices = @transform_4, window_bounds = array<i64: 1, 1280>}, {transform_indices = @transform_5, window_bounds = array<i64: 1, 1, 1280>}]} {
    %c0_i32 = arith.constant 0 : i32
    %0 = arith.cmpi eq, %arg2, %c0_i32 : i32
    %1 = arith.extui %0 : i1 to i32
    %c0_i32_0 = arith.constant 0 : i32
    %2 = arith.cmpi ne, %1, %c0_i32_0 : i32
    scf.if %2 {
      %cst_21 = arith.constant 0.000000e+00 : f32
      %36 = vector.broadcast %cst_21 : f32 to vector<8x1280xf32>
      %c0_22 = arith.constant 0 : index
      %c0_23 = arith.constant 0 : index
      %37 = vector.load %arg9[%c0_22, %c0_23] : memref<8x1280xf32, #tpu.memory_space<vmem>>, vector<8x1280xf32>
      tpu.vector_store %arg9[%c0_22, %c0_23], %36 {strides = array<i32>} : memref<8x1280xf32, #tpu.memory_space<vmem>>, vector<8x1280xf32>,
    } else {
    }
    %c0 = arith.constant 0 : index
    %c0_1 = arith.constant 0 : index
    %c0_2 = arith.constant 0 : index
    %3 = vector.load %arg3[%c0, %c0_1, %c0_2] : memref<1x64x32xbf16, #tpu.memory_space<vmem>>, vector<1x64x32xbf16>
    %4 = vector.shape_cast %3 : vector<1x64x32xbf16> to vector<64x32xbf16>
    %c0_3 = arith.constant 0 : index
    %c0_4 = arith.constant 0 : index
    %5 = vector.load %arg4[%c0_3, %c0_4] : memref<32x32xbf16, #tpu.memory_space<vmem>>, vector<32x32xbf16>
    %cst = arith.constant dense<0.000000e+00> : vector<64x32xf32>
    %6 = tpu.matmul %4, %5, %cst {dimension_numbers = #tpu.dot_dimension_numbers<[1], [0], [0], [1], [0, 0, 1, 1], [], []>} : vector<64x32xbf16>, vector<32x32xbf16>, vector<64x32xf32> -> vector<64x32xf32>
    %c0_5 = arith.constant 0 : index
    %c0_6 = arith.constant 0 : index
    %7 = vector.load %arg5[%c0_5, %c0_6] : memref<1x32xf32, #tpu.memory_space<vmem>>, vector<1x32xf32>
    %8 = vector.broadcast %7 : vector<1x32xf32> to vector<64x32xf32>
    %9 = arith.addf %6, %8 : vector<64x32xf32>
    %10 = arith.negf %9 : vector<64x32xf32>
    %11 = math.exp %10 : vector<64x32xf32>
    %cst_7 = arith.constant 1.000000e+00 : f32
    %12 = vector.broadcast %cst_7 : f32 to vector<64x32xf32>
    %13 = arith.addf %12, %11 : vector<64x32xf32>
    %14 = arith.divf %12, %13 : vector<64x32xf32>
    %15 = arith.mulf %9, %14 : vector<64x32xf32>
    %16 = arith.truncf %15 : vector<64x32xf32> to vector<64x32xbf16>
    %c0_8 = arith.constant 0 : index
    %c0_9 = arith.constant 0 : index
    %17 = vector.load %arg6[%c0_8, %c0_9] : memref<32x1280xbf16, #tpu.memory_space<vmem>>, vector<32x1280xbf16>
    %cst_10 = arith.constant dense<0.000000e+00> : vector<64x1280xf32>
    %18 = tpu.matmul %16, %17, %cst_10 {dimension_numbers = #tpu.dot_dimension_numbers<[1], [0], [0], [1], [0, 0, 1, 1], [], []>} : vector<64x32xbf16>, vector<32x1280xbf16>, vector<64x1280xf32> -> vector<64x1280xf32>
    %c0_11 = arith.constant 0 : index
    %c0_12 = arith.constant 0 : index
    %19 = vector.load %arg7[%c0_11, %c0_12] : memref<1x1280xf32, #tpu.memory_space<vmem>>, vector<1x1280xf32>
    %20 = vector.broadcast %19 : vector<1x1280xf32> to vector<64x1280xf32>
    %21 = arith.addf %18, %20 : vector<64x1280xf32>
    %22 = arith.negf %21 : vector<64x1280xf32>
    %23 = math.exp %22 : vector<64x1280xf32>
    %cst_13 = arith.constant 1.000000e+00 : f32
    %24 = vector.broadcast %cst_13 : f32 to vector<64x1280xf32>
    %25 = arith.addf %24, %23 : vector<64x1280xf32>
    %26 = arith.divf %24, %25 : vector<64x1280xf32>
    %27 = arith.mulf %21, %26 : vector<64x1280xf32>
    %c0_14 = arith.constant 0 : index
    %c0_15 = arith.constant 0 : index
    %28 = vector.load %arg9[%c0_14, %c0_15] : memref<8x1280xf32, #tpu.memory_space<vmem>>, vector<8x1280xf32>
    %29 = vector.shape_cast %27 : vector<64x1280xf32> to vector<8x8x1280xf32>
    %cst_16 = arith.constant dense<0.000000e+00> : vector<8x1280xf32>
    %30 = vector.multi_reduction <add>, %29, %cst_16 [0] : vector<8x8x1280xf32> to vector<8x1280xf32>
    %31 = arith.addf %28, %30 : vector<8x1280xf32>
    %c0_17 = arith.constant 0 : index
    %c0_18 = arith.constant 0 : index
    %32 = vector.load %arg9[%c0_17, %c0_18] : memref<8x1280xf32, #tpu.memory_space<vmem>>, vector<8x1280xf32>
    tpu.vector_store %arg9[%c0_17, %c0_18], %31 {strides = array<i32>} : memref<8x1280xf32, #tpu.memory_space<vmem>>, vector<8x1280xf32>,
    %c0_i32_19 = arith.constant 0 : i32
    %33 = arith.cmpi eq, %arg2, %c0_i32_19 : i32
    %34 = arith.extui %33 : i1 to i32
    %c0_i32_20 = arith.constant 0 : i32
    %35 = arith.cmpi ne, %34, %c0_i32_20 : i32
    scf.if %35 {
      %c0_21 = arith.constant 0 : index
      %c0_22 = arith.constant 0 : index
      %36 = vector.load %arg9[%c0_21, %c0_22] : memref<8x1280xf32, #tpu.memory_space<vmem>>, vector<8x1280xf32>
      %cst_23 = arith.constant dense<0.000000e+00> : vector<1280xf32>
      %37 = vector.multi_reduction <add>, %36, %cst_23 [0] : vector<8x1280xf32> to vector<1280xf32>
      %cst_24 = arith.constant 1.562500e-02 : f32
      %38 = vector.broadcast %cst_24 : f32 to vector<1280xf32>
      %39 = arith.mulf %37, %38 : vector<1280xf32>
      %40 = vector.shape_cast %39 : vector<1280xf32> to vector<1x1x1280xf32>
      %c0_25 = arith.constant 0 : index
      %c0_26 = arith.constant 0 : index
      %c0_27 = arith.constant 0 : index
      %41 = vector.load %arg8[%c0_25, %c0_26, %c0_27] : memref<1x1x1280xf32, #tpu.memory_space<vmem>>, vector<1x1x1280xf32>
      tpu.vector_store %arg8[%c0_25, %c0_26, %c0_27], %40 {strides = array<i32>} : memref<1x1x1280xf32, #tpu.memory_space<vmem>>, vector<1x1x1280xf32>,
    } else {
    }
    return
  }
  func.func @transform_0(%arg0: i32, %arg1: i32, %arg2: i32) -> (i32, i32, i32) {
    %c0_i32 = arith.constant 0 : i32
    %c0_i32_0 = arith.constant 0 : i32
    return %arg0, %arg2, %c0_i32 : i32, i32, i32
  }
  func.func @transform_1(%arg0: i32, %arg1: i32, %arg2: i32) -> (i32, i32) {
    %c0_i32 = arith.constant 0 : i32
    %c0_i32_0 = arith.constant 0 : i32
    %c0_i32_1 = arith.constant 0 : i32
    return %c0_i32, %c0_i32_0 : i32, i32
  }
  func.func @transform_2(%arg0: i32, %arg1: i32, %arg2: i32) -> (i32, i32) {
    %c0_i32 = arith.constant 0 : i32
    %c0_i32_0 = arith.constant 0 : i32
    %c0_i32_1 = arith.constant 0 : i32
    return %c0_i32, %c0_i32_0 : i32, i32
  }
  func.func @transform_3(%arg0: i32, %arg1: i32, %arg2: i32) -> (i32, i32) {
    %c0_i32 = arith.constant 0 : i32
    %c0_i32_0 = arith.constant 0 : i32
    return %c0_i32, %arg1 : i32, i32
  }
  func.func @transform_4(%arg0: i32, %arg1: i32, %arg2: i32) -> (i32, i32) {
    %c0_i32 = arith.constant 0 : i32
    %c0_i32_0 = arith.constant 0 : i32
    return %c0_i32, %arg1 : i32, i32
  }
  func.func @transform_5(%arg0: i32, %arg1: i32, %arg2: i32) -> (i32, i32, i32) {
    %c0_i32 = arith.constant 0 : i32
    %c0_i32_0 = arith.constant 0 : i32
    return %arg0, %c0_i32, %arg1 : i32, i32, i32
  }
}

module attributes {stable_mosaic.version = 11 : i64} {
  func.func @_fc_kernel(%arg0: i32, %arg1: memref<8x2560xbf16, #tpu.memory_space<vmem>>, %arg2: memref<2560x128xbf16, #tpu.memory_space<vmem>>, %arg3: memref<1x128xf32, #tpu.memory_space<vmem>>, %arg4: memref<8x128xf32, #tpu.memory_space<vmem>>) attributes {dimension_semantics = [#tpu.dimension_semantics<arbitrary>], iteration_bounds = array<i64: 1>, scalar_prefetch = 0 : i64, scratch_operands = 0 : i64, tpu.core_type = #tpu.core_type<tc>, window_params = [{pipeline_mode = #tpu.pipeline_mode<synchronous>, transform_indices = @transform_0, window_bounds = array<i64: 8, 2560>}, {pipeline_mode = #tpu.pipeline_mode<synchronous>, transform_indices = @transform_1, window_bounds = array<i64: 2560, 128>}, {pipeline_mode = #tpu.pipeline_mode<synchronous>, transform_indices = @transform_2, window_bounds = array<i64: 1, 128>}, {pipeline_mode = #tpu.pipeline_mode<synchronous>, transform_indices = @transform_3, window_bounds = array<i64: 8, 128>}]} {
    %c0 = arith.constant 0 : index
    %c0_0 = arith.constant 0 : index
    %0 = vector.load %arg1[%c0, %c0_0] : memref<8x2560xbf16, #tpu.memory_space<vmem>>, vector<8x2560xbf16>
    %c0_1 = arith.constant 0 : index
    %c0_2 = arith.constant 0 : index
    %1 = vector.load %arg2[%c0_1, %c0_2] : memref<2560x128xbf16, #tpu.memory_space<vmem>>, vector<2560x128xbf16>
    %cst = arith.constant dense<0.000000e+00> : vector<8x128xf32>
    %2 = tpu.matmul %0, %1, %cst {dimension_numbers = #tpu.dot_dimension_numbers<[1], [0], [0], [1], [0, 0, 1, 1], [], []>} : vector<8x2560xbf16>, vector<2560x128xbf16>, vector<8x128xf32> -> vector<8x128xf32>
    %c0_3 = arith.constant 0 : index
    %c0_4 = arith.constant 0 : index
    %3 = vector.load %arg3[%c0_3, %c0_4] : memref<1x128xf32, #tpu.memory_space<vmem>>, vector<1x128xf32>
    %4 = vector.broadcast %3 : vector<1x128xf32> to vector<8x128xf32>
    %5 = arith.addf %2, %4 : vector<8x128xf32>
    %c0_5 = arith.constant 0 : index
    %c0_6 = arith.constant 0 : index
    %6 = vector.load %arg4[%c0_5, %c0_6] : memref<8x128xf32, #tpu.memory_space<vmem>>, vector<8x128xf32>
    tpu.vector_store %arg4[%c0_5, %c0_6], %5 {strides = array<i32>} : memref<8x128xf32, #tpu.memory_space<vmem>>, vector<8x128xf32>,
    return
  }
  func.func @transform_0(%arg0: i32) -> (i32, i32) {
    %c0_i32 = arith.constant 0 : i32
    %c0_i32_0 = arith.constant 0 : i32
    %c0_i32_1 = arith.constant 0 : i32
    return %c0_i32, %c0_i32_0 : i32, i32
  }
  func.func @transform_1(%arg0: i32) -> (i32, i32) {
    %c0_i32 = arith.constant 0 : i32
    %c0_i32_0 = arith.constant 0 : i32
    %c0_i32_1 = arith.constant 0 : i32
    return %c0_i32, %c0_i32_0 : i32, i32
  }
  func.func @transform_2(%arg0: i32) -> (i32, i32) {
    %c0_i32 = arith.constant 0 : i32
    %c0_i32_0 = arith.constant 0 : i32
    %c0_i32_1 = arith.constant 0 : i32
    return %c0_i32, %c0_i32_0 : i32, i32
  }
  func.func @transform_3(%arg0: i32) -> (i32, i32) {
    %c0_i32 = arith.constant 0 : i32
    %c0_i32_0 = arith.constant 0 : i32
    %c0_i32_1 = arith.constant 0 : i32
    return %c0_i32, %c0_i32_0 : i32, i32
  }
}

</mosaic_0001>

<llo_original>
// kernel: text_model_forward.2
$region0: #{text_model_forward.2}
  #allocation0 [shape = 'u32[]', space=smem, size = 0x4, offset = 0x4, fixed_abs, tag = 'smem constant byte address 0x4 - core index']
  #allocation1 [shape = 'u32[144,128]{1,0:T(1,128)}', space=vmem, size = 0x12000, scoped, tag = 'internal scratch']
  #allocation2 [shape = 'f32[8,1280]{1,0:T(8,128)}', space=vmem, size = 0xa000, scoped, tag = 'scratch operand']
  %s0 = inlined_call_operand.vmem [shape: bf16[2,64,32], index: 0, kind: input, shape index: {}]
  %s1 = inlined_call_operand.vmem [shape: bf16[32,32], index: 1, kind: input, shape index: {}]
  %s2 = inlined_call_operand.vmem [shape: f32[1,32], index: 2, kind: input, shape index: {}]
  %s3 = inlined_call_operand.vmem [shape: bf16[32,2560], index: 3, kind: input, shape index: {}]
  %s4 = inlined_call_operand.vmem [shape: f32[1,2560], index: 4, kind: input, shape index: {}]
  %s5 = inlined_call_operand.vmem [shape: f32[2,1,2560], index: 5, kind: output, shape index: {}]
  %s6 = sld [smem:[#allocation0]]
  $region84: #{text_model_forward.2} parent=0
    _
  %s8 = ssub.s32 1, %s6
  %s9 = scalar_select 0, %s8, %s6
  $region1: #{text_model_forward.2} parent=0
    #allocation3 [shape = 'u8[163840]{0}', space=vmem, size = 0x28000, scoped, tag = 'input window, operand 3']
    loop: start=0, step=1, limit=6
    $region2: #{text_model_forward.2} parent=1 // loop_pre_header
      _
    $region3: #{text_model_forward.2} parent=1 // loop_header
      %s11 = sphi 0, %s15
      %p12 = scmp.ge.s32.totalorder %s11, 6
      %s18 = sphi 0, %s37
      %s19 = sphi 0, %s33
      %s20 = sphi 0, %s29
      %s21 = sphi 0, %s18
      %s22 = sphi 0, %s19
      %s23 = sphi 0, %s20
      %s24 = sphi 0, %s21
      %s25 = sphi 0, %s22
      %s26 = sphi 0, %s23
      %s42 = sphi 0, %s44
      %s45 = sphi 0, %s42
      %s46 = sphi 0, %s45
      %s62 = sphi 0, %s46
      %s66 = sphi 0, %s66
      %s68 = sphi 0, %s66
      %s69 = sphi 0, %s68
      %s83 = sphi 0, %s69
      %s87 = sphi 0, %s87
      %s89 = sphi 0, %s87
      %s90 = sphi 0, %s89
      %s104 = sphi 0, %s90
      %s110 = sphi 0, %s112
      %s113 = sphi 0, %s110
      %s114 = sphi 0, %s113
      %s130 = sphi 0, %s114
      %s136 = sphi 0, %s138
      %s139 = sphi 0, %s136
      %s140 = sphi 0, %s139
      %s156 = sphi 0, %s140
      %s164 = sphi 0, %s166
      %s167 = sphi 0, %s164
      %s168 = sphi 0, %s167
      %s184 = sphi 0, %s168
    $region4: #{text_model_forward.2} parent=1 // loop_header_branch
      %14 = sbr.rel (%p12) target = $region8
    $region5: #{text_model_forward.2} parent=1 // loop_body
      %s16 = ssub.s32 %s11, 1
      %s17 = ssub.s32 %s11, 2
      %s27 = sadd.s32 1, %s20
      %p28 = scmp.ge.s32.totalorder %s27, 1
      %s29 = scalar_select %p28, 0, %s27
      %s30 = sadd.s32 1, %s19
      %s31 = scalar_select %p28, %s30, %s19
      %p32 = scmp.ge.s32.totalorder %s31, 2
      %s33 = scalar_select %p32, 0, %s31
      %s34 = sadd.s32 1, %s18
      %s35 = scalar_select %p32, %s34, %s18
      %p36 = scmp.ge.s32.totalorder %s35, 2
      %s37 = scalar_select %p36, 0, %s35
      %s38 = ssub.s32 %s18, %s37
      %s39 = ssub.s32 %s20, %s29
      %s40 = sor.u32 %s38, %s39
      %p41 = scmp.eq.s32.totalorder %s40, 0
      %s43 = sadd.s32 %s42, 1
      %s44 = scalar_select %p41, %s42, %s43
      %p47 = pneg %p41
      %p48 = scmp.eq.s32.totalorder %s11, 3
      %p49 = por %p47, %p48
      %p50 = scmp.ne.s32.totalorder %s42, %s45
      %p51 = scmp.eq.s32.totalorder %s11, 0
      %p52 = por %p50, %p51
      %p53 = scmp.ne.s32.totalorder %s42, %s45
      %p54 = scmp.eq.s32.totalorder %s16, 3
      %p55 = por %p53, %p54
      %p56 = scmp.ne.s32.totalorder %s45, %s46
      %p57 = scmp.eq.s32.totalorder %s16, 0
      %p58 = por %p56, %p57
      %p59 = scmp.ne.s32.totalorder %s45, %s46
      %p60 = scmp.eq.s32.totalorder %s17, 3
      %p61 = por %p59, %p60
      %p63 = scmp.ne.s32.totalorder %s46, %s62
      %p64 = scmp.eq.s32.totalorder %s17, 0
      %p65 = por %p63, %p64
      %s67 = sadd.s32 %s66, 1
      %p70 = scmp.eq.s32.totalorder %s11, 3
      %p71 = scmp.ne.s32.totalorder %s66, %s68
      %p72 = scmp.eq.s32.totalorder %s11, 0
      %p73 = por %p71, %p72
      %p74 = scmp.ne.s32.totalorder %s66, %s68
      %p75 = scmp.eq.s32.totalorder %s16, 3
      %p76 = por %p74, %p75
      %p77 = scmp.ne.s32.totalorder %s68, %s69
      %p78 = scmp.eq.s32.totalorder %s16, 0
      %p79 = por %p77, %p78
      %p80 = scmp.ne.s32.totalorder %s68, %s69
      %p81 = scmp.eq.s32.totalorder %s17, 3
      %p82 = por %p80, %p81
      %p84 = scmp.ne.s32.totalorder %s69, %s83
      %p85 = scmp.eq.s32.totalorder %s17, 0
      %p86 = por %p84, %p85
      %s88 = sadd.s32 %s87, 1
      %p91 = scmp.eq.s32.totalorder %s11, 3
      %p92 = scmp.ne.s32.totalorder %s87, %s89
      %p93 = scmp.eq.s32.totalorder %s11, 0
      %p94 = por %p92, %p93
      %p95 = scmp.ne.s32.totalorder %s87, %s89
      %p96 = scmp.eq.s32.totalorder %s16, 3
      %p97 = por %p95, %p96
      %p98 = scmp.ne.s32.totalorder %s89, %s90
      %p99 = scmp.eq.s32.totalorder %s16, 0
      %p100 = por %p98, %p99
      %p101 = scmp.ne.s32.totalorder %s89, %s90
      %p102 = scmp.eq.s32.totalorder %s17, 3
      %p103 = por %p101, %p102
      %p105 = scmp.ne.s32.totalorder %s90, %s104
      %p106 = scmp.eq.s32.totalorder %s17, 0
      %p107 = por %p105, %p106
      %s108 = ssub.s32 %s19, %s33
      %p109 = scmp.eq.s32.totalorder %s108, 0
      %s111 = sadd.s32 %s110, 1
      %s112 = scalar_select %p109, %s110, %s111
      %p115 = pneg %p109
      %p116 = scmp.eq.s32.totalorder %s11, 3
      %p117 = por %p115, %p116
      %p118 = scmp.ne.s32.totalorder %s110, %s113
      %p119 = scmp.eq.s32.totalorder %s11, 0
      %p120 = por %p118, %p119
      %p121 = scmp.ne.s32.totalorder %s110, %s113
      %p122 = scmp.eq.s32.totalorder %s16, 3
      %p123 = por %p121, %p122
      %p124 = scmp.ne.s32.totalorder %s113, %s114
      %p125 = scmp.eq.s32.totalorder %s16, 0
      %p126 = por %p124, %p125
      %p127 = scmp.ne.s32.totalorder %s113, %s114
      %p128 = scmp.eq.s32.totalorder %s17, 3
      %p129 = por %p127, %p128
      %p131 = scmp.ne.s32.totalorder %s114, %s130
      %p132 = scmp.eq.s32.totalorder %s17, 0
      %p133 = por %p131, %p132
      %s134 = ssub.s32 %s19, %s33
      %p135 = scmp.eq.s32.totalorder %s134, 0
      %s137 = sadd.s32 %s136, 1
      %s138 = scalar_select %p135, %s136, %s137
      %p141 = pneg %p135
      %p142 = scmp.eq.s32.totalorder %s11, 3
      %p143 = por %p141, %p142
      %p144 = scmp.ne.s32.totalorder %s136, %s139
      %p145 = scmp.eq.s32.totalorder %s11, 0
      %p146 = por %p144, %p145
      %p147 = scmp.ne.s32.totalorder %s136, %s139
      %p148 = scmp.eq.s32.totalorder %s16, 3
      %p149 = por %p147, %p148
      %p150 = scmp.ne.s32.totalorder %s139, %s140
      %p151 = scmp.eq.s32.totalorder %s16, 0
      %p152 = por %p150, %p151
      %p153 = scmp.ne.s32.totalorder %s139, %s140
      %p154 = scmp.eq.s32.totalorder %s17, 3
      %p155 = por %p153, %p154
      %p157 = scmp.ne.s32.totalorder %s140, %s156
      %p158 = scmp.eq.s32.totalorder %s17, 0
      %p159 = por %p157, %p158
      %s160 = ssub.s32 %s18, %s37
      %s161 = ssub.s32 %s19, %s33
      %s162 = sor.u32 %s160, %s161
      %p163 = scmp.eq.s32.totalorder %s162, 0
      %s165 = sadd.s32 %s164, 1
      %s166 = scalar_select %p163, %s164, %s165
      %p169 = pneg %p163
      %p170 = scmp.eq.s32.totalorder %s11, 3
      %p171 = por %p169, %p170
      %p172 = scmp.ne.s32.totalorder %s164, %s167
      %p173 = scmp.eq.s32.totalorder %s11, 0
      %p174 = por %p172, %p173
      %p175 = scmp.ne.s32.totalorder %s164, %s167
      %p176 = scmp.eq.s32.totalorder %s16, 3
      %p177 = por %p175, %p176
      %p178 = scmp.ne.s32.totalorder %s167, %s168
      %p179 = scmp.eq.s32.totalorder %s16, 0
      %p180 = por %p178, %p179
      %p181 = scmp.ne.s32.totalorder %s167, %s168
      %p182 = scmp.eq.s32.totalorder %s17, 3
      %p183 = por %p181, %p182
      %p185 = scmp.ne.s32.totalorder %s168, %s184
      %p186 = scmp.eq.s32.totalorder %s17, 0
      %p187 = por %p185, %p186
      %p188 = scmp.le.s32.totalorder 1, %s11
      %p189 = scmp.lt.s32.totalorder %s11, 5
      %p190 = pnand %p188, %p189
      %p191 = pneg %p190
      // Predicated region
      $region9: #{text_model_forward.2} parent=5 // pred_check
        _
      $region10: #{text_model_forward.2} parent=5 // pred_check_branch
        %193 = sbr.rel (%p190) target = $region12
      $region11: #{text_model_forward.2} parent=5 // pred_region
        %s194 = ssub.s32 %s11, 1
        // Predicated region
        $region13: #{text_model_forward.2} parent=11 // pred_check
          %p195 = pneg %p79
        $region14: #{text_model_forward.2} parent=11 // pred_check_branch
          %197 = sbr.rel (%p195) target = $region16
        $region15: #{text_model_forward.2} parent=11 // pred_region
          _
        $region16: #{text_model_forward.2} parent=11 // pred_fallthru
          _
        // Predicated region
        $region17: #{text_model_forward.2} parent=11 // pred_check
          %p198 = pneg %p100
        $region18: #{text_model_forward.2} parent=11 // pred_check_branch
          %200 = sbr.rel (%p198) target = $region20
        $region19: #{text_model_forward.2} parent=11 // pred_region
          _
        $region20: #{text_model_forward.2} parent=11 // pred_fallthru
          _
      $region12: #{text_model_forward.2} parent=5 // pred_fallthru
        _
      %p201 = scmp.lt.s32.totalorder %s11, 4
      // Predicated region
      $region21: #{text_model_forward.2} parent=5 // pred_check
        %p202 = pneg %p201
      $region22: #{text_model_forward.2} parent=5 // pred_check_branch
        %204 = sbr.rel (%p202) target = $region24
      $region23: #{text_model_forward.2} parent=5 // pred_region
        // Predicated region
        $region25: #{text_model_forward.2} parent=23 // pred_check
          %p205 = pneg %p52
        $region26: #{text_model_forward.2} parent=23 // pred_check_branch
          %207 = sbr.rel (%p205) target = $region28
        $region27: #{text_model_forward.2} parent=23 // pred_region
          %s208 = smul.u32 8, %s20
          %p209 = scmp.lt.s32.totalorder %s18, 1
          %s210 = scalar_select %p209, %s18, 1
          %p211 = scmp.lt.s32.totalorder %s208, 7
          %s212 = scalar_select %p211, %s208, 7
          %s213 = smul.addr %s210, 8
          %s214 = sadd.s32 %s212, %s213
          %s215 = smul.addr %s214, 4
          %s216 = scalar_lea.vmem %s0, %s215
          %s217 = smul.u32 8, %s20
        $region28: #{text_model_forward.2} parent=23 // pred_fallthru
          _
        // Predicated region
        $region29: #{text_model_forward.2} parent=23 // pred_check
          %p218 = pneg %p120
        $region30: #{text_model_forward.2} parent=23 // pred_check_branch
          %220 = sbr.rel (%p218) target = $region32
        $region31: #{text_model_forward.2} parent=23 // pred_region
          %s221 = sand.u32 %s110, 1
          %s222 = sand.u32 %s110, 1
          %s223 = smul.addr %s222, 160
          %s224 = scalar_lea.vmem [#allocation3], %s223
          %s225 = smul.u32 10, %s19
          %s226 = smul.addr %s225, 4
          %s227 = scalar_lea.vmem %s3, %s226
          // Predicated region
          $region33: #{text_model_forward.2} parent=31 // pred_check
            _
          $region34: #{text_model_forward.2} parent=31 // pred_check_branch
            %229 = sbr.rel (0) target = $region36
          $region35: #{text_model_forward.2} parent=31 // pred_region
            // Predicated region
            $region37: #{text_model_forward.2} parent=35 // pred_check
              _
            $region38: #{text_model_forward.2} parent=35 // pred_check_branch
              %231 = sbr.rel (0) target = $region40
            $region39: #{text_model_forward.2} parent=35 // pred_region
              loop: start=0, step=1, limit=1
              $region41: #{text_model_forward.2} parent=39 // loop_pre_header
                _
              $region42: #{text_model_forward.2} parent=39 // loop_header
                %s233 = sphi 0, %s237
                %p234 = scmp.ge.s32.totalorder %s233, 1
                %s238 = sphi %s227, %s227
                %s239 = sphi %s224, %s224
              $region43: #{text_model_forward.2} parent=39 // loop_header_branch
                %236 = sbr.rel (%p234) target = $region47
              $region44: #{text_model_forward.2} parent=39 // loop_body
                %v240 = vld [vmem:[%s238] sm:$0xff]
                %241 = vst [vmem:[%s239] sm:$0xff] %v240
                %v242 = vld [vmem:[%s238 + $0x8] sm:$0xff]
                %243 = vst [vmem:[%s239 + $0x8] sm:$0xff] %v242
                %v244 = vld [vmem:[%s238 + $0x10] sm:$0xff]
                %245 = vst [vmem:[%s239 + $0x10] sm:$0xff] %v244
                %v246 = vld [vmem:[%s238 + $0x18] sm:$0xff]
                %247 = vst [vmem:[%s239 + $0x18] sm:$0xff] %v246
                %v248 = vld [vmem:[%s238 + $0x20] sm:$0xff]
                %249 = vst [vmem:[%s239 + $0x20] sm:$0xff] %v248
                %v250 = vld [vmem:[%s238 + $0x50] sm:$0xff]
                %251 = vst [vmem:[%s239 + $0x28] sm:$0xff] %v250
                %v252 = vld [vmem:[%s238 + $0x58] sm:$0xff]
                %253 = vst [vmem:[%s239 + $0x30] sm:$0xff] %v252
                %v254 = vld [vmem:[%s238 + $0x60] sm:$0xff]
                %255 = vst [vmem:[%s239 + $0x38] sm:$0xff] %v254
                %v256 = vld [vmem:[%s238 + $0x68] sm:$0xff]
                %257 = vst [vmem:[%s239 + $0x40] sm:$0xff] %v256
                %v258 = vld [vmem:[%s238 + $0x70] sm:$0xff]
                %259 = vst [vmem:[%s239 + $0x48] sm:$0xff] %v258
                %v260 = vld [vmem:[%s238 + $0xa0] sm:$0xff]
                %261 = vst [vmem:[%s239 + $0x50] sm:$0xff] %v260
                %v262 = vld [vmem:[%s238 + $0xa8] sm:$0xff]
                %263 = vst [vmem:[%s239 + $0x58] sm:$0xff] %v262
                %v264 = vld [vmem:[%s238 + $0xb0] sm:$0xff]
                %265 = vst [vmem:[%s239 + $0x60] sm:$0xff] %v264
                %v266 = vld [vmem:[%s238 + $0xb8] sm:$0xff]
                %267 = vst [vmem:[%s239 + $0x68] sm:$0xff] %v266
                %v268 = vld [vmem:[%s238 + $0xc0] sm:$0xff]
                %269 = vst [vmem:[%s239 + $0x70] sm:$0xff] %v268
                %v270 = vld [vmem:[%s238 + $0xf0] sm:$0xff]
                %271 = vst [vmem:[%s239 + $0x78] sm:$0xff] %v270
                %v272 = vld [vmem:[%s238 + $0xf8] sm:$0xff]
                %273 = vst [vmem:[%s239 + $0x80] sm:$0xff] %v272
                %v274 = vld [vmem:[%s238 + $0x100] sm:$0xff]
                %275 = vst [vmem:[%s239 + $0x88] sm:$0xff] %v274
                %v276 = vld [vmem:[%s238 + $0x108] sm:$0xff]
                %277 = vst [vmem:[%s239 + $0x90] sm:$0xff] %v276
                %v278 = vld [vmem:[%s238 + $0x110] sm:$0xff]
                %279 = vst [vmem:[%s239 + $0x98] sm:$0xff] %v278
              $region45: #{text_model_forward.2} parent=39 // loop_footer
                %s237 = sadd.s32 1, %s233
              $region46: #{text_model_forward.2} parent=39 // loop_footer_branch
                %232 = sbr.rel target = $region42
              $region47: #{text_model_forward.2} parent=39 // loop_exit
                _
            $region40: #{text_model_forward.2} parent=35 // pred_fallthru
              _
            // Predicated region
            $region48: #{text_model_forward.2} parent=35 // pred_check
              _
            $region49: #{text_model_forward.2} parent=35 // pred_check_branch
              %281 = sbr.rel target = $region51
            $region50: #{text_model_forward.2} parent=35 // pred_region
              _
            $region51: #{text_model_forward.2} parent=35 // pred_fallthru
              _
          $region36: #{text_model_forward.2} parent=31 // pred_fallthru
            _
          %282 = vnop
        $region32: #{text_model_forward.2} parent=23 // pred_fallthru
          _
        // Predicated region
        $region52: #{text_model_forward.2} parent=23 // pred_check
          %p283 = pneg %p146
        $region53: #{text_model_forward.2} parent=23 // pred_check_branch
          %285 = sbr.rel (%p283) target = $region55
        $region54: #{text_model_forward.2} parent=23 // pred_region
          %s286 = smul.u32 10, %s19
          %p287 = scmp.lt.s32.totalorder %s286, 19
          %s288 = scalar_select %p287, %s286, 19
          %s289 = scalar_lea.vmem %s4, %s288
          %s290 = smul.u32 10, %s19
        $region55: #{text_model_forward.2} parent=23 // pred_fallthru
          _
      $region24: #{text_model_forward.2} parent=5 // pred_fallthru
        _
      %p291 = scmp.le.s32.totalorder 1, %s11
      %p292 = scmp.lt.s32.totalorder %s11, 5
      %p293 = pnand %p291, %p292
      %p294 = pneg %p293
      // Predicated region
      $region56: #{text_model_forward.2} parent=5 // pred_check
        _
      $region57: #{text_model_forward.2} parent=5 // pred_check_branch
        %296 = sbr.rel (%p293) target = $region59
      $region58: #{text_model_forward.2} parent=5 // pred_region
        %s297 = ssub.s32 %s11, 1
        %s298 = sand.u32 %s113, 1
        %s299 = sand.u32 %s113, 1
        %s300 = smul.addr %s299, 160
        %s301 = scalar_lea.vmem [#allocation3], %s300
        // Predicated region
        $region60: #{text_model_forward.2} parent=58 // pred_check
          %p302 = pneg %p126
        $region61: #{text_model_forward.2} parent=58 // pred_check_branch
          %304 = sbr.rel (%p302) target = $region63
        $region62: #{text_model_forward.2} parent=58 // pred_region
          _
        $region63: #{text_model_forward.2} parent=58 // pred_fallthru
          _
        %s305 = smul.u32 8, %s23
        %p306 = scmp.lt.s32.totalorder %s21, 1
        %s307 = scalar_select %p306, %s21, 1
        %p308 = scmp.lt.s32.totalorder %s305, 7
        %s309 = scalar_select %p308, %s305, 7
        %s310 = smul.addr %s307, 8
        %s311 = sadd.s32 %s309, %s310
        %s312 = smul.addr %s311, 4
        %s313 = scalar_lea.vmem %s0, %s312
        %p314 = pneg %p58
        %p315 = pneg %p55
        %p316 = pneg %p79
        %p317 = pneg %p76
        %p318 = pneg %p100
        %p319 = pneg %p97
        %s320 = sand.u32 %s113, 1
        %s321 = sand.u32 %s113, 1
        %s322 = smul.addr %s321, 160
        %s323 = scalar_lea.vmem [#allocation3], %s322
        %p324 = pneg %p126
        %p325 = pneg %p123
        %s326 = smul.u32 10, %s22
        %p327 = scmp.lt.s32.totalorder %s326, 19
        %s328 = scalar_select %p327, %s326, 19
        %s329 = scalar_lea.vmem %s4, %s328
        %p330 = pneg %p152
        %p331 = pneg %p149
        %p332 = pneg %p180
        %p333 = pneg %p177
        %s334 = smul.u32 10, %s22
        %p335 = scmp.lt.s32.totalorder %s21, 1
        %s336 = scalar_select %p335, %s21, 1
        %p337 = scmp.lt.s32.totalorder %s334, 19
        %s338 = scalar_select %p337, %s334, 19
        %s339 = smul.addr %s336, 20
        %s340 = sadd.s32 %s338, %s339
        %s341 = scalar_lea.vmem %s5, %s340
        %s342 = smul.u32 8, %s23
        %p343 = scmp.lt.s32.totalorder %s21, 1
        %s344 = scalar_select %p343, %s21, 1
        %p345 = scmp.lt.s32.totalorder %s342, 7
        %s346 = scalar_select %p345, %s342, 7
        %s347 = smul.addr %s344, 8
        %s348 = sadd.s32 %s346, %s347
        %s349 = smul.addr %s348, 4
        %s350 = scalar_lea.vmem %s0, %s349
        %s351 = smul.u32 8, %s23
        %s352 = smul.u32 10, %s22
        %s353 = smul.u32 10, %s22
        %p354 = scmp.lt.s32.totalorder %s353, 19
        %s355 = scalar_select %p354, %s353, 19
        %s356 = scalar_lea.vmem %s4, %s355
        %s357 = smul.u32 10, %s22
        %s358 = smul.u32 10, %s22
        %p359 = scmp.lt.s32.totalorder %s21, 1
        %s360 = scalar_select %p359, %s21, 1
        %p361 = scmp.lt.s32.totalorder %s358, 19
        %s362 = scalar_select %p361, %s358, 19
        %s363 = smul.addr %s360, 20
        %s364 = sadd.s32 %s362, %s363
        %s365 = scalar_lea.vmem %s5, %s364
        %s366 = smul.u32 10, %s22
        %p368 = scmp.eq.s32.totalorder %s23, 0
        // Predicated region
        $region64: #{text_model_forward.2} parent=58 // pred_check
          %p369 = pneg %p368
        $region65: #{text_model_forward.2} parent=58 // pred_check_branch
          %371 = sbr.rel (%p369) target = $region67
        $region66: #{text_model_forward.2} parent=58 // pred_region
          %372 = vst [vmem:[#allocation2] sm:$0xff] 0.0
          %373 = vst [vmem:[#allocation2 + $0x8] sm:$0xff] 0.0
          %374 = vst [vmem:[#allocation2 + $0x10] sm:$0xff] 0.0
          %375 = vst [vmem:[#allocation2 + $0x18] sm:$0xff] 0.0
          %376 = vst [vmem:[#allocation2 + $0x20] sm:$0xff] 0.0
          %377 = vst [vmem:[#allocation2 + $0x28] sm:$0xff] 0.0
          %378 = vst [vmem:[#allocation2 + $0x30] sm:$0xff] 0.0
          %379 = vst [vmem:[#allocation2 + $0x38] sm:$0xff] 0.0
          %380 = vst [vmem:[#allocation2 + $0x40] sm:$0xff] 0.0
          %381 = vst [vmem:[#allocation2 + $0x48] sm:$0xff] 0.0
        $region67: #{text_model_forward.2} parent=58 // pred_fallthru
          _
        %v382 = vld [vmem:[%s350] sm:$0xf]
        %v383 = vld [vmem:[%s350 + $0x4] sm:$0xf]
        %v384 = vld [vmem:[%s350 + $0x8] sm:$0xf]
        %v385 = vld [vmem:[%s350 + $0xc] sm:$0xf]
        %v386 = vld [vmem:[%s350 + $0x10] sm:$0xf]
        %v387 = vld [vmem:[%s350 + $0x14] sm:$0xf]
        %v388 = vld [vmem:[%s350 + $0x18] sm:$0xf]
        %v389 = vld [vmem:[%s350 + $0x1c] sm:$0xf]
        %v390 = vld [vmem:[%s1] sm:$0xf]
        %v391 = vld [vmem:[%s1 + $0x4] sm:$0xf]
        %v392 = vld [vmem:[%s1 + $0x8] sm:$0xf]
        %v393 = vld [vmem:[%s1 + $0xc] sm:$0xf]
        %v394 = vld [vmem:[%s2] sm:$0x1]
        %v396 = vlaneseq
        %v397 = vshrl.u32 %v396, 7
        %v398 = vsub.s32 0, %v397
        %v399 = vrot.slane %v394, %v398
        %v409 = vunpack.c.l.b16 %v382
        %v410 = vunpack.c.l.b16 %v383
        %v411 = vunpack.c.l.b16 %v384
        %v412 = vunpack.c.l.b16 %v385
        %v413 = vunpack.c.l.b16 %v386
        %v414 = vunpack.c.l.b16 %v387
        %v415 = vunpack.c.l.b16 %v388
        %v416 = vunpack.c.l.b16 %v389
        %v417 = vpack.c.b16 %v410, %v409
        %v418 = vpack.c.b16 %v412, %v411
        %v419 = vpack.c.b16 %v414, %v413
        %v420 = vpack.c.b16 %v416, %v415
        %v425 = vunpack.c.l.b16 %v390
        %v426 = vunpack.c.l.b16 %v391
        %v427 = vunpack.c.l.b16 %v392
        %v428 = vunpack.c.l.b16 %v393
        %v429 = vpack.c.b16 %v426, %v425
        %v430 = vpack.c.b16 %v428, %v427
        %vm433 = vcmask 261120
        %v435 = vsel %vm433, %v417, 0
        %v438 = vsel %vm433, %v418, 0
        %v441 = vsel %vm433, %v419, 0
        %v444 = vsel %vm433, %v420, 0
        %446 = vmatprep.subr.bf16.mxu0 0
        %447 = vmatpush1.bf16.msra.mxu0 %v429
        %448 = vmatprep.subr.bf16.mxu0 0
        %449 = vmatpush1.bf16.msra.mxu0 %v430
        %450 = vmatprep.subr.bf16.mxu0 0
        %451 = vmatpush1.bf16.msra.mxu0 0
        %452 = vmatprep.subr.bf16.mxu0 0
        %453 = vmatpush1.bf16.msra.mxu0 0
        %454 = vmatprep.subr.bf16.mxu0 0
        %455 = vmatpush1.bf16.msra.mxu0 0
        %456 = vmatprep.subr.bf16.mxu0 0
        %457 = vmatpush1.bf16.msra.mxu0 0
        %458 = vmatprep.subr.bf16.mxu0 0
        %459 = vmatpush1.bf16.msra.mxu0 0
        %460 = vmatprep.subr.bf16.mxu0 0
        %461 = vmatpush1.bf16.msra.mxu0 0
        %462 = vmatprep.subr.bf16.mxu0 0
        %463 = vmatpush1.bf16.msra.mxu0 0
        %464 = vmatprep.subr.bf16.mxu0 0
        %465 = vmatpush1.bf16.msra.mxu0 0
        %466 = vmatprep.subr.bf16.mxu0 0
        %467 = vmatpush1.bf16.msra.mxu0 0
        %468 = vmatprep.subr.bf16.mxu0 0
        %469 = vmatpush1.bf16.msra.mxu0 0
        %470 = vmatprep.subr.bf16.mxu0 0
        %471 = vmatpush1.bf16.msra.mxu0 0
        %472 = vmatprep.subr.bf16.mxu0 0
        %473 = vmatpush1.bf16.msra.mxu0 0
        %474 = vmatprep.subr.bf16.mxu0 0
        %475 = vmatpush1.bf16.msra.mxu0 0
        %476 = vmatprep.subr.bf16.mxu0 0
        %477 = vmatpush1.bf16.msra.mxu0 0
        %478 = vmatprep.mubr.bf16.mxu0 0
        %479 = vmatmul.mubr.bf16.gmra.mrb[0].mxu0 %v435
        %v480 = vpop.f32.mrb[0].mxu0
        %v481 = vadd.f32 %v399, %v480
        %v482 = vpop.f32.mrb[0].mxu0
        %v483 = vpop.f32.mrb[0].mxu0
        %v484 = vadd.f32 %v399, %v483
        %v485 = vpop.f32.mrb[0].mxu0
        %486 = vmatprep.mubr.bf16.mxu0 0
        %487 = vmatmul.mubr.bf16.gmra.mrb[0].mxu0 %v438
        %v488 = vpop.f32.mrb[0].mxu0
        %v489 = vadd.f32 %v399, %v488
        %v490 = vpop.f32.mrb[0].mxu0
        %v491 = vpop.f32.mrb[0].mxu0
        %v492 = vadd.f32 %v399, %v491
        %v493 = vpop.f32.mrb[0].mxu0
        %494 = vmatprep.mubr.bf16.mxu0 0
        %495 = vmatmul.mubr.bf16.gmra.mrb[0].mxu0 %v441
        %v496 = vpop.f32.mrb[0].mxu0
        %v497 = vadd.f32 %v399, %v496
        %v498 = vpop.f32.mrb[0].mxu0
        %v499 = vpop.f32.mrb[0].mxu0
        %v500 = vadd.f32 %v399, %v499
        %v501 = vpop.f32.mrb[0].mxu0
        %502 = vmatprep.mubr.bf16.mxu0 0
        %503 = vmatmul.mubr.bf16.gmra.mrb[0].mxu0 %v444
        %v504 = vpop.f32.mrb[0].mxu0
        %v505 = vadd.f32 %v399, %v504
        %v506 = vpop.f32.mrb[0].mxu0
        %v507 = vpop.f32.mrb[0].mxu0
        %v508 = vadd.f32 %v399, %v507
        %v509 = vpop.f32.mrb[0].mxu0
        %510 = vdwg.mxu0
        %v511 = vxor.u32 %v481, 2147483648
        %v512 = vxor.u32 %v484, 2147483648
        %v513 = vxor.u32 %v489, 2147483648
        %v514 = vxor.u32 %v492, 2147483648
        %v515 = vxor.u32 %v497, 2147483648
        %v516 = vxor.u32 %v500, 2147483648
        %v517 = vxor.u32 %v505, 2147483648
        %v518 = vxor.u32 %v508, 2147483648
        %v519 = vmul.f32 %v511, 1.442695
        %v520 = vpow.pop %v519
        %v521 = vmul.f32 %v512, 1.442695
        %v522 = vpow.pop %v521
        %v523 = vmul.f32 %v513, 1.442695
        %v524 = vpow.pop %v523
        %v525 = vmul.f32 %v514, 1.442695
        %v526 = vpow.pop %v525
        %v527 = vmul.f32 %v515, 1.442695
        %v528 = vpow.pop %v527
        %v529 = vmul.f32 %v516, 1.442695
        %v530 = vpow.pop %v529
        %v531 = vmul.f32 %v517, 1.442695
        %v532 = vpow.pop %v531
        %v533 = vmul.f32 %v518, 1.442695
        %v534 = vpow.pop %v533
        %v535 = vadd.f32 %v520, 1.0
        %v536 = vadd.f32 %v522, 1.0
        %v537 = vadd.f32 %v524, 1.0
        %v538 = vadd.f32 %v526, 1.0
        %v539 = vadd.f32 %v528, 1.0
        %v540 = vadd.f32 %v530, 1.0
        %v541 = vadd.f32 %v532, 1.0
        %v542 = vadd.f32 %v534, 1.0
        %v543 = vrcp.pop %v535
        %v544 = vmul.f32 1.0, %v543
        %v545 = vrcp.pop %v536
        %v546 = vmul.f32 1.0, %v545
        %v547 = vrcp.pop %v537
        %v548 = vmul.f32 1.0, %v547
        %v549 = vrcp.pop %v538
        %v550 = vmul.f32 1.0, %v549
        %v551 = vrcp.pop %v539
        %v552 = vmul.f32 1.0, %v551
        %v553 = vrcp.pop %v540
        %v554 = vmul.f32 1.0, %v553
        %v555 = vrcp.pop %v541
        %v556 = vmul.f32 1.0, %v555
        %v557 = vrcp.pop %v542
        %v558 = vmul.f32 1.0, %v557
        %v559 = vmul.f32 %v481, %v544
        %v560 = vmul.f32 %v484, %v546
        %v561 = vmul.f32 %v489, %v548
        %v562 = vmul.f32 %v492, %v550
        %v563 = vmul.f32 %v497, %v552
        %v564 = vmul.f32 %v500, %v554
        %v565 = vmul.f32 %v505, %v556
        %v566 = vmul.f32 %v508, %v558
        %v567 = vpack.c.bf16 %v560, %v559
        %v568 = vpack.c.bf16 %v562, %v561
        %v569 = vpack.c.bf16 %v564, %v563
        %v570 = vpack.c.bf16 %v566, %v565
        %v571 = vld [vmem:[%s301] sm:$0xff]
        %v572 = vld [vmem:[%s301 + $0x8] sm:$0xff]
        %v573 = vld [vmem:[%s301 + $0x10] sm:$0xff]
        %v574 = vld [vmem:[%s301 + $0x18] sm:$0xff]
        %v575 = vld [vmem:[%s301 + $0x20] sm:$0xff]
        %v576 = vld [vmem:[%s301 + $0x28] sm:$0xff]
        %v577 = vld [vmem:[%s301 + $0x30] sm:$0xff]
        %v578 = vld [vmem:[%s301 + $0x38] sm:$0xff]
        %v579 = vld [vmem:[%s301 + $0x40] sm:$0xff]
        %v580 = vld [vmem:[%s301 + $0x48] sm:$0xff]
        %v581 = vld [vmem:[%s301 + $0x50] sm:$0xff]
        %v582 = vld [vmem:[%s301 + $0x58] sm:$0xff]
        %v583 = vld [vmem:[%s301 + $0x60] sm:$0xff]
        %v584 = vld [vmem:[%s301 + $0x68] sm:$0xff]
        %v585 = vld [vmem:[%s301 + $0x70] sm:$0xff]
        %v586 = vld [vmem:[%s301 + $0x78] sm:$0xff]
        %v587 = vld [vmem:[%s301 + $0x80] sm:$0xff]
        %v588 = vld [vmem:[%s301 + $0x88] sm:$0xff]
        %v589 = vld [vmem:[%s301 + $0x90] sm:$0xff]
        %v590 = vld [vmem:[%s301 + $0x98] sm:$0xff]
        %v591 = vld [vmem:[%s356] sm:$0xff]
        %v592 = vld [vmem:[%s356 + $0x8] sm:$0x3]
        %v595 = vlaneseq
        %v596 = vshrl.u32 %v595, 7
        %v597 = vsub.s32 0, %v596
        %v598 = vrot.slane %v591, %v597
        %v599 = vlaneseq
        %v600 = vshrl.u32 %v599, 7
        %v601 = vsub.s32 1, %v600
        %v602 = vrot.slane %v591, %v601
        %v603 = vlaneseq
        %v604 = vshrl.u32 %v603, 7
        %v605 = vsub.s32 2, %v604
        %v606 = vrot.slane %v591, %v605
        %v607 = vlaneseq
        %v608 = vshrl.u32 %v607, 7
        %v609 = vsub.s32 3, %v608
        %v610 = vrot.slane %v591, %v609
        %v611 = vlaneseq
        %v612 = vshrl.u32 %v611, 7
        %v613 = vsub.s32 4, %v612
        %v614 = vrot.slane %v591, %v613
        %v615 = vlaneseq
        %v616 = vshrl.u32 %v615, 7
        %v617 = vsub.s32 5, %v616
        %v618 = vrot.slane %v591, %v617
        %v619 = vlaneseq
        %v620 = vshrl.u32 %v619, 7
        %v621 = vsub.s32 6, %v620
        %v622 = vrot.slane %v591, %v621
        %v623 = vlaneseq
        %v624 = vshrl.u32 %v623, 7
        %v625 = vsub.s32 7, %v624
        %v626 = vrot.slane %v591, %v625
        %v627 = vlaneseq
        %v628 = vshrl.u32 %v627, 7
        %v629 = vsub.s32 0, %v628
        %v630 = vrot.slane %v592, %v629
        %v631 = vlaneseq
        %v632 = vshrl.u32 %v631, 7
        %v633 = vsub.s32 1, %v632
        %v634 = vrot.slane %v592, %v633
        %v665 = vunpack.c.l.b16 %v571
        %v666 = vunpack.c.h.b16 %v571
        %v667 = vunpack.c.l.b16 %v572
        %v668 = vunpack.c.h.b16 %v572
        %v669 = vunpack.c.l.b16 %v573
        %v670 = vunpack.c.h.b16 %v573
        %v671 = vunpack.c.l.b16 %v574
        %v672 = vunpack.c.h.b16 %v574
        %v673 = vunpack.c.l.b16 %v575
        %v674 = vunpack.c.h.b16 %v575
        %v675 = vunpack.c.l.b16 %v576
        %v676 = vunpack.c.h.b16 %v576
        %v677 = vunpack.c.l.b16 %v577
        %v678 = vunpack.c.h.b16 %v577
        %v679 = vunpack.c.l.b16 %v578
        %v680 = vunpack.c.h.b16 %v578
        %v681 = vunpack.c.l.b16 %v579
        %v682 = vunpack.c.h.b16 %v579
        %v683 = vunpack.c.l.b16 %v580
        %v684 = vunpack.c.h.b16 %v580
        %v685 = vunpack.c.l.b16 %v581
        %v686 = vunpack.c.h.b16 %v581
        %v687 = vunpack.c.l.b16 %v582
        %v688 = vunpack.c.h.b16 %v582
        %v689 = vunpack.c.l.b16 %v583
        %v690 = vunpack.c.h.b16 %v583
        %v691 = vunpack.c.l.b16 %v584
        %v692 = vunpack.c.h.b16 %v584
        %v693 = vunpack.c.l.b16 %v585
        %v694 = vunpack.c.h.b16 %v585
        %v695 = vunpack.c.l.b16 %v586
        %v696 = vunpack.c.h.b16 %v586
        %v697 = vunpack.c.l.b16 %v587
        %v698 = vunpack.c.h.b16 %v587
        %v699 = vunpack.c.l.b16 %v588
        %v700 = vunpack.c.h.b16 %v588
        %v701 = vunpack.c.l.b16 %v589
        %v702 = vunpack.c.h.b16 %v589
        %v703 = vunpack.c.l.b16 %v590
        %v704 = vunpack.c.h.b16 %v590
        %v705 = vpack.c.b16 %v675, %v665
        %v706 = vpack.c.b16 %v676, %v666
        %v707 = vpack.c.b16 %v677, %v667
        %v708 = vpack.c.b16 %v678, %v668
        %v709 = vpack.c.b16 %v679, %v669
        %v710 = vpack.c.b16 %v680, %v670
        %v711 = vpack.c.b16 %v681, %v671
        %v712 = vpack.c.b16 %v682, %v672
        %v713 = vpack.c.b16 %v683, %v673
        %v714 = vpack.c.b16 %v684, %v674
        %v715 = vpack.c.b16 %v695, %v685
        %v716 = vpack.c.b16 %v696, %v686
        %v717 = vpack.c.b16 %v697, %v687
        %v718 = vpack.c.b16 %v698, %v688
        %v719 = vpack.c.b16 %v699, %v689
        %v720 = vpack.c.b16 %v700, %v690
        %v721 = vpack.c.b16 %v701, %v691
        %v722 = vpack.c.b16 %v702, %v692
        %v723 = vpack.c.b16 %v703, %v693
        %v724 = vpack.c.b16 %v704, %v694
        %v746 = vsel %vm433, %v567, 0
        %v749 = vsel %vm433, %v568, 0
        %v752 = vsel %vm433, %v569, 0
        %v755 = vsel %vm433, %v570, 0
        %757 = vmatprep.subr.bf16.mxu0 %v706
        %758 = vmatpush1.bf16.msra.mxu0 %v705
        %759 = vmatprep.subr.bf16.mxu0 %v716
        %760 = vmatpush1.bf16.msra.mxu0 %v715
        %761 = vmatprep.subr.bf16.mxu0 0
        %762 = vmatpush1.bf16.msra.mxu0 0
        %763 = vmatprep.subr.bf16.mxu0 0
        %764 = vmatpush1.bf16.msra.mxu0 0
        %765 = vmatprep.subr.bf16.mxu0 0
        %766 = vmatpush1.bf16.msra.mxu0 0
        %767 = vmatprep.subr.bf16.mxu0 0
        %768 = vmatpush1.bf16.msra.mxu0 0
        %769 = vmatprep.subr.bf16.mxu0 0
        %770 = vmatpush1.bf16.msra.mxu0 0
        %771 = vmatprep.subr.bf16.mxu0 0
        %772 = vmatpush1.bf16.msra.mxu0 0
        %773 = vmatprep.subr.bf16.mxu0 0
        %774 = vmatpush1.bf16.msra.mxu0 0
        %775 = vmatprep.subr.bf16.mxu0 0
        %776 = vmatpush1.bf16.msra.mxu0 0
        %777 = vmatprep.subr.bf16.mxu0 0
        %778 = vmatpush1.bf16.msra.mxu0 0
        %779 = vmatprep.subr.bf16.mxu0 0
        %780 = vmatpush1.bf16.msra.mxu0 0
        %781 = vmatprep.subr.bf16.mxu0 0
        %782 = vmatpush1.bf16.msra.mxu0 0
        %783 = vmatprep.subr.bf16.mxu0 0
        %784 = vmatpush1.bf16.msra.mxu0 0
        %785 = vmatprep.subr.bf16.mxu0 0
        %786 = vmatpush1.bf16.msra.mxu0 0
        %787 = vmatprep.subr.bf16.mxu0 0
        %788 = vmatpush1.bf16.msra.mxu0 0
        %789 = vmatprep.mubr.bf16.mxu0 0
        %790 = vmatmul.mubr.bf16.gmra.mrb[0].mxu0 %v746
        %v791 = vpop.f32.mrb[0].mxu0
        %v792 = vadd.f32 %v598, %v791
        %v793 = vpop.f32.mrb[0].mxu0
        %v794 = vadd.f32 %v602, %v793
        %v795 = vpop.f32.mrb[0].mxu0
        %v796 = vadd.f32 %v598, %v795
        %v797 = vpop.f32.mrb[0].mxu0
        %v798 = vadd.f32 %v602, %v797
        %799 = vmatprep.mubr.bf16.mxu0 0
        %800 = vmatmul.mubr.bf16.gmra.mrb[0].mxu0 %v749
        %v801 = vpop.f32.mrb[0].mxu0
        %v802 = vadd.f32 %v598, %v801
        %v803 = vpop.f32.mrb[0].mxu0
        %v804 = vadd.f32 %v602, %v803
        %v805 = vpop.f32.mrb[0].mxu0
        %v806 = vadd.f32 %v598, %v805
        %v807 = vpop.f32.mrb[0].mxu0
        %v808 = vadd.f32 %v602, %v807
        %809 = vmatprep.mubr.bf16.mxu0 0
        %810 = vmatmul.mubr.bf16.gmra.mrb[0].mxu0 %v752
        %v811 = vpop.f32.mrb[0].mxu0
        %v812 = vadd.f32 %v598, %v811
        %v813 = vpop.f32.mrb[0].mxu0
        %v814 = vadd.f32 %v602, %v813
        %v815 = vpop.f32.mrb[0].mxu0
        %v816 = vadd.f32 %v598, %v815
        %v817 = vpop.f32.mrb[0].mxu0
        %v818 = vadd.f32 %v602, %v817
        %819 = vmatprep.mubr.bf16.mxu0 0
        %820 = vmatmul.mubr.bf16.gmra.mrb[0].mxu0 %v755
        %v821 = vpop.f32.mrb[0].mxu0
        %v822 = vadd.f32 %v598, %v821
        %v823 = vpop.f32.mrb[0].mxu0
        %v824 = vadd.f32 %v602, %v823
        %v825 = vpop.f32.mrb[0].mxu0
        %v826 = vadd.f32 %v598, %v825
        %v827 = vpop.f32.mrb[0].mxu0
        %v828 = vadd.f32 %v602, %v827
        %829 = vdwg.mxu0
        %830 = vmatprep.subr.bf16.mxu0 %v708
        %831 = vmatpush1.bf16.msra.mxu0 %v707
        %832 = vmatprep.subr.bf16.mxu0 %v718
        %833 = vmatpush1.bf16.msra.mxu0 %v717
        %834 = vmatprep.subr.bf16.mxu0 0
        %835 = vmatpush1.bf16.msra.mxu0 0
        %836 = vmatprep.subr.bf16.mxu0 0
        %837 = vmatpush1.bf16.msra.mxu0 0
        %838 = vmatprep.subr.bf16.mxu0 0
        %839 = vmatpush1.bf16.msra.mxu0 0
        %840 = vmatprep.subr.bf16.mxu0 0
        %841 = vmatpush1.bf16.msra.mxu0 0
        %842 = vmatprep.subr.bf16.mxu0 0
        %843 = vmatpush1.bf16.msra.mxu0 0
        %844 = vmatprep.subr.bf16.mxu0 0
        %845 = vmatpush1.bf16.msra.mxu0 0
        %846 = vmatprep.subr.bf16.mxu0 0
        %847 = vmatpush1.bf16.msra.mxu0 0
        %848 = vmatprep.subr.bf16.mxu0 0
        %849 = vmatpush1.bf16.msra.mxu0 0
        %850 = vmatprep.subr.bf16.mxu0 0
        %851 = vmatpush1.bf16.msra.mxu0 0
        %852 = vmatprep.subr.bf16.mxu0 0
        %853 = vmatpush1.bf16.msra.mxu0 0
        %854 = vmatprep.subr.bf16.mxu0 0
        %855 = vmatpush1.bf16.msra.mxu0 0
        %856 = vmatprep.subr.bf16.mxu0 0
        %857 = vmatpush1.bf16.msra.mxu0 0
        %858 = vmatprep.subr.bf16.mxu0 0
        %859 = vmatpush1.bf16.msra.mxu0 0
        %860 = vmatprep.subr.bf16.mxu0 0
        %861 = vmatpush1.bf16.msra.mxu0 0
        %862 = vmatprep.mubr.bf16.mxu0 0
        %863 = vmatmul.mubr.bf16.gmra.mrb[0].mxu0 %v746
        %v864 = vpop.f32.mrb[0].mxu0
        %v865 = vadd.f32 %v606, %v864
        %v866 = vpop.f32.mrb[0].mxu0
        %v867 = vadd.f32 %v610, %v866
        %v868 = vpop.f32.mrb[0].mxu0
        %v869 = vadd.f32 %v606, %v868
        %v870 = vpop.f32.mrb[0].mxu0
        %v871 = vadd.f32 %v610, %v870
        %872 = vmatprep.mubr.bf16.mxu0 0
        %873 = vmatmul.mubr.bf16.gmra.mrb[0].mxu0 %v749
        %v874 = vpop.f32.mrb[0].mxu0
        %v875 = vadd.f32 %v606, %v874
        %v876 = vpop.f32.mrb[0].mxu0
        %v877 = vadd.f32 %v610, %v876
        %v878 = vpop.f32.mrb[0].mxu0
        %v879 = vadd.f32 %v606, %v878
        %v880 = vpop.f32.mrb[0].mxu0
        %v881 = vadd.f32 %v610, %v880
        %882 = vmatprep.mubr.bf16.mxu0 0
        %883 = vmatmul.mubr.bf16.gmra.mrb[0].mxu0 %v752
        %v884 = vpop.f32.mrb[0].mxu0
        %v885 = vadd.f32 %v606, %v884
        %v886 = vpop.f32.mrb[0].mxu0
        %v887 = vadd.f32 %v610, %v886
        %v888 = vpop.f32.mrb[0].mxu0
        %v889 = vadd.f32 %v606, %v888
        %v890 = vpop.f32.mrb[0].mxu0
        %v891 = vadd.f32 %v610, %v890
        %892 = vmatprep.mubr.bf16.mxu0 0
        %893 = vmatmul.mubr.bf16.gmra.mrb[0].mxu0 %v755
        %v894 = vpop.f32.mrb[0].mxu0
        %v895 = vadd.f32 %v606, %v894
        %v896 = vpop.f32.mrb[0].mxu0
        %v897 = vadd.f32 %v610, %v896
        %v898 = vpop.f32.mrb[0].mxu0
        %v899 = vadd.f32 %v606, %v898
        %v900 = vpop.f32.mrb[0].mxu0
        %v901 = vadd.f32 %v610, %v900
        %902 = vdwg.mxu0
        %903 = vmatprep.subr.bf16.mxu0 %v710
        %904 = vmatpush1.bf16.msra.mxu0 %v709
        %905 = vmatprep.subr.bf16.mxu0 %v720
        %906 = vmatpush1.bf16.msra.mxu0 %v719
        %907 = vmatprep.subr.bf16.mxu0 0
        %908 = vmatpush1.bf16.msra.mxu0 0
        %909 = vmatprep.subr.bf16.mxu0 0
        %910 = vmatpush1.bf16.msra.mxu0 0
        %911 = vmatprep.subr.bf16.mxu0 0
        %912 = vmatpush1.bf16.msra.mxu0 0
        %913 = vmatprep.subr.bf16.mxu0 0
        %914 = vmatpush1.bf16.msra.mxu0 0
        %915 = vmatprep.subr.bf16.mxu0 0
        %916 = vmatpush1.bf16.msra.mxu0 0
        %917 = vmatprep.subr.bf16.mxu0 0
        %918 = vmatpush1.bf16.msra.mxu0 0
        %919 = vmatprep.subr.bf16.mxu0 0
        %920 = vmatpush1.bf16.msra.mxu0 0
        %921 = vmatprep.subr.bf16.mxu0 0
        %922 = vmatpush1.bf16.msra.mxu0 0
        %923 = vmatprep.subr.bf16.mxu0 0
        %924 = vmatpush1.bf16.msra.mxu0 0
        %925 = vmatprep.subr.bf16.mxu0 0
        %926 = vmatpush1.bf16.msra.mxu0 0
        %927 = vmatprep.subr.bf16.mxu0 0
        %928 = vmatpush1.bf16.msra.mxu0 0
        %929 = vmatprep.subr.bf16.mxu0 0
        %930 = vmatpush1.bf16.msra.mxu0 0
        %931 = vmatprep.subr.bf16.mxu0 0
        %932 = vmatpush1.bf16.msra.mxu0 0
        %933 = vmatprep.subr.bf16.mxu0 0
        %934 = vmatpush1.bf16.msra.mxu0 0
        %935 = vmatprep.mubr.bf16.mxu0 0
        %936 = vmatmul.mubr.bf16.gmra.mrb[0].mxu0 %v746
        %v937 = vpop.f32.mrb[0].mxu0
        %v938 = vadd.f32 %v614, %v937
        %v939 = vpop.f32.mrb[0].mxu0
        %v940 = vadd.f32 %v618, %v939
        %v941 = vpop.f32.mrb[0].mxu0
        %v942 = vadd.f32 %v614, %v941
        %v943 = vpop.f32.mrb[0].mxu0
        %v944 = vadd.f32 %v618, %v943
        %945 = vmatprep.mubr.bf16.mxu0 0
        %946 = vmatmul.mubr.bf16.gmra.mrb[0].mxu0 %v749
        %v947 = vpop.f32.mrb[0].mxu0
        %v948 = vadd.f32 %v614, %v947
        %v949 = vpop.f32.mrb[0].mxu0
        %v950 = vadd.f32 %v618, %v949
        %v951 = vpop.f32.mrb[0].mxu0
        %v952 = vadd.f32 %v614, %v951
        %v953 = vpop.f32.mrb[0].mxu0
        %v954 = vadd.f32 %v618, %v953
        %955 = vmatprep.mubr.bf16.mxu0 0
        %956 = vmatmul.mubr.bf16.gmra.mrb[0].mxu0 %v752
        %v957 = vpop.f32.mrb[0].mxu0
        %v958 = vadd.f32 %v614, %v957
        %v959 = vpop.f32.mrb[0].mxu0
        %v960 = vadd.f32 %v618, %v959
        %v961 = vpop.f32.mrb[0].mxu0
        %v962 = vadd.f32 %v614, %v961
        %v963 = vpop.f32.mrb[0].mxu0
        %v964 = vadd.f32 %v618, %v963
        %965 = vmatprep.mubr.bf16.mxu0 0
        %966 = vmatmul.mubr.bf16.gmra.mrb[0].mxu0 %v755
        %v967 = vpop.f32.mrb[0].mxu0
        %v968 = vadd.f32 %v614, %v967
        %v969 = vpop.f32.mrb[0].mxu0
        %v970 = vadd.f32 %v618, %v969
        %v971 = vpop.f32.mrb[0].mxu0
        %v972 = vadd.f32 %v614, %v971
        %v973 = vpop.f32.mrb[0].mxu0
        %v974 = vadd.f32 %v618, %v973
        %975 = vdwg.mxu0
        %976 = vmatprep.subr.bf16.mxu0 %v712
        %977 = vmatpush1.bf16.msra.mxu0 %v711
        %978 = vmatprep.subr.bf16.mxu0 %v722
        %979 = vmatpush1.bf16.msra.mxu0 %v721
        %980 = vmatprep.subr.bf16.mxu0 0
        %981 = vmatpush1.bf16.msra.mxu0 0
        %982 = vmatprep.subr.bf16.mxu0 0
        %983 = vmatpush1.bf16.msra.mxu0 0
        %984 = vmatprep.subr.bf16.mxu0 0
        %985 = vmatpush1.bf16.msra.mxu0 0
        %986 = vmatprep.subr.bf16.mxu0 0
        %987 = vmatpush1.bf16.msra.mxu0 0
        %988 = vmatprep.subr.bf16.mxu0 0
        %989 = vmatpush1.bf16.msra.mxu0 0
        %990 = vmatprep.subr.bf16.mxu0 0
        %991 = vmatpush1.bf16.msra.mxu0 0
        %992 = vmatprep.subr.bf16.mxu0 0
        %993 = vmatpush1.bf16.msra.mxu0 0
        %994 = vmatprep.subr.bf16.mxu0 0
        %995 = vmatpush1.bf16.msra.mxu0 0
        %996 = vmatprep.subr.bf16.mxu0 0
        %997 = vmatpush1.bf16.msra.mxu0 0
        %998 = vmatprep.subr.bf16.mxu0 0
        %999 = vmatpush1.bf16.msra.mxu0 0
        %1000 = vmatprep.subr.bf16.mxu0 0
        %1001 = vmatpush1.bf16.msra.mxu0 0
        %1002 = vmatprep.subr.bf16.mxu0 0
        %1003 = vmatpush1.bf16.msra.mxu0 0
        %1004 = vmatprep.subr.bf16.mxu0 0
        %1005 = vmatpush1.bf16.msra.mxu0 0
        %1006 = vmatprep.subr.bf16.mxu0 0
        %1007 = vmatpush1.bf16.msra.mxu0 0
        %1008 = vmatprep.mubr.bf16.mxu0 0
        %1009 = vmatmul.mubr.bf16.gmra.mrb[0].mxu0 %v746
        %v1010 = vpop.f32.mrb[0].mxu0
        %v1011 = vadd.f32 %v622, %v1010
        %v1012 = vpop.f32.mrb[0].mxu0
        %v1013 = vadd.f32 %v626, %v1012
        %v1014 = vpop.f32.mrb[0].mxu0
        %v1015 = vadd.f32 %v622, %v1014
        %v1016 = vpop.f32.mrb[0].mxu0
        %v1017 = vadd.f32 %v626, %v1016
        %1018 = vmatprep.mubr.bf16.mxu0 0
        %1019 = vmatmul.mubr.bf16.gmra.mrb[0].mxu0 %v749
        %v1020 = vpop.f32.mrb[0].mxu0
        %v1021 = vadd.f32 %v622, %v1020
        %v1022 = vpop.f32.mrb[0].mxu0
        %v1023 = vadd.f32 %v626, %v1022
        %v1024 = vpop.f32.mrb[0].mxu0
        %v1025 = vadd.f32 %v622, %v1024
        %v1026 = vpop.f32.mrb[0].mxu0
        %v1027 = vadd.f32 %v626, %v1026
        %1028 = vmatprep.mubr.bf16.mxu0 0
        %1029 = vmatmul.mubr.bf16.gmra.mrb[0].mxu0 %v752
        %v1030 = vpop.f32.mrb[0].mxu0
        %v1031 = vadd.f32 %v622, %v1030
        %v1032 = vpop.f32.mrb[0].mxu0
        %v1033 = vadd.f32 %v626, %v1032
        %v1034 = vpop.f32.mrb[0].mxu0
        %v1035 = vadd.f32 %v622, %v1034
        %v1036 = vpop.f32.mrb[0].mxu0
        %v1037 = vadd.f32 %v626, %v1036
        %1038 = vmatprep.mubr.bf16.mxu0 0
        %1039 = vmatmul.mubr.bf16.gmra.mrb[0].mxu0 %v755
        %v1040 = vpop.f32.mrb[0].mxu0
        %v1041 = vadd.f32 %v622, %v1040
        %v1042 = vpop.f32.mrb[0].mxu0
        %v1043 = vadd.f32 %v626, %v1042
        %v1044 = vpop.f32.mrb[0].mxu0
        %v1045 = vadd.f32 %v622, %v1044
        %v1046 = vpop.f32.mrb[0].mxu0
        %v1047 = vadd.f32 %v626, %v1046
        %1048 = vdwg.mxu0
        %1049 = vmatprep.subr.bf16.mxu0 %v714
        %1050 = vmatpush1.bf16.msra.mxu0 %v713
        %1051 = vmatprep.subr.bf16.mxu0 %v724
        %1052 = vmatpush1.bf16.msra.mxu0 %v723
        %1053 = vmatprep.subr.bf16.mxu0 0
        %1054 = vmatpush1.bf16.msra.mxu0 0
        %1055 = vmatprep.subr.bf16.mxu0 0
        %1056 = vmatpush1.bf16.msra.mxu0 0
        %1057 = vmatprep.subr.bf16.mxu0 0
        %1058 = vmatpush1.bf16.msra.mxu0 0
        %1059 = vmatprep.subr.bf16.mxu0 0
        %1060 = vmatpush1.bf16.msra.mxu0 0
        %1061 = vmatprep.subr.bf16.mxu0 0
        %1062 = vmatpush1.bf16.msra.mxu0 0
        %1063 = vmatprep.subr.bf16.mxu0 0
        %1064 = vmatpush1.bf16.msra.mxu0 0
        %1065 = vmatprep.subr.bf16.mxu0 0
        %1066 = vmatpush1.bf16.msra.mxu0 0
        %1067 = vmatprep.subr.bf16.mxu0 0
        %1068 = vmatpush1.bf16.msra.mxu0 0
        %1069 = vmatprep.subr.bf16.mxu0 0
        %1070 = vmatpush1.bf16.msra.mxu0 0
        %1071 = vmatprep.subr.bf16.mxu0 0
        %1072 = vmatpush1.bf16.msra.mxu0 0
        %1073 = vmatprep.subr.bf16.mxu0 0
        %1074 = vmatpush1.bf16.msra.mxu0 0
        %1075 = vmatprep.subr.bf16.mxu0 0
        %1076 = vmatpush1.bf16.msra.mxu0 0
        %1077 = vmatprep.subr.bf16.mxu0 0
        %1078 = vmatpush1.bf16.msra.mxu0 0
        %1079 = vmatprep.subr.bf16.mxu0 0
        %1080 = vmatpush1.bf16.msra.mxu0 0
        %1081 = vmatprep.mubr.bf16.mxu0 0
        %1082 = vmatmul.mubr.bf16.gmra.mrb[0].mxu0 %v746
        %v1083 = vpop.f32.mrb[0].mxu0
        %v1084 = vadd.f32 %v630, %v1083
        %v1085 = vpop.f32.mrb[0].mxu0
        %v1086 = vadd.f32 %v634, %v1085
        %v1087 = vpop.f32.mrb[0].mxu0
        %v1088 = vadd.f32 %v630, %v1087
        %v1089 = vpop.f32.mrb[0].mxu0
        %v1090 = vadd.f32 %v634, %v1089
        %1091 = vmatprep.mubr.bf16.mxu0 0
        %1092 = vmatmul.mubr.bf16.gmra.mrb[0].mxu0 %v749
        %v1093 = vpop.f32.mrb[0].mxu0
        %v1094 = vadd.f32 %v630, %v1093
        %v1095 = vpop.f32.mrb[0].mxu0
        %v1096 = vadd.f32 %v634, %v1095
        %v1097 = vpop.f32.mrb[0].mxu0
        %v1098 = vadd.f32 %v630, %v1097
        %v1099 = vpop.f32.mrb[0].mxu0
        %v1100 = vadd.f32 %v634, %v1099
        %1101 = vmatprep.mubr.bf16.mxu0 0
        %1102 = vmatmul.mubr.bf16.gmra.mrb[0].mxu0 %v752
        %v1103 = vpop.f32.mrb[0].mxu0
        %v1104 = vadd.f32 %v630, %v1103
        %v1105 = vpop.f32.mrb[0].mxu0
        %v1106 = vadd.f32 %v634, %v1105
        %v1107 = vpop.f32.mrb[0].mxu0
        %v1108 = vadd.f32 %v630, %v1107
        %v1109 = vpop.f32.mrb[0].mxu0
        %v1110 = vadd.f32 %v634, %v1109
        %1111 = vmatprep.mubr.bf16.mxu0 0
        %1112 = vmatmul.mubr.bf16.gmra.mrb[0].mxu0 %v755
        %v1113 = vpop.f32.mrb[0].mxu0
        %v1114 = vadd.f32 %v630, %v1113
        %v1115 = vpop.f32.mrb[0].mxu0
        %v1116 = vadd.f32 %v634, %v1115
        %v1117 = vpop.f32.mrb[0].mxu0
        %v1118 = vadd.f32 %v630, %v1117
        %v1119 = vpop.f32.mrb[0].mxu0
        %v1120 = vadd.f32 %v634, %v1119
        %1121 = vdwg.mxu0
        %v1122 = vxor.u32 %v792, 2147483648
        %v1123 = vxor.u32 %v794, 2147483648
        %v1124 = vxor.u32 %v865, 2147483648
        %v1125 = vxor.u32 %v867, 2147483648
        %v1126 = vxor.u32 %v938, 2147483648
        %v1127 = vxor.u32 %v940, 2147483648
        %v1128 = vxor.u32 %v1011, 2147483648
        %v1129 = vxor.u32 %v1013, 2147483648
        %v1130 = vxor.u32 %v1084, 2147483648
        %v1131 = vxor.u32 %v1086, 2147483648
        %v1132 = vxor.u32 %v796, 2147483648
        %v1133 = vxor.u32 %v798, 2147483648
        %v1134 = vxor.u32 %v869, 2147483648
        %v1135 = vxor.u32 %v871, 2147483648
        %v1136 = vxor.u32 %v942, 2147483648
        %v1137 = vxor.u32 %v944, 2147483648
        %v1138 = vxor.u32 %v1015, 2147483648
        %v1139 = vxor.u32 %v1017, 2147483648
        %v1140 = vxor.u32 %v1088, 2147483648
        %v1141 = vxor.u32 %v1090, 2147483648
        %v1142 = vxor.u32 %v802, 2147483648
        %v1143 = vxor.u32 %v804, 2147483648
        %v1144 = vxor.u32 %v875, 2147483648
        %v1145 = vxor.u32 %v877, 2147483648
        %v1146 = vxor.u32 %v948, 2147483648
        %v1147 = vxor.u32 %v950, 2147483648
        %v1148 = vxor.u32 %v1021, 2147483648
        %v1149 = vxor.u32 %v1023, 2147483648
        %v1150 = vxor.u32 %v1094, 2147483648
        %v1151 = vxor.u32 %v1096, 2147483648
        %v1152 = vxor.u32 %v806, 2147483648
        %v1153 = vxor.u32 %v808, 2147483648
        %v1154 = vxor.u32 %v879, 2147483648
        %v1155 = vxor.u32 %v881, 2147483648
        %v1156 = vxor.u32 %v952, 2147483648
        %v1157 = vxor.u32 %v954, 2147483648
        %v1158 = vxor.u32 %v1025, 2147483648
        %v1159 = vxor.u32 %v1027, 2147483648
        %v1160 = vxor.u32 %v1098, 2147483648
        %v1161 = vxor.u32 %v1100, 2147483648
        %v1162 = vxor.u32 %v812, 2147483648
        %v1163 = vxor.u32 %v814, 2147483648
        %v1164 = vxor.u32 %v885, 2147483648
        %v1165 = vxor.u32 %v887, 2147483648
        %v1166 = vxor.u32 %v958, 2147483648
        %v1167 = vxor.u32 %v960, 2147483648
        %v1168 = vxor.u32 %v1031, 2147483648
        %v1169 = vxor.u32 %v1033, 2147483648
        %v1170 = vxor.u32 %v1104, 2147483648
        %v1171 = vxor.u32 %v1106, 2147483648
        %v1172 = vxor.u32 %v816, 2147483648
        %v1173 = vxor.u32 %v818, 2147483648
        %v1174 = vxor.u32 %v889, 2147483648
        %v1175 = vxor.u32 %v891, 2147483648
        %v1176 = vxor.u32 %v962, 2147483648
        %v1177 = vxor.u32 %v964, 2147483648
        %v1178 = vxor.u32 %v1035, 2147483648
        %v1179 = vxor.u32 %v1037, 2147483648
        %v1180 = vxor.u32 %v1108, 2147483648
        %v1181 = vxor.u32 %v1110, 2147483648
        %v1182 = vxor.u32 %v822, 2147483648
        %v1183 = vxor.u32 %v824, 2147483648
        %v1184 = vxor.u32 %v895, 2147483648
        %v1185 = vxor.u32 %v897, 2147483648
        %v1186 = vxor.u32 %v968, 2147483648
        %v1187 = vxor.u32 %v970, 2147483648
        %v1188 = vxor.u32 %v1041, 2147483648
        %v1189 = vxor.u32 %v1043, 2147483648
        %v1190 = vxor.u32 %v1114, 2147483648
        %v1191 = vxor.u32 %v1116, 2147483648
        %v1192 = vxor.u32 %v826, 2147483648
        %v1193 = vxor.u32 %v828, 2147483648
        %v1194 = vxor.u32 %v899, 2147483648
        %v1195 = vxor.u32 %v901, 2147483648
        %v1196 = vxor.u32 %v972, 2147483648
        %v1197 = vxor.u32 %v974, 2147483648
        %v1198 = vxor.u32 %v1045, 2147483648
        %v1199 = vxor.u32 %v1047, 2147483648
        %v1200 = vxor.u32 %v1118, 2147483648
        %v1201 = vxor.u32 %v1120, 2147483648
        %v1202 = vmul.f32 %v1122, 1.442695
        %v1203 = vpow.pop %v1202
        %v1204 = vmul.f32 %v1123, 1.442695
        %v1205 = vpow.pop %v1204
        %v1206 = vmul.f32 %v1124, 1.442695
        %v1207 = vpow.pop %v1206
        %v1208 = vmul.f32 %v1125, 1.442695
        %v1209 = vpow.pop %v1208
        %v1210 = vmul.f32 %v1126, 1.442695
        %v1211 = vpow.pop %v1210
        %v1212 = vmul.f32 %v1127, 1.442695
        %v1213 = vpow.pop %v1212
        %v1214 = vmul.f32 %v1128, 1.442695
        %v1215 = vpow.pop %v1214
        %v1216 = vmul.f32 %v1129, 1.442695
        %v1217 = vpow.pop %v1216
        %v1218 = vmul.f32 %v1130, 1.442695
        %v1219 = vpow.pop %v1218
        %v1220 = vmul.f32 %v1131, 1.442695
        %v1221 = vpow.pop %v1220
        %v1222 = vmul.f32 %v1132, 1.442695
        %v1223 = vpow.pop %v1222
        %v1224 = vmul.f32 %v1133, 1.442695
        %v1225 = vpow.pop %v1224
        %v1226 = vmul.f32 %v1134, 1.442695
        %v1227 = vpow.pop %v1226
        %v1228 = vmul.f32 %v1135, 1.442695
        %v1229 = vpow.pop %v1228
        %v1230 = vmul.f32 %v1136, 1.442695
        %v1231 = vpow.pop %v1230
        %v1232 = vmul.f32 %v1137, 1.442695
        %v1233 = vpow.pop %v1232
        %v1234 = vmul.f32 %v1138, 1.442695
        %v1235 = vpow.pop %v1234
        %v1236 = vmul.f32 %v1139, 1.442695
        %v1237 = vpow.pop %v1236
        %v1238 = vmul.f32 %v1140, 1.442695
        %v1239 = vpow.pop %v1238
        %v1240 = vmul.f32 %v1141, 1.442695
        %v1241 = vpow.pop %v1240
        %v1242 = vmul.f32 %v1142, 1.442695
        %v1243 = vpow.pop %v1242
        %v1244 = vmul.f32 %v1143, 1.442695
        %v1245 = vpow.pop %v1244
        %v1246 = vmul.f32 %v1144, 1.442695
        %v1247 = vpow.pop %v1246
        %v1248 = vmul.f32 %v1145, 1.442695
        %v1249 = vpow.pop %v1248
        %v1250 = vmul.f32 %v1146, 1.442695
        %v1251 = vpow.pop %v1250
        %v1252 = vmul.f32 %v1147, 1.442695
        %v1253 = vpow.pop %v1252
        %v1254 = vmul.f32 %v1148, 1.442695
        %v1255 = vpow.pop %v1254
        %v1256 = vmul.f32 %v1149, 1.442695
        %v1257 = vpow.pop %v1256
        %v1258 = vmul.f32 %v1150, 1.442695
        %v1259 = vpow.pop %v1258
        %v1260 = vmul.f32 %v1151, 1.442695
        %v1261 = vpow.pop %v1260
        %v1262 = vmul.f32 %v1152, 1.442695
        %v1263 = vpow.pop %v1262
        %v1264 = vmul.f32 %v1153, 1.442695
        %v1265 = vpow.pop %v1264
        %v1266 = vmul.f32 %v1154, 1.442695
        %v1267 = vpow.pop %v1266
        %v1268 = vmul.f32 %v1155, 1.442695
        %v1269 = vpow.pop %v1268
        %v1270 = vmul.f32 %v1156, 1.442695
        %v1271 = vpow.pop %v1270
        %v1272 = vmul.f32 %v1157, 1.442695
        %v1273 = vpow.pop %v1272
        %v1274 = vmul.f32 %v1158, 1.442695
        %v1275 = vpow.pop %v1274
        %v1276 = vmul.f32 %v1159, 1.442695
        %v1277 = vpow.pop %v1276
        %v1278 = vmul.f32 %v1160, 1.442695
        %v1279 = vpow.pop %v1278
        %v1280 = vmul.f32 %v1161, 1.442695
        %v1281 = vpow.pop %v1280
        %v1282 = vmul.f32 %v1162, 1.442695
        %v1283 = vpow.pop %v1282
        %v1284 = vmul.f32 %v1163, 1.442695
        %v1285 = vpow.pop %v1284
        %v1286 = vmul.f32 %v1164, 1.442695
        %v1287 = vpow.pop %v1286
        %v1288 = vmul.f32 %v1165, 1.442695
        %v1289 = vpow.pop %v1288
        %v1290 = vmul.f32 %v1166, 1.442695
        %v1291 = vpow.pop %v1290
        %v1292 = vmul.f32 %v1167, 1.442695
        %v1293 = vpow.pop %v1292
        %v1294 = vmul.f32 %v1168, 1.442695
        %v1295 = vpow.pop %v1294
        %v1296 = vmul.f32 %v1169, 1.442695
        %v1297 = vpow.pop %v1296
        %v1298 = vmul.f32 %v1170, 1.442695
        %v1299 = vpow.pop %v1298
        %v1300 = vmul.f32 %v1171, 1.442695
        %v1301 = vpow.pop %v1300
        %v1302 = vmul.f32 %v1172, 1.442695
        %v1303 = vpow.pop %v1302
        %v1304 = vmul.f32 %v1173, 1.442695
        %v1305 = vpow.pop %v1304
        %v1306 = vmul.f32 %v1174, 1.442695
        %v1307 = vpow.pop %v1306
        %v1308 = vmul.f32 %v1175, 1.442695
        %v1309 = vpow.pop %v1308
        %v1310 = vmul.f32 %v1176, 1.442695
        %v1311 = vpow.pop %v1310
        %v1312 = vmul.f32 %v1177, 1.442695
        %v1313 = vpow.pop %v1312
        %v1314 = vmul.f32 %v1178, 1.442695
        %v1315 = vpow.pop %v1314
        %v1316 = vmul.f32 %v1179, 1.442695
        %v1317 = vpow.pop %v1316
        %v1318 = vmul.f32 %v1180, 1.442695
        %v1319 = vpow.pop %v1318
        %v1320 = vmul.f32 %v1181, 1.442695
        %v1321 = vpow.pop %v1320
        %v1322 = vmul.f32 %v1182, 1.442695
        %v1323 = vpow.pop %v1322
        %v1324 = vmul.f32 %v1183, 1.442695
        %v1325 = vpow.pop %v1324
        %v1326 = vmul.f32 %v1184, 1.442695
        %v1327 = vpow.pop %v1326
        %v1328 = vmul.f32 %v1185, 1.442695
        %v1329 = vpow.pop %v1328
        %v1330 = vmul.f32 %v1186, 1.442695
        %v1331 = vpow.pop %v1330
        %v1332 = vmul.f32 %v1187, 1.442695
        %v1333 = vpow.pop %v1332
        %v1334 = vmul.f32 %v1188, 1.442695
        %v1335 = vpow.pop %v1334
        %v1336 = vmul.f32 %v1189, 1.442695
        %v1337 = vpow.pop %v1336
        %v1338 = vmul.f32 %v1190, 1.442695
        %v1339 = vpow.pop %v1338
        %v1340 = vmul.f32 %v1191, 1.442695
        %v1341 = vpow.pop %v1340
        %v1342 = vmul.f32 %v1192, 1.442695
        %v1343 = vpow.pop %v1342
        %v1344 = vmul.f32 %v1193, 1.442695
        %v1345 = vpow.pop %v1344
        %v1346 = vmul.f32 %v1194, 1.442695
        %v1347 = vpow.pop %v1346
        %v1348 = vmul.f32 %v1195, 1.442695
        %v1349 = vpow.pop %v1348
        %v1350 = vmul.f32 %v1196, 1.442695
        %v1351 = vpow.pop %v1350
        %v1352 = vmul.f32 %v1197, 1.442695
        %v1353 = vpow.pop %v1352
        %v1354 = vmul.f32 %v1198, 1.442695
        %v1355 = vpow.pop %v1354
        %v1356 = vmul.f32 %v1199, 1.442695
        %v1357 = vpow.pop %v1356
        %v1358 = vmul.f32 %v1200, 1.442695
        %v1359 = vpow.pop %v1358
        %v1360 = vmul.f32 %v1201, 1.442695
        %v1361 = vpow.pop %v1360
        %v1362 = vadd.f32 %v1203, 1.0
        %v1363 = vadd.f32 %v1205, 1.0
        %v1364 = vadd.f32 %v1207, 1.0
        %v1365 = vadd.f32 %v1209, 1.0
        %v1366 = vadd.f32 %v1211, 1.0
        %v1367 = vadd.f32 %v1213, 1.0
        %v1368 = vadd.f32 %v1215, 1.0
        %v1369 = vadd.f32 %v1217, 1.0
        %v1370 = vadd.f32 %v1219, 1.0
        %v1371 = vadd.f32 %v1221, 1.0
        %v1372 = vadd.f32 %v1223, 1.0
        %v1373 = vadd.f32 %v1225, 1.0
        %v1374 = vadd.f32 %v1227, 1.0
        %v1375 = vadd.f32 %v1229, 1.0
        %v1376 = vadd.f32 %v1231, 1.0
        %v1377 = vadd.f32 %v1233, 1.0
        %v1378 = vadd.f32 %v1235, 1.0
        %v1379 = vadd.f32 %v1237, 1.0
        %v1380 = vadd.f32 %v1239, 1.0
        %v1381 = vadd.f32 %v1241, 1.0
        %v1382 = vadd.f32 %v1243, 1.0
        %v1383 = vadd.f32 %v1245, 1.0
        %v1384 = vadd.f32 %v1247, 1.0
        %v1385 = vadd.f32 %v1249, 1.0
        %v1386 = vadd.f32 %v1251, 1.0
        %v1387 = vadd.f32 %v1253, 1.0
        %v1388 = vadd.f32 %v1255, 1.0
        %v1389 = vadd.f32 %v1257, 1.0
        %v1390 = vadd.f32 %v1259, 1.0
        %v1391 = vadd.f32 %v1261, 1.0
        %v1392 = vadd.f32 %v1263, 1.0
        %v1393 = vadd.f32 %v1265, 1.0
        %v1394 = vadd.f32 %v1267, 1.0
        %v1395 = vadd.f32 %v1269, 1.0
        %v1396 = vadd.f32 %v1271, 1.0
        %v1397 = vadd.f32 %v1273, 1.0
        %v1398 = vadd.f32 %v1275, 1.0
        %v1399 = vadd.f32 %v1277, 1.0
        %v1400 = vadd.f32 %v1279, 1.0
        %v1401 = vadd.f32 %v1281, 1.0
        %v1402 = vadd.f32 %v1283, 1.0
        %v1403 = vadd.f32 %v1285, 1.0
        %v1404 = vadd.f32 %v1287, 1.0
        %v1405 = vadd.f32 %v1289, 1.0
        %v1406 = vadd.f32 %v1291, 1.0
        %v1407 = vadd.f32 %v1293, 1.0
        %v1408 = vadd.f32 %v1295, 1.0
        %v1409 = vadd.f32 %v1297, 1.0
        %v1410 = vadd.f32 %v1299, 1.0
        %v1411 = vadd.f32 %v1301, 1.0
        %v1412 = vadd.f32 %v1303, 1.0
        %v1413 = vadd.f32 %v1305, 1.0
        %v1414 = vadd.f32 %v1307, 1.0
        %v1415 = vadd.f32 %v1309, 1.0
        %v1416 = vadd.f32 %v1311, 1.0
        %v1417 = vadd.f32 %v1313, 1.0
        %v1418 = vadd.f32 %v1315, 1.0
        %v1419 = vadd.f32 %v1317, 1.0
        %v1420 = vadd.f32 %v1319, 1.0
        %v1421 = vadd.f32 %v1321, 1.0
        %v1422 = vadd.f32 %v1323, 1.0
        %v1423 = vadd.f32 %v1325, 1.0
        %v1424 = vadd.f32 %v1327, 1.0
        %v1425 = vadd.f32 %v1329, 1.0
        %v1426 = vadd.f32 %v1331, 1.0
        %v1427 = vadd.f32 %v1333, 1.0
        %v1428 = vadd.f32 %v1335, 1.0
        %v1429 = vadd.f32 %v1337, 1.0
        %v1430 = vadd.f32 %v1339, 1.0
        %v1431 = vadd.f32 %v1341, 1.0
        %v1432 = vadd.f32 %v1343, 1.0
        %v1433 = vadd.f32 %v1345, 1.0
        %v1434 = vadd.f32 %v1347, 1.0
        %v1435 = vadd.f32 %v1349, 1.0
        %v1436 = vadd.f32 %v1351, 1.0
        %v1437 = vadd.f32 %v1353, 1.0
        %v1438 = vadd.f32 %v1355, 1.0
        %v1439 = vadd.f32 %v1357, 1.0
        %v1440 = vadd.f32 %v1359, 1.0
        %v1441 = vadd.f32 %v1361, 1.0
        %v1442 = vrcp.pop %v1362
        %v1443 = vmul.f32 1.0, %v1442
        %v1444 = vrcp.pop %v1363
        %v1445 = vmul.f32 1.0, %v1444
        %v1446 = vrcp.pop %v1364
        %v1447 = vmul.f32 1.0, %v1446
        %v1448 = vrcp.pop %v1365
        %v1449 = vmul.f32 1.0, %v1448
        %v1450 = vrcp.pop %v1366
        %v1451 = vmul.f32 1.0, %v1450
        %v1452 = vrcp.pop %v1367
        %v1453 = vmul.f32 1.0, %v1452
        %v1454 = vrcp.pop %v1368
        %v1455 = vmul.f32 1.0, %v1454
        %v1456 = vrcp.pop %v1369
        %v1457 = vmul.f32 1.0, %v1456
        %v1458 = vrcp.pop %v1370
        %v1459 = vmul.f32 1.0, %v1458
        %v1460 = vrcp.pop %v1371
        %v1461 = vmul.f32 1.0, %v1460
        %v1462 = vrcp.pop %v1372
        %v1463 = vmul.f32 1.0, %v1462
        %v1464 = vrcp.pop %v1373
        %v1465 = vmul.f32 1.0, %v1464
        %v1466 = vrcp.pop %v1374
        %v1467 = vmul.f32 1.0, %v1466
        %v1468 = vrcp.pop %v1375
        %v1469 = vmul.f32 1.0, %v1468
        %v1470 = vrcp.pop %v1376
        %v1471 = vmul.f32 1.0, %v1470
        %v1472 = vrcp.pop %v1377
        %v1473 = vmul.f32 1.0, %v1472
        %v1474 = vrcp.pop %v1378
        %v1475 = vmul.f32 1.0, %v1474
        %v1476 = vrcp.pop %v1379
        %v1477 = vmul.f32 1.0, %v1476
        %v1478 = vrcp.pop %v1380
        %v1479 = vmul.f32 1.0, %v1478
        %v1480 = vrcp.pop %v1381
        %v1481 = vmul.f32 1.0, %v1480
        %v1482 = vrcp.pop %v1382
        %v1483 = vmul.f32 1.0, %v1482
        %v1484 = vrcp.pop %v1383
        %v1485 = vmul.f32 1.0, %v1484
        %v1486 = vrcp.pop %v1384
        %v1487 = vmul.f32 1.0, %v1486
        %v1488 = vrcp.pop %v1385
        %v1489 = vmul.f32 1.0, %v1488
        %v1490 = vrcp.pop %v1386
        %v1491 = vmul.f32 1.0, %v1490
        %v1492 = vrcp.pop %v1387
        %v1493 = vmul.f32 1.0, %v1492
        %v1494 = vrcp.pop %v1388
        %v1495 = vmul.f32 1.0, %v1494
        %v1496 = vrcp.pop %v1389
        %v1497 = vmul.f32 1.0, %v1496
        %v1498 = vrcp.pop %v1390
        %v1499 = vmul.f32 1.0, %v1498
        %v1500 = vrcp.pop %v1391
        %v1501 = vmul.f32 1.0, %v1500
        %v1502 = vrcp.pop %v1392
        %v1503 = vmul.f32 1.0, %v1502
        %v1504 = vrcp.pop %v1393
        %v1505 = vmul.f32 1.0, %v1504
        %v1506 = vrcp.pop %v1394
        %v1507 = vmul.f32 1.0, %v1506
        %v1508 = vrcp.pop %v1395
        %v1509 = vmul.f32 1.0, %v1508
        %v1510 = vrcp.pop %v1396
        %v1511 = vmul.f32 1.0, %v1510
        %v1512 = vrcp.pop %v1397
        %v1513 = vmul.f32 1.0, %v1512
        %v1514 = vrcp.pop %v1398
        %v1515 = vmul.f32 1.0, %v1514
        %v1516 = vrcp.pop %v1399
        %v1517 = vmul.f32 1.0, %v1516
        %v1518 = vrcp.pop %v1400
        %v1519 = vmul.f32 1.0, %v1518
        %v1520 = vrcp.pop %v1401
        %v1521 = vmul.f32 1.0, %v1520
        %v1522 = vrcp.pop %v1402
        %v1523 = vmul.f32 1.0, %v1522
        %v1524 = vrcp.pop %v1403
        %v1525 = vmul.f32 1.0, %v1524
        %v1526 = vrcp.pop %v1404
        %v1527 = vmul.f32 1.0, %v1526
        %v1528 = vrcp.pop %v1405
        %v1529 = vmul.f32 1.0, %v1528
        %v1530 = vrcp.pop %v1406
        %v1531 = vmul.f32 1.0, %v1530
        %v1532 = vrcp.pop %v1407
        %v1533 = vmul.f32 1.0, %v1532
        %v1534 = vrcp.pop %v1408
        %v1535 = vmul.f32 1.0, %v1534
        %v1536 = vrcp.pop %v1409
        %v1537 = vmul.f32 1.0, %v1536
        %v1538 = vrcp.pop %v1410
        %v1539 = vmul.f32 1.0, %v1538
        %v1540 = vrcp.pop %v1411
        %v1541 = vmul.f32 1.0, %v1540
        %v1542 = vrcp.pop %v1412
        %v1543 = vmul.f32 1.0, %v1542
        %v1544 = vrcp.pop %v1413
        %v1545 = vmul.f32 1.0, %v1544
        %v1546 = vrcp.pop %v1414
        %v1547 = vmul.f32 1.0, %v1546
        %v1548 = vrcp.pop %v1415
        %v1549 = vmul.f32 1.0, %v1548
        %v1550 = vrcp.pop %v1416
        %v1551 = vmul.f32 1.0, %v1550
        %v1552 = vrcp.pop %v1417
        %v1553 = vmul.f32 1.0, %v1552
        %v1554 = vrcp.pop %v1418
        %v1555 = vmul.f32 1.0, %v1554
        %v1556 = vrcp.pop %v1419
        %v1557 = vmul.f32 1.0, %v1556
        %v1558 = vrcp.pop %v1420
        %v1559 = vmul.f32 1.0, %v1558
        %v1560 = vrcp.pop %v1421
        %v1561 = vmul.f32 1.0, %v1560
        %v1562 = vrcp.pop %v1422
        %v1563 = vmul.f32 1.0, %v1562
        %v1564 = vrcp.pop %v1423
        %v1565 = vmul.f32 1.0, %v1564
        %v1566 = vrcp.pop %v1424
        %v1567 = vmul.f32 1.0, %v1566
        %v1568 = vrcp.pop %v1425
        %v1569 = vmul.f32 1.0, %v1568
        %v1570 = vrcp.pop %v1426
        %v1571 = vmul.f32 1.0, %v1570
        %v1572 = vrcp.pop %v1427
        %v1573 = vmul.f32 1.0, %v1572
        %v1574 = vrcp.pop %v1428
        %v1575 = vmul.f32 1.0, %v1574
        %v1576 = vrcp.pop %v1429
        %v1577 = vmul.f32 1.0, %v1576
        %v1578 = vrcp.pop %v1430
        %v1579 = vmul.f32 1.0, %v1578
        %v1580 = vrcp.pop %v1431
        %v1581 = vmul.f32 1.0, %v1580
        %v1582 = vrcp.pop %v1432
        %v1583 = vmul.f32 1.0, %v1582
        %v1584 = vrcp.pop %v1433
        %v1585 = vmul.f32 1.0, %v1584
        %v1586 = vrcp.pop %v1434
        %v1587 = vmul.f32 1.0, %v1586
        %v1588 = vrcp.pop %v1435
        %v1589 = vmul.f32 1.0, %v1588
        %v1590 = vrcp.pop %v1436
        %v1591 = vmul.f32 1.0, %v1590
        %v1592 = vrcp.pop %v1437
        %v1593 = vmul.f32 1.0, %v1592
        %v1594 = vrcp.pop %v1438
        %v1595 = vmul.f32 1.0, %v1594
        %v1596 = vrcp.pop %v1439
        %v1597 = vmul.f32 1.0, %v1596
        %v1598 = vrcp.pop %v1440
        %v1599 = vmul.f32 1.0, %v1598
        %v1600 = vrcp.pop %v1441
        %v1601 = vmul.f32 1.0, %v1600
        %v1602 = vmul.f32 %v792, %v1443
        %v1603 = vmul.f32 %v794, %v1445
        %v1604 = vmul.f32 %v865, %v1447
        %v1605 = vmul.f32 %v867, %v1449
        %v1606 = vmul.f32 %v938, %v1451
        %v1607 = vmul.f32 %v940, %v1453
        %v1608 = vmul.f32 %v1011, %v1455
        %v1609 = vmul.f32 %v1013, %v1457
        %v1610 = vmul.f32 %v1084, %v1459
        %v1611 = vmul.f32 %v1086, %v1461
        %v1612 = vmul.f32 %v796, %v1463
        %v1613 = vmul.f32 %v798, %v1465
        %v1614 = vmul.f32 %v869, %v1467
        %v1615 = vmul.f32 %v871, %v1469
        %v1616 = vmul.f32 %v942, %v1471
        %v1617 = vmul.f32 %v944, %v1473
        %v1618 = vmul.f32 %v1015, %v1475
        %v1619 = vmul.f32 %v1017, %v1477
        %v1620 = vmul.f32 %v1088, %v1479
        %v1621 = vmul.f32 %v1090, %v1481
        %v1622 = vmul.f32 %v802, %v1483
        %v1623 = vmul.f32 %v804, %v1485
        %v1624 = vmul.f32 %v875, %v1487
        %v1625 = vmul.f32 %v877, %v1489
        %v1626 = vmul.f32 %v948, %v1491
        %v1627 = vmul.f32 %v950, %v1493
        %v1628 = vmul.f32 %v1021, %v1495
        %v1629 = vmul.f32 %v1023, %v1497
        %v1630 = vmul.f32 %v1094, %v1499
        %v1631 = vmul.f32 %v1096, %v1501
        %v1632 = vmul.f32 %v806, %v1503
        %v1633 = vmul.f32 %v808, %v1505
        %v1634 = vmul.f32 %v879, %v1507
        %v1635 = vmul.f32 %v881, %v1509
        %v1636 = vmul.f32 %v952, %v1511
        %v1637 = vmul.f32 %v954, %v1513
        %v1638 = vmul.f32 %v1025, %v1515
        %v1639 = vmul.f32 %v1027, %v1517
        %v1640 = vmul.f32 %v1098, %v1519
        %v1641 = vmul.f32 %v1100, %v1521
        %v1642 = vmul.f32 %v812, %v1523
        %v1643 = vmul.f32 %v814, %v1525
        %v1644 = vmul.f32 %v885, %v1527
        %v1645 = vmul.f32 %v887, %v1529
        %v1646 = vmul.f32 %v958, %v1531
        %v1647 = vmul.f32 %v960, %v1533
        %v1648 = vmul.f32 %v1031, %v1535
        %v1649 = vmul.f32 %v1033, %v1537
        %v1650 = vmul.f32 %v1104, %v1539
        %v1651 = vmul.f32 %v1106, %v1541
        %v1652 = vmul.f32 %v816, %v1543
        %v1653 = vmul.f32 %v818, %v1545
        %v1654 = vmul.f32 %v889, %v1547
        %v1655 = vmul.f32 %v891, %v1549
        %v1656 = vmul.f32 %v962, %v1551
        %v1657 = vmul.f32 %v964, %v1553
        %v1658 = vmul.f32 %v1035, %v1555
        %v1659 = vmul.f32 %v1037, %v1557
        %v1660 = vmul.f32 %v1108, %v1559
        %v1661 = vmul.f32 %v1110, %v1561
        %v1662 = vmul.f32 %v822, %v1563
        %v1663 = vmul.f32 %v824, %v1565
        %v1664 = vmul.f32 %v895, %v1567
        %v1665 = vmul.f32 %v897, %v1569
        %v1666 = vmul.f32 %v968, %v1571
        %v1667 = vmul.f32 %v970, %v1573
        %v1668 = vmul.f32 %v1041, %v1575
        %v1669 = vmul.f32 %v1043, %v1577
        %v1670 = vmul.f32 %v1114, %v1579
        %v1671 = vmul.f32 %v1116, %v1581
        %v1672 = vmul.f32 %v826, %v1583
        %v1673 = vmul.f32 %v828, %v1585
        %v1674 = vmul.f32 %v899, %v1587
        %v1675 = vmul.f32 %v901, %v1589
        %v1676 = vmul.f32 %v972, %v1591
        %v1677 = vmul.f32 %v974, %v1593
        %v1678 = vmul.f32 %v1045, %v1595
        %v1679 = vmul.f32 %v1047, %v1597
        %v1680 = vmul.f32 %v1118, %v1599
        %v1681 = vmul.f32 %v1120, %v1601
        %v1682 = vld [vmem:[#allocation2] sm:$0xff]
        %v1683 = vld [vmem:[#allocation2 + $0x8] sm:$0xff]
        %v1684 = vld [vmem:[#allocation2 + $0x10] sm:$0xff]
        %v1685 = vld [vmem:[#allocation2 + $0x18] sm:$0xff]
        %v1686 = vld [vmem:[#allocation2 + $0x20] sm:$0xff]
        %v1687 = vld [vmem:[#allocation2 + $0x28] sm:$0xff]
        %v1688 = vld [vmem:[#allocation2 + $0x30] sm:$0xff]
        %v1689 = vld [vmem:[#allocation2 + $0x38] sm:$0xff]
        %v1690 = vld [vmem:[#allocation2 + $0x40] sm:$0xff]
        %v1691 = vld [vmem:[#allocation2 + $0x48] sm:$0xff]
        %v1692 = vadd.f32 %v1602, %v1612
        %v1693 = vadd.f32 %v1692, %v1622
        %v1694 = vadd.f32 %v1693, %v1632
        %v1695 = vadd.f32 %v1694, %v1642
        %v1696 = vadd.f32 %v1695, %v1652
        %v1697 = vadd.f32 %v1696, %v1662
        %v1698 = vadd.f32 %v1697, %v1672
        %v1699 = vadd.f32 %v1603, %v1613
        %v1700 = vadd.f32 %v1699, %v1623
        %v1701 = vadd.f32 %v1700, %v1633
        %v1702 = vadd.f32 %v1701, %v1643
        %v1703 = vadd.f32 %v1702, %v1653
        %v1704 = vadd.f32 %v1703, %v1663
        %v1705 = vadd.f32 %v1704, %v1673
        %v1706 = vadd.f32 %v1604, %v1614
        %v1707 = vadd.f32 %v1706, %v1624
        %v1708 = vadd.f32 %v1707, %v1634
        %v1709 = vadd.f32 %v1708, %v1644
        %v1710 = vadd.f32 %v1709, %v1654
        %v1711 = vadd.f32 %v1710, %v1664
        %v1712 = vadd.f32 %v1711, %v1674
        %v1713 = vadd.f32 %v1605, %v1615
        %v1714 = vadd.f32 %v1713, %v1625
        %v1715 = vadd.f32 %v1714, %v1635
        %v1716 = vadd.f32 %v1715, %v1645
        %v1717 = vadd.f32 %v1716, %v1655
        %v1718 = vadd.f32 %v1717, %v1665
        %v1719 = vadd.f32 %v1718, %v1675
        %v1720 = vadd.f32 %v1606, %v1616
        %v1721 = vadd.f32 %v1720, %v1626
        %v1722 = vadd.f32 %v1721, %v1636
        %v1723 = vadd.f32 %v1722, %v1646
        %v1724 = vadd.f32 %v1723, %v1656
        %v1725 = vadd.f32 %v1724, %v1666
        %v1726 = vadd.f32 %v1725, %v1676
        %v1727 = vadd.f32 %v1607, %v1617
        %v1728 = vadd.f32 %v1727, %v1627
        %v1729 = vadd.f32 %v1728, %v1637
        %v1730 = vadd.f32 %v1729, %v1647
        %v1731 = vadd.f32 %v1730, %v1657
        %v1732 = vadd.f32 %v1731, %v1667
        %v1733 = vadd.f32 %v1732, %v1677
        %v1734 = vadd.f32 %v1608, %v1618
        %v1735 = vadd.f32 %v1734, %v1628
        %v1736 = vadd.f32 %v1735, %v1638
        %v1737 = vadd.f32 %v1736, %v1648
        %v1738 = vadd.f32 %v1737, %v1658
        %v1739 = vadd.f32 %v1738, %v1668
        %v1740 = vadd.f32 %v1739, %v1678
        %v1741 = vadd.f32 %v1609, %v1619
        %v1742 = vadd.f32 %v1741, %v1629
        %v1743 = vadd.f32 %v1742, %v1639
        %v1744 = vadd.f32 %v1743, %v1649
        %v1745 = vadd.f32 %v1744, %v1659
        %v1746 = vadd.f32 %v1745, %v1669
        %v1747 = vadd.f32 %v1746, %v1679
        %v1748 = vadd.f32 %v1610, %v1620
        %v1749 = vadd.f32 %v1748, %v1630
        %v1750 = vadd.f32 %v1749, %v1640
        %v1751 = vadd.f32 %v1750, %v1650
        %v1752 = vadd.f32 %v1751, %v1660
        %v1753 = vadd.f32 %v1752, %v1670
        %v1754 = vadd.f32 %v1753, %v1680
        %v1755 = vadd.f32 %v1611, %v1621
        %v1756 = vadd.f32 %v1755, %v1631
        %v1757 = vadd.f32 %v1756, %v1641
        %v1758 = vadd.f32 %v1757, %v1651
        %v1759 = vadd.f32 %v1758, %v1661
        %v1760 = vadd.f32 %v1759, %v1671
        %v1761 = vadd.f32 %v1760, %v1681
        %v1762 = vadd.f32 %v1682, %v1698
        %v1763 = vadd.f32 %v1683, %v1705
        %v1764 = vadd.f32 %v1684, %v1712
        %v1765 = vadd.f32 %v1685, %v1719
        %v1766 = vadd.f32 %v1686, %v1726
        %v1767 = vadd.f32 %v1687, %v1733
        %v1768 = vadd.f32 %v1688, %v1740
        %v1769 = vadd.f32 %v1689, %v1747
        %v1770 = vadd.f32 %v1690, %v1754
        %v1771 = vadd.f32 %v1691, %v1761
        %1772 = vst [vmem:[#allocation2] sm:$0xff] %v1762
        %1773 = vst [vmem:[#allocation2 + $0x8] sm:$0xff] %v1763
        %1774 = vst [vmem:[#allocation2 + $0x10] sm:$0xff] %v1764
        %1775 = vst [vmem:[#allocation2 + $0x18] sm:$0xff] %v1765
        %1776 = vst [vmem:[#allocation2 + $0x20] sm:$0xff] %v1766
        %1777 = vst [vmem:[#allocation2 + $0x28] sm:$0xff] %v1767
        %1778 = vst [vmem:[#allocation2 + $0x30] sm:$0xff] %v1768
        %1779 = vst [vmem:[#allocation2 + $0x38] sm:$0xff] %v1769
        %1780 = vst [vmem:[#allocation2 + $0x40] sm:$0xff] %v1770
        %1781 = vst [vmem:[#allocation2 + $0x48] sm:$0xff] %v1771
        // Predicated region
        $region68: #{text_model_forward.2} parent=58 // pred_check
          %p1782 = pneg %p368
        $region69: #{text_model_forward.2} parent=58 // pred_check_branch
          %1784 = sbr.rel (%p1782) target = $region71
        $region70: #{text_model_forward.2} parent=58 // pred_region
          %v1785 = vld [vmem:[#allocation2] sm:$0xff]
          %v1786 = vld [vmem:[#allocation2 + $0x8] sm:$0xff]
          %v1787 = vld [vmem:[#allocation2 + $0x10] sm:$0xff]
          %v1788 = vld [vmem:[#allocation2 + $0x18] sm:$0xff]
          %v1789 = vld [vmem:[#allocation2 + $0x20] sm:$0xff]
          %v1790 = vld [vmem:[#allocation2 + $0x28] sm:$0xff]
          %v1791 = vld [vmem:[#allocation2 + $0x30] sm:$0xff]
          %v1792 = vld [vmem:[#allocation2 + $0x38] sm:$0xff]
          %v1793 = vld [vmem:[#allocation2 + $0x40] sm:$0xff]
          %v1794 = vld [vmem:[#allocation2 + $0x48] sm:$0xff]
          %v1795 = vrot.slane %v1785, 4
          %v1796 = vadd.f32 %v1785, %v1795
          %v1797 = vrot.slane %v1796, 2
          %v1798 = vadd.f32 %v1796, %v1797
          %v1799 = vrot.slane %v1798, 1
          %v1800 = vadd.f32 %v1798, %v1799
          %v1801 = vrot.slane %v1786, 4
          %v1802 = vadd.f32 %v1786, %v1801
          %v1803 = vrot.slane %v1802, 2
          %v1804 = vadd.f32 %v1802, %v1803
          %v1805 = vrot.slane %v1804, 1
          %v1806 = vadd.f32 %v1804, %v1805
          %v1807 = vrot.slane %v1787, 4
          %v1808 = vadd.f32 %v1787, %v1807
          %v1809 = vrot.slane %v1808, 2
          %v1810 = vadd.f32 %v1808, %v1809
          %v1811 = vrot.slane %v1810, 1
          %v1812 = vadd.f32 %v1810, %v1811
          %v1813 = vrot.slane %v1788, 4
          %v1814 = vadd.f32 %v1788, %v1813
          %v1815 = vrot.slane %v1814, 2
          %v1816 = vadd.f32 %v1814, %v1815
          %v1817 = vrot.slane %v1816, 1
          %v1818 = vadd.f32 %v1816, %v1817
          %v1819 = vrot.slane %v1789, 4
          %v1820 = vadd.f32 %v1789, %v1819
          %v1821 = vrot.slane %v1820, 2
          %v1822 = vadd.f32 %v1820, %v1821
          %v1823 = vrot.slane %v1822, 1
          %v1824 = vadd.f32 %v1822, %v1823
          %v1825 = vrot.slane %v1790, 4
          %v1826 = vadd.f32 %v1790, %v1825
          %v1827 = vrot.slane %v1826, 2
          %v1828 = vadd.f32 %v1826, %v1827
          %v1829 = vrot.slane %v1828, 1
          %v1830 = vadd.f32 %v1828, %v1829
          %v1831 = vrot.slane %v1791, 4
          %v1832 = vadd.f32 %v1791, %v1831
          %v1833 = vrot.slane %v1832, 2
          %v1834 = vadd.f32 %v1832, %v1833
          %v1835 = vrot.slane %v1834, 1
          %v1836 = vadd.f32 %v1834, %v1835
          %v1837 = vrot.slane %v1792, 4
          %v1838 = vadd.f32 %v1792, %v1837
          %v1839 = vrot.slane %v1838, 2
          %v1840 = vadd.f32 %v1838, %v1839
          %v1841 = vrot.slane %v1840, 1
          %v1842 = vadd.f32 %v1840, %v1841
          %v1843 = vrot.slane %v1793, 4
          %v1844 = vadd.f32 %v1793, %v1843
          %v1845 = vrot.slane %v1844, 2
          %v1846 = vadd.f32 %v1844, %v1845
          %v1847 = vrot.slane %v1846, 1
          %v1848 = vadd.f32 %v1846, %v1847
          %v1849 = vrot.slane %v1794, 4
          %v1850 = vadd.f32 %v1794, %v1849
          %v1851 = vrot.slane %v1850, 2
          %v1852 = vadd.f32 %v1850, %v1851
          %v1853 = vrot.slane %v1852, 1
          %v1854 = vadd.f32 %v1852, %v1853
          %v1855 = vmul.f32 %v1800, 0.015625
          %v1856 = vmul.f32 %v1806, 0.015625
          %v1857 = vmul.f32 %v1812, 0.015625
          %v1858 = vmul.f32 %v1818, 0.015625
          %v1859 = vmul.f32 %v1824, 0.015625
          %v1860 = vmul.f32 %v1830, 0.015625
          %v1861 = vmul.f32 %v1836, 0.015625
          %v1862 = vmul.f32 %v1842, 0.015625
          %v1863 = vmul.f32 %v1848, 0.015625
          %v1864 = vmul.f32 %v1854, 0.015625
          %v1875 = vcombine.low %v1855, %v1856
          %v1876 = vcombine.low %v1857, %v1858
          %v1877 = vcombine.low %v1859, %v1860
          %v1878 = vcombine.low %v1861, %v1862
          %v1880 = vunpack.c.l.s4 1966171168
          %v1881 = vunpack.c.0.s8 %v1880
          %v1882 = vlaneseq
          %v1883 = vshrl.u32 %v1882, 7
          %v1884 = vsub.s32 %v1881, %v1883
          %v1885 = vrot.slane %v1875, %v1884
          %v1887 = vunpack.c.l.s4 1966171168
          %v1888 = vunpack.c.0.s8 %v1887
          %v1889 = vlaneseq
          %v1890 = vshrl.u32 %v1889, 7
          %v1891 = vsub.s32 %v1888, %v1890
          %v1892 = vrot.slane %v1876, %v1891
          %v1894 = vunpack.c.l.s4 1966171168
          %v1895 = vunpack.c.0.s8 %v1894
          %v1896 = vlaneseq
          %v1897 = vshrl.u32 %v1896, 7
          %v1898 = vsub.s32 %v1895, %v1897
          %v1899 = vrot.slane %v1877, %v1898
          %v1901 = vunpack.c.l.s4 1966171168
          %v1902 = vunpack.c.0.s8 %v1901
          %v1903 = vlaneseq
          %v1904 = vshrl.u32 %v1903, 7
          %v1905 = vsub.s32 %v1902, %v1904
          %v1906 = vrot.slane %v1878, %v1905
          %v1907 = vcombine.low %v1885, %v1892
          %v1908 = vcombine.low %v1899, %v1906
          %v1910 = vunpack.c.l.s4 1966171168
          %v1911 = vunpack.c.0.s8 %v1910
          %v1912 = vlaneseq
          %v1913 = vshrl.u32 %v1912, 7
          %v1914 = vsub.s32 %v1911, %v1913
          %v1915 = vrot.slane %v1907, %v1914
          %v1917 = vunpack.c.l.s4 1966171168
          %v1918 = vunpack.c.0.s8 %v1917
          %v1919 = vlaneseq
          %v1920 = vshrl.u32 %v1919, 7
          %v1921 = vsub.s32 %v1918, %v1920
          %v1922 = vrot.slane %v1908, %v1921
          %v1923 = vcombine.low %v1915, %v1922
          %v1924 = vcombine.low %v1863, %v1864
          %v1926 = vunpack.c.l.s4 1966171168
          %v1927 = vunpack.c.0.s8 %v1926
          %v1928 = vlaneseq
          %v1929 = vshrl.u32 %v1928, 7
          %v1930 = vsub.s32 %v1927, %v1929
          %v1931 = vrot.slane %v1924, %v1930
          %v1933 = vunpack.c.l.s4 1966171168
          %v1934 = vunpack.c.0.s8 %v1933
          %v1935 = vlaneseq
          %v1936 = vshrl.u32 %v1935, 7
          %v1937 = vsub.s32 %v1934, %v1936
          %v1938 = vrot.slane %v1931, %v1937
          %1941 = vst [vmem:[%s365] sm:$0xff] %v1923
          %v1942 = vlaneseq
          %vm1943 = vcmp.ge.s32.totalorder %v1942, 0
          %vm1944 = vcmp.lt.s32.totalorder %v1942, 256
          %vm1945 = vmand %vm1943, %vm1944
          %1946 = vst.msk [vmem:[%s365 + $0x8] sm:$0x3] %vm1945, %v1938
        $region71: #{text_model_forward.2} parent=58 // pred_fallthru
          _
        %s1947 = smul.u32 10, %s22
        %p1948 = scmp.lt.s32.totalorder %s21, 1
        %s1949 = scalar_select %p1948, %s21, 1
        %p1950 = scmp.lt.s32.totalorder %s1947, 19
        %s1951 = scalar_select %p1950, %s1947, 19
        %s1952 = smul.addr %s1949, 20
        %s1953 = sadd.s32 %s1951, %s1952
        %s1954 = scalar_lea.vmem %s5, %s1953
        // Predicated region
        $region72: #{text_model_forward.2} parent=58 // pred_check
          %p1955 = pneg %p177
        $region73: #{text_model_forward.2} parent=58 // pred_check_branch
          %1957 = sbr.rel (%p1955) target = $region75
        $region74: #{text_model_forward.2} parent=58 // pred_region
          %s1958 = smul.u32 10, %s22
        $region75: #{text_model_forward.2} parent=58 // pred_fallthru
          _
      $region59: #{text_model_forward.2} parent=5 // pred_fallthru
        _
      %p1959 = scmp.le.s32.totalorder 2, %s11
      // Predicated region
      $region76: #{text_model_forward.2} parent=5 // pred_check
        %p1960 = pneg %p1959
      $region77: #{text_model_forward.2} parent=5 // pred_check_branch
        %1962 = sbr.rel (%p1960) target = $region79
      $region78: #{text_model_forward.2} parent=5 // pred_region
        %s1963 = ssub.s32 %s11, 2
        // Predicated region
        $region80: #{text_model_forward.2} parent=78 // pred_check
          %p1964 = pneg %p183
        $region81: #{text_model_forward.2} parent=78 // pred_check_branch
          %1966 = sbr.rel (%p1964) target = $region83
        $region82: #{text_model_forward.2} parent=78 // pred_region
          %s1967 = smul.u32 10, %s25
          %p1968 = scmp.lt.s32.totalorder %s24, 1
          %s1969 = scalar_select %p1968, %s24, 1
          %p1970 = scmp.lt.s32.totalorder %s1967, 19
          %s1971 = scalar_select %p1970, %s1967, 19
          %s1972 = smul.addr %s1969, 20
          %s1973 = sadd.s32 %s1971, %s1972
          %s1974 = scalar_lea.vmem %s5, %s1973
        $region83: #{text_model_forward.2} parent=78 // pred_fallthru
          _
      $region79: #{text_model_forward.2} parent=5 // pred_fallthru
        _
    $region6: #{text_model_forward.2} parent=1 // loop_footer
      %s15 = sadd.s32 1, %s11
    $region7: #{text_model_forward.2} parent=1 // loop_footer_branch
      %10 = sbr.rel target = $region3
    $region8: #{text_model_forward.2} parent=1 // loop_exit
      _

// kernel: text_model_forward.3
$region0: #{text_model_forward.3}
  #allocation0 [shape = 'u32[]', space=smem, size = 0x4, offset = 0x4, fixed_abs, tag = 'smem constant byte address 0x4 - core index']
  #allocation1 [shape = 'u32[144,128]{1,0:T(1,128)}', space=vmem, size = 0x12000, scoped, tag = 'internal scratch']
  %s0 = inlined_call_operand.vmem [shape: bf16[8,2560], index: 0, kind: input, shape index: {}]
  %s1 = inlined_call_operand.vmem [shape: bf16[2560,128], index: 1, kind: input, shape index: {}]
  %s2 = inlined_call_operand.vmem [shape: f32[1,128], index: 2, kind: input, shape index: {}]
  %s3 = inlined_call_operand.vmem [shape: f32[8,128], index: 3, kind: output, shape index: {}]
  %s4 = sld [smem:[#allocation0]]
  $region22: #{text_model_forward.3} parent=0
    _
  %s6 = ssub.s32 1, %s4
  %s7 = scalar_select 0, %s6, %s4
  // Predicated region
  $region2: #{text_model_forward.3} parent=0 // pred_check
    _
  $region3: #{text_model_forward.3} parent=0 // pred_check_branch
    %9 = sbr.rel (0) target = $region5
  $region4: #{text_model_forward.3} parent=0 // pred_region
    _
  $region5: #{text_model_forward.3} parent=0 // pred_fallthru
    _
  // Predicated region
  $region6: #{text_model_forward.3} parent=0 // pred_check
    _
  $region7: #{text_model_forward.3} parent=0 // pred_check_branch
    %11 = sbr.rel (0) target = $region9
  $region8: #{text_model_forward.3} parent=0 // pred_region
    _
  $region9: #{text_model_forward.3} parent=0 // pred_fallthru
    _
  // Predicated region
  $region10: #{text_model_forward.3} parent=0 // pred_check
    _
  $region11: #{text_model_forward.3} parent=0 // pred_check_branch
    %13 = sbr.rel (0) target = $region13
  $region12: #{text_model_forward.3} parent=0 // pred_region
    _
  $region13: #{text_model_forward.3} parent=0 // pred_fallthru
    _
  %v15 = vld [vmem:[%s0] sm:$0xff]
  %v16 = vld [vmem:[%s0 + $0x8] sm:$0xff]
  %v17 = vld [vmem:[%s0 + $0x10] sm:$0xff]
  %v18 = vld [vmem:[%s0 + $0x18] sm:$0xff]
  %v19 = vld [vmem:[%s0 + $0x20] sm:$0xff]
  %v20 = vld [vmem:[%s0 + $0x28] sm:$0xff]
  %v21 = vld [vmem:[%s0 + $0x30] sm:$0xff]
  %v22 = vld [vmem:[%s0 + $0x38] sm:$0xff]
  %v23 = vld [vmem:[%s0 + $0x40] sm:$0xff]
  %v24 = vld [vmem:[%s0 + $0x48] sm:$0xff]
  %v25 = vld [vmem:[%s1] sm:$0xf]
  %v26 = vld [vmem:[%s1 + $0x4] sm:$0xf]
  %v27 = vld [vmem:[%s1 + $0x8] sm:$0xf]
  %v28 = vld [vmem:[%s1 + $0xc] sm:$0xf]
  %v29 = vld [vmem:[%s1 + $0x10] sm:$0xf]
  %v30 = vld [vmem:[%s1 + $0x14] sm:$0xf]
  %v31 = vld [vmem:[%s1 + $0x18] sm:$0xf]
  %v32 = vld [vmem:[%s1 + $0x1c] sm:$0xf]
  %v33 = vld [vmem:[%s1 + $0x20] sm:$0xf]
  %v34 = vld [vmem:[%s1 + $0x24] sm:$0xf]
  %v35 = vld [vmem:[%s1 + $0x28] sm:$0xf]
  %v36 = vld [vmem:[%s1 + $0x2c] sm:$0xf]
  %v37 = vld [vmem:[%s1 + $0x30] sm:$0xf]
  %v38 = vld [vmem:[%s1 + $0x34] sm:$0xf]
  %v39 = vld [vmem:[%s1 + $0x38] sm:$0xf]
  %v40 = vld [vmem:[%s1 + $0x3c] sm:$0xf]
  %v41 = vld [vmem:[%s1 + $0x40] sm:$0xf]
  %v42 = vld [vmem:[%s1 + $0x44] sm:$0xf]
  %v43 = vld [vmem:[%s1 + $0x48] sm:$0xf]
  %v44 = vld [vmem:[%s1 + $0x4c] sm:$0xf]
  %v45 = vld [vmem:[%s1 + $0x50] sm:$0xf]
  %v46 = vld [vmem:[%s1 + $0x54] sm:$0xf]
  %v47 = vld [vmem:[%s1 + $0x58] sm:$0xf]
  %v48 = vld [vmem:[%s1 + $0x5c] sm:$0xf]
  %v49 = vld [vmem:[%s1 + $0x60] sm:$0xf]
  %v50 = vld [vmem:[%s1 + $0x64] sm:$0xf]
  %v51 = vld [vmem:[%s1 + $0x68] sm:$0xf]
  %v52 = vld [vmem:[%s1 + $0x6c] sm:$0xf]
  %v53 = vld [vmem:[%s1 + $0x70] sm:$0xf]
  %v54 = vld [vmem:[%s1 + $0x74] sm:$0xf]
  %v55 = vld [vmem:[%s1 + $0x78] sm:$0xf]
  %v56 = vld [vmem:[%s1 + $0x7c] sm:$0xf]
  %v57 = vld [vmem:[%s1 + $0x80] sm:$0xf]
  %v58 = vld [vmem:[%s1 + $0x84] sm:$0xf]
  %v59 = vld [vmem:[%s1 + $0x88] sm:$0xf]
  %v60 = vld [vmem:[%s1 + $0x8c] sm:$0xf]
  %v61 = vld [vmem:[%s1 + $0x90] sm:$0xf]
  %v62 = vld [vmem:[%s1 + $0x94] sm:$0xf]
  %v63 = vld [vmem:[%s1 + $0x98] sm:$0xf]
  %v64 = vld [vmem:[%s1 + $0x9c] sm:$0xf]
  %v65 = vld [vmem:[%s1 + $0xa0] sm:$0xf]
  %v66 = vld [vmem:[%s1 + $0xa4] sm:$0xf]
  %v67 = vld [vmem:[%s1 + $0xa8] sm:$0xf]
  %v68 = vld [vmem:[%s1 + $0xac] sm:$0xf]
  %v69 = vld [vmem:[%s1 + $0xb0] sm:$0xf]
  %v70 = vld [vmem:[%s1 + $0xb4] sm:$0xf]
  %v71 = vld [vmem:[%s1 + $0xb8] sm:$0xf]
  %v72 = vld [vmem:[%s1 + $0xbc] sm:$0xf]
  %v73 = vld [vmem:[%s1 + $0xc0] sm:$0xf]
  %v74 = vld [vmem:[%s1 + $0xc4] sm:$0xf]
  %v75 = vld [vmem:[%s1 + $0xc8] sm:$0xf]
  %v76 = vld [vmem:[%s1 + $0xcc] sm:$0xf]
  %v77 = vld [vmem:[%s1 + $0xd0] sm:$0xf]
  %v78 = vld [vmem:[%s1 + $0xd4] sm:$0xf]
  %v79 = vld [vmem:[%s1 + $0xd8] sm:$0xf]
  %v80 = vld [vmem:[%s1 + $0xdc] sm:$0xf]
  %v81 = vld [vmem:[%s1 + $0xe0] sm:$0xf]
  %v82 = vld [vmem:[%s1 + $0xe4] sm:$0xf]
  %v83 = vld [vmem:[%s1 + $0xe8] sm:$0xf]
  %v84 = vld [vmem:[%s1 + $0xec] sm:$0xf]
  %v85 = vld [vmem:[%s1 + $0xf0] sm:$0xf]
  %v86 = vld [vmem:[%s1 + $0xf4] sm:$0xf]
  %v87 = vld [vmem:[%s1 + $0xf8] sm:$0xf]
  %v88 = vld [vmem:[%s1 + $0xfc] sm:$0xf]
  %v89 = vld [vmem:[%s1 + $0x100] sm:$0xf]
  %v90 = vld [vmem:[%s1 + $0x104] sm:$0xf]
  %v91 = vld [vmem:[%s1 + $0x108] sm:$0xf]
  %v92 = vld [vmem:[%s1 + $0x10c] sm:$0xf]
  %v93 = vld [vmem:[%s1 + $0x110] sm:$0xf]
  %v94 = vld [vmem:[%s1 + $0x114] sm:$0xf]
  %v95 = vld [vmem:[%s1 + $0x118] sm:$0xf]
  %v96 = vld [vmem:[%s1 + $0x11c] sm:$0xf]
  %v97 = vld [vmem:[%s1 + $0x120] sm:$0xf]
  %v98 = vld [vmem:[%s1 + $0x124] sm:$0xf]
  %v99 = vld [vmem:[%s1 + $0x128] sm:$0xf]
  %v100 = vld [vmem:[%s1 + $0x12c] sm:$0xf]
  %v101 = vld [vmem:[%s1 + $0x130] sm:$0xf]
  %v102 = vld [vmem:[%s1 + $0x134] sm:$0xf]
  %v103 = vld [vmem:[%s1 + $0x138] sm:$0xf]
  %v104 = vld [vmem:[%s1 + $0x13c] sm:$0xf]
  %v105 = vld [vmem:[%s1 + $0x140] sm:$0xf]
  %v106 = vld [vmem:[%s1 + $0x144] sm:$0xf]
  %v107 = vld [vmem:[%s1 + $0x148] sm:$0xf]
  %v108 = vld [vmem:[%s1 + $0x14c] sm:$0xf]
  %v109 = vld [vmem:[%s1 + $0x150] sm:$0xf]
  %v110 = vld [vmem:[%s1 + $0x154] sm:$0xf]
  %v111 = vld [vmem:[%s1 + $0x158] sm:$0xf]
  %v112 = vld [vmem:[%s1 + $0x15c] sm:$0xf]
  %v113 = vld [vmem:[%s1 + $0x160] sm:$0xf]
  %v114 = vld [vmem:[%s1 + $0x164] sm:$0xf]
  %v115 = vld [vmem:[%s1 + $0x168] sm:$0xf]
  %v116 = vld [vmem:[%s1 + $0x16c] sm:$0xf]
  %v117 = vld [vmem:[%s1 + $0x170] sm:$0xf]
  %v118 = vld [vmem:[%s1 + $0x174] sm:$0xf]
  %v119 = vld [vmem:[%s1 + $0x178] sm:$0xf]
  %v120 = vld [vmem:[%s1 + $0x17c] sm:$0xf]
  %v121 = vld [vmem:[%s1 + $0x180] sm:$0xf]
  %v122 = vld [vmem:[%s1 + $0x184] sm:$0xf]
  %v123 = vld [vmem:[%s1 + $0x188] sm:$0xf]
  %v124 = vld [vmem:[%s1 + $0x18c] sm:$0xf]
  %v125 = vld [vmem:[%s1 + $0x190] sm:$0xf]
  %v126 = vld [vmem:[%s1 + $0x194] sm:$0xf]
  %v127 = vld [vmem:[%s1 + $0x198] sm:$0xf]
  %v128 = vld [vmem:[%s1 + $0x19c] sm:$0xf]
  %v129 = vld [vmem:[%s1 + $0x1a0] sm:$0xf]
  %v130 = vld [vmem:[%s1 + $0x1a4] sm:$0xf]
  %v131 = vld [vmem:[%s1 + $0x1a8] sm:$0xf]
  %v132 = vld [vmem:[%s1 + $0x1ac] sm:$0xf]
  %v133 = vld [vmem:[%s1 + $0x1b0] sm:$0xf]
  %v134 = vld [vmem:[%s1 + $0x1b4] sm:$0xf]
  %v135 = vld [vmem:[%s1 + $0x1b8] sm:$0xf]
  %v136 = vld [vmem:[%s1 + $0x1bc] sm:$0xf]
  %v137 = vld [vmem:[%s1 + $0x1c0] sm:$0xf]
  %v138 = vld [vmem:[%s1 + $0x1c4] sm:$0xf]
  %v139 = vld [vmem:[%s1 + $0x1c8] sm:$0xf]
  %v140 = vld [vmem:[%s1 + $0x1cc] sm:$0xf]
  %v141 = vld [vmem:[%s1 + $0x1d0] sm:$0xf]
  %v142 = vld [vmem:[%s1 + $0x1d4] sm:$0xf]
  %v143 = vld [vmem:[%s1 + $0x1d8] sm:$0xf]
  %v144 = vld [vmem:[%s1 + $0x1dc] sm:$0xf]
  %v145 = vld [vmem:[%s1 + $0x1e0] sm:$0xf]
  %v146 = vld [vmem:[%s1 + $0x1e4] sm:$0xf]
  %v147 = vld [vmem:[%s1 + $0x1e8] sm:$0xf]
  %v148 = vld [vmem:[%s1 + $0x1ec] sm:$0xf]
  %v149 = vld [vmem:[%s1 + $0x1f0] sm:$0xf]
  %v150 = vld [vmem:[%s1 + $0x1f4] sm:$0xf]
  %v151 = vld [vmem:[%s1 + $0x1f8] sm:$0xf]
  %v152 = vld [vmem:[%s1 + $0x1fc] sm:$0xf]
  %v153 = vld [vmem:[%s1 + $0x200] sm:$0xf]
  %v154 = vld [vmem:[%s1 + $0x204] sm:$0xf]
  %v155 = vld [vmem:[%s1 + $0x208] sm:$0xf]
  %v156 = vld [vmem:[%s1 + $0x20c] sm:$0xf]
  %v157 = vld [vmem:[%s1 + $0x210] sm:$0xf]
  %v158 = vld [vmem:[%s1 + $0x214] sm:$0xf]
  %v159 = vld [vmem:[%s1 + $0x218] sm:$0xf]
  %v160 = vld [vmem:[%s1 + $0x21c] sm:$0xf]
  %v161 = vld [vmem:[%s1 + $0x220] sm:$0xf]
  %v162 = vld [vmem:[%s1 + $0x224] sm:$0xf]
  %v163 = vld [vmem:[%s1 + $0x228] sm:$0xf]
  %v164 = vld [vmem:[%s1 + $0x22c] sm:$0xf]
  %v165 = vld [vmem:[%s1 + $0x230] sm:$0xf]
  %v166 = vld [vmem:[%s1 + $0x234] sm:$0xf]
  %v167 = vld [vmem:[%s1 + $0x238] sm:$0xf]
  %v168 = vld [vmem:[%s1 + $0x23c] sm:$0xf]
  %v169 = vld [vmem:[%s1 + $0x240] sm:$0xf]
  %v170 = vld [vmem:[%s1 + $0x244] sm:$0xf]
  %v171 = vld [vmem:[%s1 + $0x248] sm:$0xf]
  %v172 = vld [vmem:[%s1 + $0x24c] sm:$0xf]
  %v173 = vld [vmem:[%s1 + $0x250] sm:$0xf]
  %v174 = vld [vmem:[%s1 + $0x254] sm:$0xf]
  %v175 = vld [vmem:[%s1 + $0x258] sm:$0xf]
  %v176 = vld [vmem:[%s1 + $0x25c] sm:$0xf]
  %v177 = vld [vmem:[%s1 + $0x260] sm:$0xf]
  %v178 = vld [vmem:[%s1 + $0x264] sm:$0xf]
  %v179 = vld [vmem:[%s1 + $0x268] sm:$0xf]
  %v180 = vld [vmem:[%s1 + $0x26c] sm:$0xf]
  %v181 = vld [vmem:[%s1 + $0x270] sm:$0xf]
  %v182 = vld [vmem:[%s1 + $0x274] sm:$0xf]
  %v183 = vld [vmem:[%s1 + $0x278] sm:$0xf]
  %v184 = vld [vmem:[%s1 + $0x27c] sm:$0xf]
  %v185 = vld [vmem:[%s1 + $0x280] sm:$0xf]
  %v186 = vld [vmem:[%s1 + $0x284] sm:$0xf]
  %v187 = vld [vmem:[%s1 + $0x288] sm:$0xf]
  %v188 = vld [vmem:[%s1 + $0x28c] sm:$0xf]
  %v189 = vld [vmem:[%s1 + $0x290] sm:$0xf]
  %v190 = vld [vmem:[%s1 + $0x294] sm:$0xf]
  %v191 = vld [vmem:[%s1 + $0x298] sm:$0xf]
  %v192 = vld [vmem:[%s1 + $0x29c] sm:$0xf]
  %v193 = vld [vmem:[%s1 + $0x2a0] sm:$0xf]
  %v194 = vld [vmem:[%s1 + $0x2a4] sm:$0xf]
  %v195 = vld [vmem:[%s1 + $0x2a8] sm:$0xf]
  %v196 = vld [vmem:[%s1 + $0x2ac] sm:$0xf]
  %v197 = vld [vmem:[%s1 + $0x2b0] sm:$0xf]
  %v198 = vld [vmem:[%s1 + $0x2b4] sm:$0xf]
  %v199 = vld [vmem:[%s1 + $0x2b8] sm:$0xf]
  %v200 = vld [vmem:[%s1 + $0x2bc] sm:$0xf]
  %v201 = vld [vmem:[%s1 + $0x2c0] sm:$0xf]
  %v202 = vld [vmem:[%s1 + $0x2c4] sm:$0xf]
  %v203 = vld [vmem:[%s1 + $0x2c8] sm:$0xf]
  %v204 = vld [vmem:[%s1 + $0x2cc] sm:$0xf]
  %v205 = vld [vmem:[%s1 + $0x2d0] sm:$0xf]
  %v206 = vld [vmem:[%s1 + $0x2d4] sm:$0xf]
  %v207 = vld [vmem:[%s1 + $0x2d8] sm:$0xf]
  %v208 = vld [vmem:[%s1 + $0x2dc] sm:$0xf]
  %v209 = vld [vmem:[%s1 + $0x2e0] sm:$0xf]
  %v210 = vld [vmem:[%s1 + $0x2e4] sm:$0xf]
  %v211 = vld [vmem:[%s1 + $0x2e8] sm:$0xf]
  %v212 = vld [vmem:[%s1 + $0x2ec] sm:$0xf]
  %v213 = vld [vmem:[%s1 + $0x2f0] sm:$0xf]
  %v214 = vld [vmem:[%s1 + $0x2f4] sm:$0xf]
  %v215 = vld [vmem:[%s1 + $0x2f8] sm:$0xf]
  %v216 = vld [vmem:[%s1 + $0x2fc] sm:$0xf]
  %v217 = vld [vmem:[%s1 + $0x300] sm:$0xf]
  %v218 = vld [vmem:[%s1 + $0x304] sm:$0xf]
  %v219 = vld [vmem:[%s1 + $0x308] sm:$0xf]
  %v220 = vld [vmem:[%s1 + $0x30c] sm:$0xf]
  %v221 = vld [vmem:[%s1 + $0x310] sm:$0xf]
  %v222 = vld [vmem:[%s1 + $0x314] sm:$0xf]
  %v223 = vld [vmem:[%s1 + $0x318] sm:$0xf]
  %v224 = vld [vmem:[%s1 + $0x31c] sm:$0xf]
  %v225 = vld [vmem:[%s1 + $0x320] sm:$0xf]
  %v226 = vld [vmem:[%s1 + $0x324] sm:$0xf]
  %v227 = vld [vmem:[%s1 + $0x328] sm:$0xf]
  %v228 = vld [vmem:[%s1 + $0x32c] sm:$0xf]
  %v229 = vld [vmem:[%s1 + $0x330] sm:$0xf]
  %v230 = vld [vmem:[%s1 + $0x334] sm:$0xf]
  %v231 = vld [vmem:[%s1 + $0x338] sm:$0xf]
  %v232 = vld [vmem:[%s1 + $0x33c] sm:$0xf]
  %v233 = vld [vmem:[%s1 + $0x340] sm:$0xf]
  %v234 = vld [vmem:[%s1 + $0x344] sm:$0xf]
  %v235 = vld [vmem:[%s1 + $0x348] sm:$0xf]
  %v236 = vld [vmem:[%s1 + $0x34c] sm:$0xf]
  %v237 = vld [vmem:[%s1 + $0x350] sm:$0xf]
  %v238 = vld [vmem:[%s1 + $0x354] sm:$0xf]
  %v239 = vld [vmem:[%s1 + $0x358] sm:$0xf]
  %v240 = vld [vmem:[%s1 + $0x35c] sm:$0xf]
  %v241 = vld [vmem:[%s1 + $0x360] sm:$0xf]
  %v242 = vld [vmem:[%s1 + $0x364] sm:$0xf]
  %v243 = vld [vmem:[%s1 + $0x368] sm:$0xf]
  %v244 = vld [vmem:[%s1 + $0x36c] sm:$0xf]
  %v245 = vld [vmem:[%s1 + $0x370] sm:$0xf]
  %v246 = vld [vmem:[%s1 + $0x374] sm:$0xf]
  %v247 = vld [vmem:[%s1 + $0x378] sm:$0xf]
  %v248 = vld [vmem:[%s1 + $0x37c] sm:$0xf]
  %v249 = vld [vmem:[%s1 + $0x380] sm:$0xf]
  %v250 = vld [vmem:[%s1 + $0x384] sm:$0xf]
  %v251 = vld [vmem:[%s1 + $0x388] sm:$0xf]
  %v252 = vld [vmem:[%s1 + $0x38c] sm:$0xf]
  %v253 = vld [vmem:[%s1 + $0x390] sm:$0xf]
  %v254 = vld [vmem:[%s1 + $0x394] sm:$0xf]
  %v255 = vld [vmem:[%s1 + $0x398] sm:$0xf]
  %v256 = vld [vmem:[%s1 + $0x39c] sm:$0xf]
  %v257 = vld [vmem:[%s1 + $0x3a0] sm:$0xf]
  %v258 = vld [vmem:[%s1 + $0x3a4] sm:$0xf]
  %v259 = vld [vmem:[%s1 + $0x3a8] sm:$0xf]
  %v260 = vld [vmem:[%s1 + $0x3ac] sm:$0xf]
  %v261 = vld [vmem:[%s1 + $0x3b0] sm:$0xf]
  %v262 = vld [vmem:[%s1 + $0x3b4] sm:$0xf]
  %v263 = vld [vmem:[%s1 + $0x3b8] sm:$0xf]
  %v264 = vld [vmem:[%s1 + $0x3bc] sm:$0xf]
  %v265 = vld [vmem:[%s1 + $0x3c0] sm:$0xf]
  %v266 = vld [vmem:[%s1 + $0x3c4] sm:$0xf]
  %v267 = vld [vmem:[%s1 + $0x3c8] sm:$0xf]
  %v268 = vld [vmem:[%s1 + $0x3cc] sm:$0xf]
  %v269 = vld [vmem:[%s1 + $0x3d0] sm:$0xf]
  %v270 = vld [vmem:[%s1 + $0x3d4] sm:$0xf]
  %v271 = vld [vmem:[%s1 + $0x3d8] sm:$0xf]
  %v272 = vld [vmem:[%s1 + $0x3dc] sm:$0xf]
  %v273 = vld [vmem:[%s1 + $0x3e0] sm:$0xf]
  %v274 = vld [vmem:[%s1 + $0x3e4] sm:$0xf]
  %v275 = vld [vmem:[%s1 + $0x3e8] sm:$0xf]
  %v276 = vld [vmem:[%s1 + $0x3ec] sm:$0xf]
  %v277 = vld [vmem:[%s1 + $0x3f0] sm:$0xf]
  %v278 = vld [vmem:[%s1 + $0x3f4] sm:$0xf]
  %v279 = vld [vmem:[%s1 + $0x3f8] sm:$0xf]
  %v280 = vld [vmem:[%s1 + $0x3fc] sm:$0xf]
  %v281 = vld [vmem:[%s1 + $0x400] sm:$0xf]
  %v282 = vld [vmem:[%s1 + $0x404] sm:$0xf]
  %v283 = vld [vmem:[%s1 + $0x408] sm:$0xf]
  %v284 = vld [vmem:[%s1 + $0x40c] sm:$0xf]
  %v285 = vld [vmem:[%s1 + $0x410] sm:$0xf]
  %v286 = vld [vmem:[%s1 + $0x414] sm:$0xf]
  %v287 = vld [vmem:[%s1 + $0x418] sm:$0xf]
  %v288 = vld [vmem:[%s1 + $0x41c] sm:$0xf]
  %v289 = vld [vmem:[%s1 + $0x420] sm:$0xf]
  %v290 = vld [vmem:[%s1 + $0x424] sm:$0xf]
  %v291 = vld [vmem:[%s1 + $0x428] sm:$0xf]
  %v292 = vld [vmem:[%s1 + $0x42c] sm:$0xf]
  %v293 = vld [vmem:[%s1 + $0x430] sm:$0xf]
  %v294 = vld [vmem:[%s1 + $0x434] sm:$0xf]
  %v295 = vld [vmem:[%s1 + $0x438] sm:$0xf]
  %v296 = vld [vmem:[%s1 + $0x43c] sm:$0xf]
  %v297 = vld [vmem:[%s1 + $0x440] sm:$0xf]
  %v298 = vld [vmem:[%s1 + $0x444] sm:$0xf]
  %v299 = vld [vmem:[%s1 + $0x448] sm:$0xf]
  %v300 = vld [vmem:[%s1 + $0x44c] sm:$0xf]
  %v301 = vld [vmem:[%s1 + $0x450] sm:$0xf]
  %v302 = vld [vmem:[%s1 + $0x454] sm:$0xf]
  %v303 = vld [vmem:[%s1 + $0x458] sm:$0xf]
  %v304 = vld [vmem:[%s1 + $0x45c] sm:$0xf]
  %v305 = vld [vmem:[%s1 + $0x460] sm:$0xf]
  %v306 = vld [vmem:[%s1 + $0x464] sm:$0xf]
  %v307 = vld [vmem:[%s1 + $0x468] sm:$0xf]
  %v308 = vld [vmem:[%s1 + $0x46c] sm:$0xf]
  %v309 = vld [vmem:[%s1 + $0x470] sm:$0xf]
  %v310 = vld [vmem:[%s1 + $0x474] sm:$0xf]
  %v311 = vld [vmem:[%s1 + $0x478] sm:$0xf]
  %v312 = vld [vmem:[%s1 + $0x47c] sm:$0xf]
  %v313 = vld [vmem:[%s1 + $0x480] sm:$0xf]
  %v314 = vld [vmem:[%s1 + $0x484] sm:$0xf]
  %v315 = vld [vmem:[%s1 + $0x488] sm:$0xf]
  %v316 = vld [vmem:[%s1 + $0x48c] sm:$0xf]
  %v317 = vld [vmem:[%s1 + $0x490] sm:$0xf]
  %v318 = vld [vmem:[%s1 + $0x494] sm:$0xf]
  %v319 = vld [vmem:[%s1 + $0x498] sm:$0xf]
  %v320 = vld [vmem:[%s1 + $0x49c] sm:$0xf]
  %v321 = vld [vmem:[%s1 + $0x4a0] sm:$0xf]
  %v322 = vld [vmem:[%s1 + $0x4a4] sm:$0xf]
  %v323 = vld [vmem:[%s1 + $0x4a8] sm:$0xf]
  %v324 = vld [vmem:[%s1 + $0x4ac] sm:$0xf]
  %v325 = vld [vmem:[%s1 + $0x4b0] sm:$0xf]
  %v326 = vld [vmem:[%s1 + $0x4b4] sm:$0xf]
  %v327 = vld [vmem:[%s1 + $0x4b8] sm:$0xf]
  %v328 = vld [vmem:[%s1 + $0x4bc] sm:$0xf]
  %v329 = vld [vmem:[%s1 + $0x4c0] sm:$0xf]
  %v330 = vld [vmem:[%s1 + $0x4c4] sm:$0xf]
  %v331 = vld [vmem:[%s1 + $0x4c8] sm:$0xf]
  %v332 = vld [vmem:[%s1 + $0x4cc] sm:$0xf]
  %v333 = vld [vmem:[%s1 + $0x4d0] sm:$0xf]
  %v334 = vld [vmem:[%s1 + $0x4d4] sm:$0xf]
  %v335 = vld [vmem:[%s1 + $0x4d8] sm:$0xf]
  %v336 = vld [vmem:[%s1 + $0x4dc] sm:$0xf]
  %v337 = vld [vmem:[%s1 + $0x4e0] sm:$0xf]
  %v338 = vld [vmem:[%s1 + $0x4e4] sm:$0xf]
  %v339 = vld [vmem:[%s1 + $0x4e8] sm:$0xf]
  %v340 = vld [vmem:[%s1 + $0x4ec] sm:$0xf]
  %v341 = vld [vmem:[%s1 + $0x4f0] sm:$0xf]
  %v342 = vld [vmem:[%s1 + $0x4f4] sm:$0xf]
  %v343 = vld [vmem:[%s1 + $0x4f8] sm:$0xf]
  %v344 = vld [vmem:[%s1 + $0x4fc] sm:$0xf]
  %v345 = vld [vmem:[%s2] sm:$0x1]
  %v347 = vlaneseq
  %v348 = vshrl.u32 %v347, 7
  %v349 = vsub.s32 0, %v348
  %v350 = vrot.slane %v345, %v349
  %v362 = vunpack.c.l.b16 %v15
  %v363 = vunpack.c.h.b16 %v15
  %v364 = vunpack.c.l.b16 %v16
  %v365 = vunpack.c.h.b16 %v16
  %v366 = vunpack.c.l.b16 %v17
  %v367 = vunpack.c.h.b16 %v17
  %v368 = vunpack.c.l.b16 %v18
  %v369 = vunpack.c.h.b16 %v18
  %v370 = vunpack.c.l.b16 %v19
  %v371 = vunpack.c.h.b16 %v19
  %v372 = vunpack.c.l.b16 %v20
  %v373 = vunpack.c.h.b16 %v20
  %v374 = vunpack.c.l.b16 %v21
  %v375 = vunpack.c.h.b16 %v21
  %v376 = vunpack.c.l.b16 %v22
  %v377 = vunpack.c.h.b16 %v22
  %v378 = vunpack.c.l.b16 %v23
  %v379 = vunpack.c.h.b16 %v23
  %v380 = vunpack.c.l.b16 %v24
  %v381 = vunpack.c.h.b16 %v24
  %v382 = vpack.c.b16 %v362, %v362
  %v383 = vpack.c.b16 %v363, %v363
  %v384 = vpack.c.b16 %v364, %v364
  %v385 = vpack.c.b16 %v365, %v365
  %v386 = vpack.c.b16 %v366, %v366
  %v387 = vpack.c.b16 %v367, %v367
  %v388 = vpack.c.b16 %v368, %v368
  %v389 = vpack.c.b16 %v369, %v369
  %v390 = vpack.c.b16 %v370, %v370
  %v391 = vpack.c.b16 %v371, %v371
  %v392 = vpack.c.b16 %v372, %v372
  %v393 = vpack.c.b16 %v373, %v373
  %v394 = vpack.c.b16 %v374, %v374
  %v395 = vpack.c.b16 %v375, %v375
  %v396 = vpack.c.b16 %v376, %v376
  %v397 = vpack.c.b16 %v377, %v377
  %v398 = vpack.c.b16 %v378, %v378
  %v399 = vpack.c.b16 %v379, %v379
  %v400 = vpack.c.b16 %v380, %v380
  %v401 = vpack.c.b16 %v381, %v381
  %v742 = vunpack.c.l.b16 %v25
  %v743 = vunpack.c.l.b16 %v26
  %v744 = vunpack.c.l.b16 %v27
  %v745 = vunpack.c.l.b16 %v28
  %v746 = vunpack.c.l.b16 %v29
  %v747 = vunpack.c.l.b16 %v30
  %v748 = vunpack.c.l.b16 %v31
  %v749 = vunpack.c.l.b16 %v32
  %v750 = vunpack.c.l.b16 %v33
  %v751 = vunpack.c.l.b16 %v34
  %v752 = vunpack.c.l.b16 %v35
  %v753 = vunpack.c.l.b16 %v36
  %v754 = vunpack.c.l.b16 %v37
  %v755 = vunpack.c.l.b16 %v38
  %v756 = vunpack.c.l.b16 %v39
  %v757 = vunpack.c.l.b16 %v40
  %v758 = vunpack.c.l.b16 %v41
  %v759 = vunpack.c.l.b16 %v42
  %v760 = vunpack.c.l.b16 %v43
  %v761 = vunpack.c.l.b16 %v44
  %v762 = vunpack.c.l.b16 %v45
  %v763 = vunpack.c.l.b16 %v46
  %v764 = vunpack.c.l.b16 %v47
  %v765 = vunpack.c.l.b16 %v48
  %v766 = vunpack.c.l.b16 %v49
  %v767 = vunpack.c.l.b16 %v50
  %v768 = vunpack.c.l.b16 %v51
  %v769 = vunpack.c.l.b16 %v52
  %v770 = vunpack.c.l.b16 %v53
  %v771 = vunpack.c.l.b16 %v54
  %v772 = vunpack.c.l.b16 %v55
  %v773 = vunpack.c.l.b16 %v56
  %v774 = vunpack.c.l.b16 %v57
  %v775 = vunpack.c.l.b16 %v58
  %v776 = vunpack.c.l.b16 %v59
  %v777 = vunpack.c.l.b16 %v60
  %v778 = vunpack.c.l.b16 %v61
  %v779 = vunpack.c.l.b16 %v62
  %v780 = vunpack.c.l.b16 %v63
  %v781 = vunpack.c.l.b16 %v64
  %v782 = vunpack.c.l.b16 %v65
  %v783 = vunpack.c.l.b16 %v66
  %v784 = vunpack.c.l.b16 %v67
  %v785 = vunpack.c.l.b16 %v68
  %v786 = vunpack.c.l.b16 %v69
  %v787 = vunpack.c.l.b16 %v70
  %v788 = vunpack.c.l.b16 %v71
  %v789 = vunpack.c.l.b16 %v72
  %v790 = vunpack.c.l.b16 %v73
  %v791 = vunpack.c.l.b16 %v74
  %v792 = vunpack.c.l.b16 %v75
  %v793 = vunpack.c.l.b16 %v76
  %v794 = vunpack.c.l.b16 %v77
  %v795 = vunpack.c.l.b16 %v78
  %v796 = vunpack.c.l.b16 %v79
  %v797 = vunpack.c.l.b16 %v80
  %v798 = vunpack.c.l.b16 %v81
  %v799 = vunpack.c.l.b16 %v82
  %v800 = vunpack.c.l.b16 %v83
  %v801 = vunpack.c.l.b16 %v84
  %v802 = vunpack.c.l.b16 %v85
  %v803 = vunpack.c.l.b16 %v86
  %v804 = vunpack.c.l.b16 %v87
  %v805 = vunpack.c.l.b16 %v88
  %v806 = vunpack.c.l.b16 %v89
  %v807 = vunpack.c.l.b16 %v90
  %v808 = vunpack.c.l.b16 %v91
  %v809 = vunpack.c.l.b16 %v92
  %v810 = vunpack.c.l.b16 %v93
  %v811 = vunpack.c.l.b16 %v94
  %v812 = vunpack.c.l.b16 %v95
  %v813 = vunpack.c.l.b16 %v96
  %v814 = vunpack.c.l.b16 %v97
  %v815 = vunpack.c.l.b16 %v98
  %v816 = vunpack.c.l.b16 %v99
  %v817 = vunpack.c.l.b16 %v100
  %v818 = vunpack.c.l.b16 %v101
  %v819 = vunpack.c.l.b16 %v102
  %v820 = vunpack.c.l.b16 %v103
  %v821 = vunpack.c.l.b16 %v104
  %v822 = vunpack.c.l.b16 %v105
  %v823 = vunpack.c.l.b16 %v106
  %v824 = vunpack.c.l.b16 %v107
  %v825 = vunpack.c.l.b16 %v108
  %v826 = vunpack.c.l.b16 %v109
  %v827 = vunpack.c.l.b16 %v110
  %v828 = vunpack.c.l.b16 %v111
  %v829 = vunpack.c.l.b16 %v112
  %v830 = vunpack.c.l.b16 %v113
  %v831 = vunpack.c.l.b16 %v114
  %v832 = vunpack.c.l.b16 %v115
  %v833 = vunpack.c.l.b16 %v116
  %v834 = vunpack.c.l.b16 %v117
  %v835 = vunpack.c.l.b16 %v118
  %v836 = vunpack.c.l.b16 %v119
  %v837 = vunpack.c.l.b16 %v120
  %v838 = vunpack.c.l.b16 %v121
  %v839 = vunpack.c.l.b16 %v122
  %v840 = vunpack.c.l.b16 %v123
  %v841 = vunpack.c.l.b16 %v124
  %v842 = vunpack.c.l.b16 %v125
  %v843 = vunpack.c.l.b16 %v126
  %v844 = vunpack.c.l.b16 %v127
  %v845 = vunpack.c.l.b16 %v128
  %v846 = vunpack.c.l.b16 %v129
  %v847 = vunpack.c.l.b16 %v130
  %v848 = vunpack.c.l.b16 %v131
  %v849 = vunpack.c.l.b16 %v132
  %v850 = vunpack.c.l.b16 %v133
  %v851 = vunpack.c.l.b16 %v134
  %v852 = vunpack.c.l.b16 %v135
  %v853 = vunpack.c.l.b16 %v136
  %v854 = vunpack.c.l.b16 %v137
  %v855 = vunpack.c.l.b16 %v138
  %v856 = vunpack.c.l.b16 %v139
  %v857 = vunpack.c.l.b16 %v140
  %v858 = vunpack.c.l.b16 %v141
  %v859 = vunpack.c.l.b16 %v142
  %v860 = vunpack.c.l.b16 %v143
  %v861 = vunpack.c.l.b16 %v144
  %v862 = vunpack.c.l.b16 %v145
  %v863 = vunpack.c.l.b16 %v146
  %v864 = vunpack.c.l.b16 %v147
  %v865 = vunpack.c.l.b16 %v148
  %v866 = vunpack.c.l.b16 %v149
  %v867 = vunpack.c.l.b16 %v150
  %v868 = vunpack.c.l.b16 %v151
  %v869 = vunpack.c.l.b16 %v152
  %v870 = vunpack.c.l.b16 %v153
  %v871 = vunpack.c.l.b16 %v154
  %v872 = vunpack.c.l.b16 %v155
  %v873 = vunpack.c.l.b16 %v156
  %v874 = vunpack.c.l.b16 %v157
  %v875 = vunpack.c.l.b16 %v158
  %v876 = vunpack.c.l.b16 %v159
  %v877 = vunpack.c.l.b16 %v160
  %v878 = vunpack.c.l.b16 %v161
  %v879 = vunpack.c.l.b16 %v162
  %v880 = vunpack.c.l.b16 %v163
  %v881 = vunpack.c.l.b16 %v164
  %v882 = vunpack.c.l.b16 %v165
  %v883 = vunpack.c.l.b16 %v166
  %v884 = vunpack.c.l.b16 %v167
  %v885 = vunpack.c.l.b16 %v168
  %v886 = vunpack.c.l.b16 %v169
  %v887 = vunpack.c.l.b16 %v170
  %v888 = vunpack.c.l.b16 %v171
  %v889 = vunpack.c.l.b16 %v172
  %v890 = vunpack.c.l.b16 %v173
  %v891 = vunpack.c.l.b16 %v174
  %v892 = vunpack.c.l.b16 %v175
  %v893 = vunpack.c.l.b16 %v176
  %v894 = vunpack.c.l.b16 %v177
  %v895 = vunpack.c.l.b16 %v178
  %v896 = vunpack.c.l.b16 %v179
  %v897 = vunpack.c.l.b16 %v180
  %v898 = vunpack.c.l.b16 %v181
  %v899 = vunpack.c.l.b16 %v182
  %v900 = vunpack.c.l.b16 %v183
  %v901 = vunpack.c.l.b16 %v184
  %v902 = vunpack.c.l.b16 %v185
  %v903 = vunpack.c.l.b16 %v186
  %v904 = vunpack.c.l.b16 %v187
  %v905 = vunpack.c.l.b16 %v188
  %v906 = vunpack.c.l.b16 %v189
  %v907 = vunpack.c.l.b16 %v190
  %v908 = vunpack.c.l.b16 %v191
  %v909 = vunpack.c.l.b16 %v192
  %v910 = vunpack.c.l.b16 %v193
  %v911 = vunpack.c.l.b16 %v194
  %v912 = vunpack.c.l.b16 %v195
  %v913 = vunpack.c.l.b16 %v196
  %v914 = vunpack.c.l.b16 %v197
  %v915 = vunpack.c.l.b16 %v198
  %v916 = vunpack.c.l.b16 %v199
  %v917 = vunpack.c.l.b16 %v200
  %v918 = vunpack.c.l.b16 %v201
  %v919 = vunpack.c.l.b16 %v202
  %v920 = vunpack.c.l.b16 %v203
  %v921 = vunpack.c.l.b16 %v204
  %v922 = vunpack.c.l.b16 %v205
  %v923 = vunpack.c.l.b16 %v206
  %v924 = vunpack.c.l.b16 %v207
  %v925 = vunpack.c.l.b16 %v208
  %v926 = vunpack.c.l.b16 %v209
  %v927 = vunpack.c.l.b16 %v210
  %v928 = vunpack.c.l.b16 %v211
  %v929 = vunpack.c.l.b16 %v212
  %v930 = vunpack.c.l.b16 %v213
  %v931 = vunpack.c.l.b16 %v214
  %v932 = vunpack.c.l.b16 %v215
  %v933 = vunpack.c.l.b16 %v216
  %v934 = vunpack.c.l.b16 %v217
  %v935 = vunpack.c.l.b16 %v218
  %v936 = vunpack.c.l.b16 %v219
  %v937 = vunpack.c.l.b16 %v220
  %v938 = vunpack.c.l.b16 %v221
  %v939 = vunpack.c.l.b16 %v222
  %v940 = vunpack.c.l.b16 %v223
  %v941 = vunpack.c.l.b16 %v224
  %v942 = vunpack.c.l.b16 %v225
  %v943 = vunpack.c.l.b16 %v226
  %v944 = vunpack.c.l.b16 %v227
  %v945 = vunpack.c.l.b16 %v228
  %v946 = vunpack.c.l.b16 %v229
  %v947 = vunpack.c.l.b16 %v230
  %v948 = vunpack.c.l.b16 %v231
  %v949 = vunpack.c.l.b16 %v232
  %v950 = vunpack.c.l.b16 %v233
  %v951 = vunpack.c.l.b16 %v234
  %v952 = vunpack.c.l.b16 %v235
  %v953 = vunpack.c.l.b16 %v236
  %v954 = vunpack.c.l.b16 %v237
  %v955 = vunpack.c.l.b16 %v238
  %v956 = vunpack.c.l.b16 %v239
  %v957 = vunpack.c.l.b16 %v240
  %v958 = vunpack.c.l.b16 %v241
  %v959 = vunpack.c.l.b16 %v242
  %v960 = vunpack.c.l.b16 %v243
  %v961 = vunpack.c.l.b16 %v244
  %v962 = vunpack.c.l.b16 %v245
  %v963 = vunpack.c.l.b16 %v246
  %v964 = vunpack.c.l.b16 %v247
  %v965 = vunpack.c.l.b16 %v248
  %v966 = vunpack.c.l.b16 %v249
  %v967 = vunpack.c.l.b16 %v250
  %v968 = vunpack.c.l.b16 %v251
  %v969 = vunpack.c.l.b16 %v252
  %v970 = vunpack.c.l.b16 %v253
  %v971 = vunpack.c.l.b16 %v254
  %v972 = vunpack.c.l.b16 %v255
  %v973 = vunpack.c.l.b16 %v256
  %v974 = vunpack.c.l.b16 %v257
  %v975 = vunpack.c.l.b16 %v258
  %v976 = vunpack.c.l.b16 %v259
  %v977 = vunpack.c.l.b16 %v260
  %v978 = vunpack.c.l.b16 %v261
  %v979 = vunpack.c.l.b16 %v262
  %v980 = vunpack.c.l.b16 %v263
  %v981 = vunpack.c.l.b16 %v264
  %v982 = vunpack.c.l.b16 %v265
  %v983 = vunpack.c.l.b16 %v266
  %v984 = vunpack.c.l.b16 %v267
  %v985 = vunpack.c.l.b16 %v268
  %v986 = vunpack.c.l.b16 %v269
  %v987 = vunpack.c.l.b16 %v270
  %v988 = vunpack.c.l.b16 %v271
  %v989 = vunpack.c.l.b16 %v272
  %v990 = vunpack.c.l.b16 %v273
  %v991 = vunpack.c.l.b16 %v274
  %v992 = vunpack.c.l.b16 %v275
  %v993 = vunpack.c.l.b16 %v276
  %v994 = vunpack.c.l.b16 %v277
  %v995 = vunpack.c.l.b16 %v278
  %v996 = vunpack.c.l.b16 %v279
  %v997 = vunpack.c.l.b16 %v280
  %v998 = vunpack.c.l.b16 %v281
  %v999 = vunpack.c.l.b16 %v282
  %v1000 = vunpack.c.l.b16 %v283
  %v1001 = vunpack.c.l.b16 %v284
  %v1002 = vunpack.c.l.b16 %v285
  %v1003 = vunpack.c.l.b16 %v286
  %v1004 = vunpack.c.l.b16 %v287
  %v1005 = vunpack.c.l.b16 %v288
  %v1006 = vunpack.c.l.b16 %v289
  %v1007 = vunpack.c.l.b16 %v290
  %v1008 = vunpack.c.l.b16 %v291
  %v1009 = vunpack.c.l.b16 %v292
  %v1010 = vunpack.c.l.b16 %v293
  %v1011 = vunpack.c.l.b16 %v294
  %v1012 = vunpack.c.l.b16 %v295
  %v1013 = vunpack.c.l.b16 %v296
  %v1014 = vunpack.c.l.b16 %v297
  %v1015 = vunpack.c.l.b16 %v298
  %v1016 = vunpack.c.l.b16 %v299
  %v1017 = vunpack.c.l.b16 %v300
  %v1018 = vunpack.c.l.b16 %v301
  %v1019 = vunpack.c.l.b16 %v302
  %v1020 = vunpack.c.l.b16 %v303
  %v1021 = vunpack.c.l.b16 %v304
  %v1022 = vunpack.c.l.b16 %v305
  %v1023 = vunpack.c.l.b16 %v306
  %v1024 = vunpack.c.l.b16 %v307
  %v1025 = vunpack.c.l.b16 %v308
  %v1026 = vunpack.c.l.b16 %v309
  %v1027 = vunpack.c.l.b16 %v310
  %v1028 = vunpack.c.l.b16 %v311
  %v1029 = vunpack.c.l.b16 %v312
  %v1030 = vunpack.c.l.b16 %v313
  %v1031 = vunpack.c.l.b16 %v314
  %v1032 = vunpack.c.l.b16 %v315
  %v1033 = vunpack.c.l.b16 %v316
  %v1034 = vunpack.c.l.b16 %v317
  %v1035 = vunpack.c.l.b16 %v318
  %v1036 = vunpack.c.l.b16 %v319
  %v1037 = vunpack.c.l.b16 %v320
  %v1038 = vunpack.c.l.b16 %v321
  %v1039 = vunpack.c.l.b16 %v322
  %v1040 = vunpack.c.l.b16 %v323
  %v1041 = vunpack.c.l.b16 %v324
  %v1042 = vunpack.c.l.b16 %v325
  %v1043 = vunpack.c.l.b16 %v326
  %v1044 = vunpack.c.l.b16 %v327
  %v1045 = vunpack.c.l.b16 %v328
  %v1046 = vunpack.c.l.b16 %v329
  %v1047 = vunpack.c.l.b16 %v330
  %v1048 = vunpack.c.l.b16 %v331
  %v1049 = vunpack.c.l.b16 %v332
  %v1050 = vunpack.c.l.b16 %v333
  %v1051 = vunpack.c.l.b16 %v334
  %v1052 = vunpack.c.l.b16 %v335
  %v1053 = vunpack.c.l.b16 %v336
  %v1054 = vunpack.c.l.b16 %v337
  %v1055 = vunpack.c.l.b16 %v338
  %v1056 = vunpack.c.l.b16 %v339
  %v1057 = vunpack.c.l.b16 %v340
  %v1058 = vunpack.c.l.b16 %v341
  %v1059 = vunpack.c.l.b16 %v342
  %v1060 = vunpack.c.l.b16 %v343
  %v1061 = vunpack.c.l.b16 %v344
  %v1062 = vpack.c.b16 %v743, %v742
  %v1063 = vpack.c.b16 %v745, %v744
  %v1064 = vpack.c.b16 %v747, %v746
  %v1065 = vpack.c.b16 %v749, %v748
  %v1066 = vpack.c.b16 %v751, %v750
  %v1067 = vpack.c.b16 %v753, %v752
  %v1068 = vpack.c.b16 %v755, %v754
  %v1069 = vpack.c.b16 %v757, %v756
  %v1070 = vpack.c.b16 %v759, %v758
  %v1071 = vpack.c.b16 %v761, %v760
  %v1072 = vpack.c.b16 %v763, %v762
  %v1073 = vpack.c.b16 %v765, %v764
  %v1074 = vpack.c.b16 %v767, %v766
  %v1075 = vpack.c.b16 %v769, %v768
  %v1076 = vpack.c.b16 %v771, %v770
  %v1077 = vpack.c.b16 %v773, %v772
  %v1078 = vpack.c.b16 %v775, %v774
  %v1079 = vpack.c.b16 %v777, %v776
  %v1080 = vpack.c.b16 %v779, %v778
  %v1081 = vpack.c.b16 %v781, %v780
  %v1082 = vpack.c.b16 %v783, %v782
  %v1083 = vpack.c.b16 %v785, %v784
  %v1084 = vpack.c.b16 %v787, %v786
  %v1085 = vpack.c.b16 %v789, %v788
  %v1086 = vpack.c.b16 %v791, %v790
  %v1087 = vpack.c.b16 %v793, %v792
  %v1088 = vpack.c.b16 %v795, %v794
  %v1089 = vpack.c.b16 %v797, %v796
  %v1090 = vpack.c.b16 %v799, %v798
  %v1091 = vpack.c.b16 %v801, %v800
  %v1092 = vpack.c.b16 %v803, %v802
  %v1093 = vpack.c.b16 %v805, %v804
  %v1094 = vpack.c.b16 %v807, %v806
  %v1095 = vpack.c.b16 %v809, %v808
  %v1096 = vpack.c.b16 %v811, %v810
  %v1097 = vpack.c.b16 %v813, %v812
  %v1098 = vpack.c.b16 %v815, %v814
  %v1099 = vpack.c.b16 %v817, %v816
  %v1100 = vpack.c.b16 %v819, %v818
  %v1101 = vpack.c.b16 %v821, %v820
  %v1102 = vpack.c.b16 %v823, %v822
  %v1103 = vpack.c.b16 %v825, %v824
  %v1104 = vpack.c.b16 %v827, %v826
  %v1105 = vpack.c.b16 %v829, %v828
  %v1106 = vpack.c.b16 %v831, %v830
  %v1107 = vpack.c.b16 %v833, %v832
  %v1108 = vpack.c.b16 %v835, %v834
  %v1109 = vpack.c.b16 %v837, %v836
  %v1110 = vpack.c.b16 %v839, %v838
  %v1111 = vpack.c.b16 %v841, %v840
  %v1112 = vpack.c.b16 %v843, %v842
  %v1113 = vpack.c.b16 %v845, %v844
  %v1114 = vpack.c.b16 %v847, %v846
  %v1115 = vpack.c.b16 %v849, %v848
  %v1116 = vpack.c.b16 %v851, %v850
  %v1117 = vpack.c.b16 %v853, %v852
  %v1118 = vpack.c.b16 %v855, %v854
  %v1119 = vpack.c.b16 %v857, %v856
  %v1120 = vpack.c.b16 %v859, %v858
  %v1121 = vpack.c.b16 %v861, %v860
  %v1122 = vpack.c.b16 %v863, %v862
  %v1123 = vpack.c.b16 %v865, %v864
  %v1124 = vpack.c.b16 %v867, %v866
  %v1125 = vpack.c.b16 %v869, %v868
  %v1126 = vpack.c.b16 %v871, %v870
  %v1127 = vpack.c.b16 %v873, %v872
  %v1128 = vpack.c.b16 %v875, %v874
  %v1129 = vpack.c.b16 %v877, %v876
  %v1130 = vpack.c.b16 %v879, %v878
  %v1131 = vpack.c.b16 %v881, %v880
  %v1132 = vpack.c.b16 %v883, %v882
  %v1133 = vpack.c.b16 %v885, %v884
  %v1134 = vpack.c.b16 %v887, %v886
  %v1135 = vpack.c.b16 %v889, %v888
  %v1136 = vpack.c.b16 %v891, %v890
  %v1137 = vpack.c.b16 %v893, %v892
  %v1138 = vpack.c.b16 %v895, %v894
  %v1139 = vpack.c.b16 %v897, %v896
  %v1140 = vpack.c.b16 %v899, %v898
  %v1141 = vpack.c.b16 %v901, %v900
  %v1142 = vpack.c.b16 %v903, %v902
  %v1143 = vpack.c.b16 %v905, %v904
  %v1144 = vpack.c.b16 %v907, %v906
  %v1145 = vpack.c.b16 %v909, %v908
  %v1146 = vpack.c.b16 %v911, %v910
  %v1147 = vpack.c.b16 %v913, %v912
  %v1148 = vpack.c.b16 %v915, %v914
  %v1149 = vpack.c.b16 %v917, %v916
  %v1150 = vpack.c.b16 %v919, %v918
  %v1151 = vpack.c.b16 %v921, %v920
  %v1152 = vpack.c.b16 %v923, %v922
  %v1153 = vpack.c.b16 %v925, %v924
  %v1154 = vpack.c.b16 %v927, %v926
  %v1155 = vpack.c.b16 %v929, %v928
  %v1156 = vpack.c.b16 %v931, %v930
  %v1157 = vpack.c.b16 %v933, %v932
  %v1158 = vpack.c.b16 %v935, %v934
  %v1159 = vpack.c.b16 %v937, %v936
  %v1160 = vpack.c.b16 %v939, %v938
  %v1161 = vpack.c.b16 %v941, %v940
  %v1162 = vpack.c.b16 %v943, %v942
  %v1163 = vpack.c.b16 %v945, %v944
  %v1164 = vpack.c.b16 %v947, %v946
  %v1165 = vpack.c.b16 %v949, %v948
  %v1166 = vpack.c.b16 %v951, %v950
  %v1167 = vpack.c.b16 %v953, %v952
  %v1168 = vpack.c.b16 %v955, %v954
  %v1169 = vpack.c.b16 %v957, %v956
  %v1170 = vpack.c.b16 %v959, %v958
  %v1171 = vpack.c.b16 %v961, %v960
  %v1172 = vpack.c.b16 %v963, %v962
  %v1173 = vpack.c.b16 %v965, %v964
  %v1174 = vpack.c.b16 %v967, %v966
  %v1175 = vpack.c.b16 %v969, %v968
  %v1176 = vpack.c.b16 %v971, %v970
  %v1177 = vpack.c.b16 %v973, %v972
  %v1178 = vpack.c.b16 %v975, %v974
  %v1179 = vpack.c.b16 %v977, %v976
  %v1180 = vpack.c.b16 %v979, %v978
  %v1181 = vpack.c.b16 %v981, %v980
  %v1182 = vpack.c.b16 %v983, %v982
  %v1183 = vpack.c.b16 %v985, %v984
  %v1184 = vpack.c.b16 %v987, %v986
  %v1185 = vpack.c.b16 %v989, %v988
  %v1186 = vpack.c.b16 %v991, %v990
  %v1187 = vpack.c.b16 %v993, %v992
  %v1188 = vpack.c.b16 %v995, %v994
  %v1189 = vpack.c.b16 %v997, %v996
  %v1190 = vpack.c.b16 %v999, %v998
  %v1191 = vpack.c.b16 %v1001, %v1000
  %v1192 = vpack.c.b16 %v1003, %v1002
  %v1193 = vpack.c.b16 %v1005, %v1004
  %v1194 = vpack.c.b16 %v1007, %v1006
  %v1195 = vpack.c.b16 %v1009, %v1008
  %v1196 = vpack.c.b16 %v1011, %v1010
  %v1197 = vpack.c.b16 %v1013, %v1012
  %v1198 = vpack.c.b16 %v1015, %v1014
  %v1199 = vpack.c.b16 %v1017, %v1016
  %v1200 = vpack.c.b16 %v1019, %v1018
  %v1201 = vpack.c.b16 %v1021, %v1020
  %v1202 = vpack.c.b16 %v1023, %v1022
  %v1203 = vpack.c.b16 %v1025, %v1024
  %v1204 = vpack.c.b16 %v1027, %v1026
  %v1205 = vpack.c.b16 %v1029, %v1028
  %v1206 = vpack.c.b16 %v1031, %v1030
  %v1207 = vpack.c.b16 %v1033, %v1032
  %v1208 = vpack.c.b16 %v1035, %v1034
  %v1209 = vpack.c.b16 %v1037, %v1036
  %v1210 = vpack.c.b16 %v1039, %v1038
  %v1211 = vpack.c.b16 %v1041, %v1040
  %v1212 = vpack.c.b16 %v1043, %v1042
  %v1213 = vpack.c.b16 %v1045, %v1044
  %v1214 = vpack.c.b16 %v1047, %v1046
  %v1215 = vpack.c.b16 %v1049, %v1048
  %v1216 = vpack.c.b16 %v1051, %v1050
  %v1217 = vpack.c.b16 %v1053, %v1052
  %v1218 = vpack.c.b16 %v1055, %v1054
  %v1219 = vpack.c.b16 %v1057, %v1056
  %v1220 = vpack.c.b16 %v1059, %v1058
  %v1221 = vpack.c.b16 %v1061, %v1060
  %1382 = vmatprep.subr.bf16.mxu0 0
  %1383 = vmatpush1.bf16.msra.mxu0 %v1062
  %1384 = vmatprep.subr.bf16.mxu0 0
  %1385 = vmatpush1.bf16.msra.mxu0 %v1063
  %1386 = vmatprep.subr.bf16.mxu0 0
  %1387 = vmatpush1.bf16.msra.mxu0 %v1064
  %1388 = vmatprep.subr.bf16.mxu0 0
  %1389 = vmatpush1.bf16.msra.mxu0 %v1065
  %1390 = vmatprep.subr.bf16.mxu0 0
  %1391 = vmatpush1.bf16.msra.mxu0 %v1066
  %1392 = vmatprep.subr.bf16.mxu0 0
  %1393 = vmatpush1.bf16.msra.mxu0 %v1067
  %1394 = vmatprep.subr.bf16.mxu0 0
  %1395 = vmatpush1.bf16.msra.mxu0 %v1068
  %1396 = vmatprep.subr.bf16.mxu0 0
  %1397 = vmatpush1.bf16.msra.mxu0 %v1069
  %1398 = vmatprep.subr.bf16.mxu0 0
  %1399 = vmatpush1.bf16.msra.mxu0 %v1070
  %1400 = vmatprep.subr.bf16.mxu0 0
  %1401 = vmatpush1.bf16.msra.mxu0 %v1071
  %1402 = vmatprep.subr.bf16.mxu0 0
  %1403 = vmatpush1.bf16.msra.mxu0 %v1072
  %1404 = vmatprep.subr.bf16.mxu0 0
  %1405 = vmatpush1.bf16.msra.mxu0 %v1073
  %1406 = vmatprep.subr.bf16.mxu0 0
  %1407 = vmatpush1.bf16.msra.mxu0 %v1074
  %1408 = vmatprep.subr.bf16.mxu0 0
  %1409 = vmatpush1.bf16.msra.mxu0 %v1075
  %1410 = vmatprep.subr.bf16.mxu0 0
  %1411 = vmatpush1.bf16.msra.mxu0 %v1076
  %1412 = vmatprep.subr.bf16.mxu0 0
  %1413 = vmatpush1.bf16.msra.mxu0 %v1077
  %1414 = vmatprep.mubr.bf16.mxu0 %v383
  %1415 = vmatmul.mubr.bf16.gmra.mrb[0].mxu0 %v382
  %v1416 = vpop.f32.mrb[0].mxu0
  %v1417 = vadd.f32 %v350, %v1416
  %v1418 = vpop.f32.mrb[0].mxu0
  %v1419 = vpop.f32.mrb[0].mxu0
  %v1420 = vpop.f32.mrb[0].mxu0
  %1421 = vdwg.mxu0
  %1422 = vmatprep.subr.bf16.mxu0 0
  %1423 = vmatpush1.bf16.msra.mxu0 %v1078
  %1424 = vmatprep.subr.bf16.mxu0 0
  %1425 = vmatpush1.bf16.msra.mxu0 %v1079
  %1426 = vmatprep.subr.bf16.mxu0 0
  %1427 = vmatpush1.bf16.msra.mxu0 %v1080
  %1428 = vmatprep.subr.bf16.mxu0 0
  %1429 = vmatpush1.bf16.msra.mxu0 %v1081
  %1430 = vmatprep.subr.bf16.mxu0 0
  %1431 = vmatpush1.bf16.msra.mxu0 %v1082
  %1432 = vmatprep.subr.bf16.mxu0 0
  %1433 = vmatpush1.bf16.msra.mxu0 %v1083
  %1434 = vmatprep.subr.bf16.mxu0 0
  %1435 = vmatpush1.bf16.msra.mxu0 %v1084
  %1436 = vmatprep.subr.bf16.mxu0 0
  %1437 = vmatpush1.bf16.msra.mxu0 %v1085
  %1438 = vmatprep.subr.bf16.mxu0 0
  %1439 = vmatpush1.bf16.msra.mxu0 %v1086
  %1440 = vmatprep.subr.bf16.mxu0 0
  %1441 = vmatpush1.bf16.msra.mxu0 %v1087
  %1442 = vmatprep.subr.bf16.mxu0 0
  %1443 = vmatpush1.bf16.msra.mxu0 %v1088
  %1444 = vmatprep.subr.bf16.mxu0 0
  %1445 = vmatpush1.bf16.msra.mxu0 %v1089
  %1446 = vmatprep.subr.bf16.mxu0 0
  %1447 = vmatpush1.bf16.msra.mxu0 %v1090
  %1448 = vmatprep.subr.bf16.mxu0 0
  %1449 = vmatpush1.bf16.msra.mxu0 %v1091
  %1450 = vmatprep.subr.bf16.mxu0 0
  %1451 = vmatpush1.bf16.msra.mxu0 %v1092
  %1452 = vmatprep.subr.bf16.mxu0 0
  %1453 = vmatpush1.bf16.msra.mxu0 %v1093
  %1454 = vmatprep.mubr.bf16.mxu0 %v385
  %1455 = vmatmul.mubr.bf16.gmra.mrb[0].mxu0 %v384
  %v1456 = vpop.f32.mrb[0].mxu0
  %v1457 = vadd.f32 %v1417, %v1456
  %v1458 = vpop.f32.mrb[0].mxu0
  %v1459 = vpop.f32.mrb[0].mxu0
  %v1460 = vpop.f32.mrb[0].mxu0
  %1461 = vdwg.mxu0
  %1462 = vmatprep.subr.bf16.mxu0 0
  %1463 = vmatpush1.bf16.msra.mxu0 %v1094
  %1464 = vmatprep.subr.bf16.mxu0 0
  %1465 = vmatpush1.bf16.msra.mxu0 %v1095
  %1466 = vmatprep.subr.bf16.mxu0 0
  %1467 = vmatpush1.bf16.msra.mxu0 %v1096
  %1468 = vmatprep.subr.bf16.mxu0 0
  %1469 = vmatpush1.bf16.msra.mxu0 %v1097
  %1470 = vmatprep.subr.bf16.mxu0 0
  %1471 = vmatpush1.bf16.msra.mxu0 %v1098
  %1472 = vmatprep.subr.bf16.mxu0 0
  %1473 = vmatpush1.bf16.msra.mxu0 %v1099
  %1474 = vmatprep.subr.bf16.mxu0 0
  %1475 = vmatpush1.bf16.msra.mxu0 %v1100
  %1476 = vmatprep.subr.bf16.mxu0 0
  %1477 = vmatpush1.bf16.msra.mxu0 %v1101
  %1478 = vmatprep.subr.bf16.mxu0 0
  %1479 = vmatpush1.bf16.msra.mxu0 %v1102
  %1480 = vmatprep.subr.bf16.mxu0 0
  %1481 = vmatpush1.bf16.msra.mxu0 %v1103
  %1482 = vmatprep.subr.bf16.mxu0 0
  %1483 = vmatpush1.bf16.msra.mxu0 %v1104
  %1484 = vmatprep.subr.bf16.mxu0 0
  %1485 = vmatpush1.bf16.msra.mxu0 %v1105
  %1486 = vmatprep.subr.bf16.mxu0 0
  %1487 = vmatpush1.bf16.msra.mxu0 %v1106
  %1488 = vmatprep.subr.bf16.mxu0 0
  %1489 = vmatpush1.bf16.msra.mxu0 %v1107
  %1490 = vmatprep.subr.bf16.mxu0 0
  %1491 = vmatpush1.bf16.msra.mxu0 %v1108
  %1492 = vmatprep.subr.bf16.mxu0 0
  %1493 = vmatpush1.bf16.msra.mxu0 %v1109
  %1494 = vmatprep.mubr.bf16.mxu0 %v387
  %1495 = vmatmul.mubr.bf16.gmra.mrb[0].mxu0 %v386
  %v1496 = vpop.f32.mrb[0].mxu0
  %v1497 = vadd.f32 %v1457, %v1496
  %v1498 = vpop.f32.mrb[0].mxu0
  %v1499 = vpop.f32.mrb[0].mxu0
  %v1500 = vpop.f32.mrb[0].mxu0
  %1501 = vdwg.mxu0
  %1502 = vmatprep.subr.bf16.mxu0 0
  %1503 = vmatpush1.bf16.msra.mxu0 %v1110
  %1504 = vmatprep.subr.bf16.mxu0 0
  %1505 = vmatpush1.bf16.msra.mxu0 %v1111
  %1506 = vmatprep.subr.bf16.mxu0 0
  %1507 = vmatpush1.bf16.msra.mxu0 %v1112
  %1508 = vmatprep.subr.bf16.mxu0 0
  %1509 = vmatpush1.bf16.msra.mxu0 %v1113
  %1510 = vmatprep.subr.bf16.mxu0 0
  %1511 = vmatpush1.bf16.msra.mxu0 %v1114
  %1512 = vmatprep.subr.bf16.mxu0 0
  %1513 = vmatpush1.bf16.msra.mxu0 %v1115
  %1514 = vmatprep.subr.bf16.mxu0 0
  %1515 = vmatpush1.bf16.msra.mxu0 %v1116
  %1516 = vmatprep.subr.bf16.mxu0 0
  %1517 = vmatpush1.bf16.msra.mxu0 %v1117
  %1518 = vmatprep.subr.bf16.mxu0 0
  %1519 = vmatpush1.bf16.msra.mxu0 %v1118
  %1520 = vmatprep.subr.bf16.mxu0 0
  %1521 = vmatpush1.bf16.msra.mxu0 %v1119
  %1522 = vmatprep.subr.bf16.mxu0 0
  %1523 = vmatpush1.bf16.msra.mxu0 %v1120
  %1524 = vmatprep.subr.bf16.mxu0 0
  %1525 = vmatpush1.bf16.msra.mxu0 %v1121
  %1526 = vmatprep.subr.bf16.mxu0 0
  %1527 = vmatpush1.bf16.msra.mxu0 %v1122
  %1528 = vmatprep.subr.bf16.mxu0 0
  %1529 = vmatpush1.bf16.msra.mxu0 %v1123
  %1530 = vmatprep.subr.bf16.mxu0 0
  %1531 = vmatpush1.bf16.msra.mxu0 %v1124
  %1532 = vmatprep.subr.bf16.mxu0 0
  %1533 = vmatpush1.bf16.msra.mxu0 %v1125
  %1534 = vmatprep.mubr.bf16.mxu0 %v389
  %1535 = vmatmul.mubr.bf16.gmra.mrb[0].mxu0 %v388
  %v1536 = vpop.f32.mrb[0].mxu0
  %v1537 = vadd.f32 %v1497, %v1536
  %v1538 = vpop.f32.mrb[0].mxu0
  %v1539 = vpop.f32.mrb[0].mxu0
  %v1540 = vpop.f32.mrb[0].mxu0
  %1541 = vdwg.mxu0
  %1542 = vmatprep.subr.bf16.mxu0 0
  %1543 = vmatpush1.bf16.msra.mxu0 %v1126
  %1544 = vmatprep.subr.bf16.mxu0 0
  %1545 = vmatpush1.bf16.msra.mxu0 %v1127
  %1546 = vmatprep.subr.bf16.mxu0 0
  %1547 = vmatpush1.bf16.msra.mxu0 %v1128
  %1548 = vmatprep.subr.bf16.mxu0 0
  %1549 = vmatpush1.bf16.msra.mxu0 %v1129
  %1550 = vmatprep.subr.bf16.mxu0 0
  %1551 = vmatpush1.bf16.msra.mxu0 %v1130
  %1552 = vmatprep.subr.bf16.mxu0 0
  %1553 = vmatpush1.bf16.msra.mxu0 %v1131
  %1554 = vmatprep.subr.bf16.mxu0 0
  %1555 = vmatpush1.bf16.msra.mxu0 %v1132
  %1556 = vmatprep.subr.bf16.mxu0 0
  %1557 = vmatpush1.bf16.msra.mxu0 %v1133
  %1558 = vmatprep.subr.bf16.mxu0 0
  %1559 = vmatpush1.bf16.msra.mxu0 %v1134
  %1560 = vmatprep.subr.bf16.mxu0 0
  %1561 = vmatpush1.bf16.msra.mxu0 %v1135
  %1562 = vmatprep.subr.bf16.mxu0 0
  %1563 = vmatpush1.bf16.msra.mxu0 %v1136
  %1564 = vmatprep.subr.bf16.mxu0 0
  %1565 = vmatpush1.bf16.msra.mxu0 %v1137
  %1566 = vmatprep.subr.bf16.mxu0 0
  %1567 = vmatpush1.bf16.msra.mxu0 %v1138
  %1568 = vmatprep.subr.bf16.mxu0 0
  %1569 = vmatpush1.bf16.msra.mxu0 %v1139
  %1570 = vmatprep.subr.bf16.mxu0 0
  %1571 = vmatpush1.bf16.msra.mxu0 %v1140
  %1572 = vmatprep.subr.bf16.mxu0 0
  %1573 = vmatpush1.bf16.msra.mxu0 %v1141
  %1574 = vmatprep.mubr.bf16.mxu0 %v391
  %1575 = vmatmul.mubr.bf16.gmra.mrb[0].mxu0 %v390
  %v1576 = vpop.f32.mrb[0].mxu0
  %v1577 = vadd.f32 %v1537, %v1576
  %v1578 = vpop.f32.mrb[0].mxu0
  %v1579 = vpop.f32.mrb[0].mxu0
  %v1580 = vpop.f32.mrb[0].mxu0
  %1581 = vdwg.mxu0
  %1582 = vmatprep.subr.bf16.mxu0 0
  %1583 = vmatpush1.bf16.msra.mxu0 %v1142
  %1584 = vmatprep.subr.bf16.mxu0 0
  %1585 = vmatpush1.bf16.msra.mxu0 %v1143
  %1586 = vmatprep.subr.bf16.mxu0 0
  %1587 = vmatpush1.bf16.msra.mxu0 %v1144
  %1588 = vmatprep.subr.bf16.mxu0 0
  %1589 = vmatpush1.bf16.msra.mxu0 %v1145
  %1590 = vmatprep.subr.bf16.mxu0 0
  %1591 = vmatpush1.bf16.msra.mxu0 %v1146
  %1592 = vmatprep.subr.bf16.mxu0 0
  %1593 = vmatpush1.bf16.msra.mxu0 %v1147
  %1594 = vmatprep.subr.bf16.mxu0 0
  %1595 = vmatpush1.bf16.msra.mxu0 %v1148
  %1596 = vmatprep.subr.bf16.mxu0 0
  %1597 = vmatpush1.bf16.msra.mxu0 %v1149
  %1598 = vmatprep.subr.bf16.mxu0 0
  %1599 = vmatpush1.bf16.msra.mxu0 %v1150
  %1600 = vmatprep.subr.bf16.mxu0 0
  %1601 = vmatpush1.bf16.msra.mxu0 %v1151
  %1602 = vmatprep.subr.bf16.mxu0 0
  %1603 = vmatpush1.bf16.msra.mxu0 %v1152
  %1604 = vmatprep.subr.bf16.mxu0 0
  %1605 = vmatpush1.bf16.msra.mxu0 %v1153
  %1606 = vmatprep.subr.bf16.mxu0 0
  %1607 = vmatpush1.bf16.msra.mxu0 %v1154
  %1608 = vmatprep.subr.bf16.mxu0 0
  %1609 = vmatpush1.bf16.msra.mxu0 %v1155
  %1610 = vmatprep.subr.bf16.mxu0 0
  %1611 = vmatpush1.bf16.msra.mxu0 %v1156
  %1612 = vmatprep.subr.bf16.mxu0 0
  %1613 = vmatpush1.bf16.msra.mxu0 %v1157
  %1614 = vmatprep.mubr.bf16.mxu0 %v393
  %1615 = vmatmul.mubr.bf16.gmra.mrb[0].mxu0 %v392
  %v1616 = vpop.f32.mrb[0].mxu0
  %v1617 = vadd.f32 %v1577, %v1616
  %v1618 = vpop.f32.mrb[0].mxu0
  %v1619 = vpop.f32.mrb[0].mxu0
  %v1620 = vpop.f32.mrb[0].mxu0
  %1621 = vdwg.mxu0
  %1622 = vmatprep.subr.bf16.mxu0 0
  %1623 = vmatpush1.bf16.msra.mxu0 %v1158
  %1624 = vmatprep.subr.bf16.mxu0 0
  %1625 = vmatpush1.bf16.msra.mxu0 %v1159
  %1626 = vmatprep.subr.bf16.mxu0 0
  %1627 = vmatpush1.bf16.msra.mxu0 %v1160
  %1628 = vmatprep.subr.bf16.mxu0 0
  %1629 = vmatpush1.bf16.msra.mxu0 %v1161
  %1630 = vmatprep.subr.bf16.mxu0 0
  %1631 = vmatpush1.bf16.msra.mxu0 %v1162
  %1632 = vmatprep.subr.bf16.mxu0 0
  %1633 = vmatpush1.bf16.msra.mxu0 %v1163
  %1634 = vmatprep.subr.bf16.mxu0 0
  %1635 = vmatpush1.bf16.msra.mxu0 %v1164
  %1636 = vmatprep.subr.bf16.mxu0 0
  %1637 = vmatpush1.bf16.msra.mxu0 %v1165
  %1638 = vmatprep.subr.bf16.mxu0 0
  %1639 = vmatpush1.bf16.msra.mxu0 %v1166
  %1640 = vmatprep.subr.bf16.mxu0 0
  %1641 = vmatpush1.bf16.msra.mxu0 %v1167
  %1642 = vmatprep.subr.bf16.mxu0 0
  %1643 = vmatpush1.bf16.msra.mxu0 %v1168
  %1644 = vmatprep.subr.bf16.mxu0 0
  %1645 = vmatpush1.bf16.msra.mxu0 %v1169
  %1646 = vmatprep.subr.bf16.mxu0 0
  %1647 = vmatpush1.bf16.msra.mxu0 %v1170
  %1648 = vmatprep.subr.bf16.mxu0 0
  %1649 = vmatpush1.bf16.msra.mxu0 %v1171
  %1650 = vmatprep.subr.bf16.mxu0 0
  %1651 = vmatpush1.bf16.msra.mxu0 %v1172
  %1652 = vmatprep.subr.bf16.mxu0 0
  %1653 = vmatpush1.bf16.msra.mxu0 %v1173
  %1654 = vmatprep.mubr.bf16.mxu0 %v395
  %1655 = vmatmul.mubr.bf16.gmra.mrb[0].mxu0 %v394
  %v1656 = vpop.f32.mrb[0].mxu0
  %v1657 = vadd.f32 %v1617, %v1656
  %v1658 = vpop.f32.mrb[0].mxu0
  %v1659 = vpop.f32.mrb[0].mxu0
  %v1660 = vpop.f32.mrb[0].mxu0
  %1661 = vdwg.mxu0
  %1662 = vmatprep.subr.bf16.mxu0 0
  %1663 = vmatpush1.bf16.msra.mxu0 %v1174
  %1664 = vmatprep.subr.bf16.mxu0 0
  %1665 = vmatpush1.bf16.msra.mxu0 %v1175
  %1666 = vmatprep.subr.bf16.mxu0 0
  %1667 = vmatpush1.bf16.msra.mxu0 %v1176
  %1668 = vmatprep.subr.bf16.mxu0 0
  %1669 = vmatpush1.bf16.msra.mxu0 %v1177
  %1670 = vmatprep.subr.bf16.mxu0 0
  %1671 = vmatpush1.bf16.msra.mxu0 %v1178
  %1672 = vmatprep.subr.bf16.mxu0 0
  %1673 = vmatpush1.bf16.msra.mxu0 %v1179
  %1674 = vmatprep.subr.bf16.mxu0 0
  %1675 = vmatpush1.bf16.msra.mxu0 %v1180
  %1676 = vmatprep.subr.bf16.mxu0 0
  %1677 = vmatpush1.bf16.msra.mxu0 %v1181
  %1678 = vmatprep.subr.bf16.mxu0 0
  %1679 = vmatpush1.bf16.msra.mxu0 %v1182
  %1680 = vmatprep.subr.bf16.mxu0 0
  %1681 = vmatpush1.bf16.msra.mxu0 %v1183
  %1682 = vmatprep.subr.bf16.mxu0 0
  %1683 = vmatpush1.bf16.msra.mxu0 %v1184
  %1684 = vmatprep.subr.bf16.mxu0 0
  %1685 = vmatpush1.bf16.msra.mxu0 %v1185
  %1686 = vmatprep.subr.bf16.mxu0 0
  %1687 = vmatpush1.bf16.msra.mxu0 %v1186
  %1688 = vmatprep.subr.bf16.mxu0 0
  %1689 = vmatpush1.bf16.msra.mxu0 %v1187
  %1690 = vmatprep.subr.bf16.mxu0 0
  %1691 = vmatpush1.bf16.msra.mxu0 %v1188
  %1692 = vmatprep.subr.bf16.mxu0 0
  %1693 = vmatpush1.bf16.msra.mxu0 %v1189
  %1694 = vmatprep.mubr.bf16.mxu0 %v397
  %1695 = vmatmul.mubr.bf16.gmra.mrb[0].mxu0 %v396
  %v1696 = vpop.f32.mrb[0].mxu0
  %v1697 = vadd.f32 %v1657, %v1696
  %v1698 = vpop.f32.mrb[0].mxu0
  %v1699 = vpop.f32.mrb[0].mxu0
  %v1700 = vpop.f32.mrb[0].mxu0
  %1701 = vdwg.mxu0
  %1702 = vmatprep.subr.bf16.mxu0 0
  %1703 = vmatpush1.bf16.msra.mxu0 %v1190
  %1704 = vmatprep.subr.bf16.mxu0 0
  %1705 = vmatpush1.bf16.msra.mxu0 %v1191
  %1706 = vmatprep.subr.bf16.mxu0 0
  %1707 = vmatpush1.bf16.msra.mxu0 %v1192
  %1708 = vmatprep.subr.bf16.mxu0 0
  %1709 = vmatpush1.bf16.msra.mxu0 %v1193
  %1710 = vmatprep.subr.bf16.mxu0 0
  %1711 = vmatpush1.bf16.msra.mxu0 %v1194
  %1712 = vmatprep.subr.bf16.mxu0 0
  %1713 = vmatpush1.bf16.msra.mxu0 %v1195
  %1714 = vmatprep.subr.bf16.mxu0 0
  %1715 = vmatpush1.bf16.msra.mxu0 %v1196
  %1716 = vmatprep.subr.bf16.mxu0 0
  %1717 = vmatpush1.bf16.msra.mxu0 %v1197
  %1718 = vmatprep.subr.bf16.mxu0 0
  %1719 = vmatpush1.bf16.msra.mxu0 %v1198
  %1720 = vmatprep.subr.bf16.mxu0 0
  %1721 = vmatpush1.bf16.msra.mxu0 %v1199
  %1722 = vmatprep.subr.bf16.mxu0 0
  %1723 = vmatpush1.bf16.msra.mxu0 %v1200
  %1724 = vmatprep.subr.bf16.mxu0 0
  %1725 = vmatpush1.bf16.msra.mxu0 %v1201
  %1726 = vmatprep.subr.bf16.mxu0 0
  %1727 = vmatpush1.bf16.msra.mxu0 %v1202
  %1728 = vmatprep.subr.bf16.mxu0 0
  %1729 = vmatpush1.bf16.msra.mxu0 %v1203
  %1730 = vmatprep.subr.bf16.mxu0 0
  %1731 = vmatpush1.bf16.msra.mxu0 %v1204
  %1732 = vmatprep.subr.bf16.mxu0 0
  %1733 = vmatpush1.bf16.msra.mxu0 %v1205
  %1734 = vmatprep.mubr.bf16.mxu0 %v399
  %1735 = vmatmul.mubr.bf16.gmra.mrb[0].mxu0 %v398
  %v1736 = vpop.f32.mrb[0].mxu0
  %v1737 = vadd.f32 %v1697, %v1736
  %v1738 = vpop.f32.mrb[0].mxu0
  %v1739 = vpop.f32.mrb[0].mxu0
  %v1740 = vpop.f32.mrb[0].mxu0
  %1741 = vdwg.mxu0
  %1742 = vmatprep.subr.bf16.mxu0 0
  %1743 = vmatpush1.bf16.msra.mxu0 %v1206
  %1744 = vmatprep.subr.bf16.mxu0 0
  %1745 = vmatpush1.bf16.msra.mxu0 %v1207
  %1746 = vmatprep.subr.bf16.mxu0 0
  %1747 = vmatpush1.bf16.msra.mxu0 %v1208
  %1748 = vmatprep.subr.bf16.mxu0 0
  %1749 = vmatpush1.bf16.msra.mxu0 %v1209
  %1750 = vmatprep.subr.bf16.mxu0 0
  %1751 = vmatpush1.bf16.msra.mxu0 %v1210
  %1752 = vmatprep.subr.bf16.mxu0 0
  %1753 = vmatpush1.bf16.msra.mxu0 %v1211
  %1754 = vmatprep.subr.bf16.mxu0 0
  %1755 = vmatpush1.bf16.msra.mxu0 %v1212
  %1756 = vmatprep.subr.bf16.mxu0 0
  %1757 = vmatpush1.bf16.msra.mxu0 %v1213
  %1758 = vmatprep.subr.bf16.mxu0 0
  %1759 = vmatpush1.bf16.msra.mxu0 %v1214
  %1760 = vmatprep.subr.bf16.mxu0 0
  %1761 = vmatpush1.bf16.msra.mxu0 %v1215
  %1762 = vmatprep.subr.bf16.mxu0 0
  %1763 = vmatpush1.bf16.msra.mxu0 %v1216
  %1764 = vmatprep.subr.bf16.mxu0 0
  %1765 = vmatpush1.bf16.msra.mxu0 %v1217
  %1766 = vmatprep.subr.bf16.mxu0 0
  %1767 = vmatpush1.bf16.msra.mxu0 %v1218
  %1768 = vmatprep.subr.bf16.mxu0 0
  %1769 = vmatpush1.bf16.msra.mxu0 %v1219
  %1770 = vmatprep.subr.bf16.mxu0 0
  %1771 = vmatpush1.bf16.msra.mxu0 %v1220
  %1772 = vmatprep.subr.bf16.mxu0 0
  %1773 = vmatpush1.bf16.msra.mxu0 %v1221
  %1774 = vmatprep.mubr.bf16.mxu0 %v401
  %1775 = vmatmul.mubr.bf16.gmra.mrb[0].mxu0 %v400
  %v1776 = vpop.f32.mrb[0].mxu0
  %v1777 = vadd.f32 %v1737, %v1776
  %v1778 = vpop.f32.mrb[0].mxu0
  %v1779 = vpop.f32.mrb[0].mxu0
  %v1780 = vpop.f32.mrb[0].mxu0
  %1781 = vdwg.mxu0
  %1782 = vst [vmem:[%s3] sm:$0xff] %v1777
  // Predicated region
  $region14: #{text_model_forward.3} parent=0 // pred_check
    _
  $region15: #{text_model_forward.3} parent=0 // pred_check_branch
    %1784 = sbr.rel (0) target = $region17
  $region16: #{text_model_forward.3} parent=0 // pred_region
    _
  $region17: #{text_model_forward.3} parent=0 // pred_fallthru
    _
  // Predicated region
  $region18: #{text_model_forward.3} parent=0 // pred_check
    _
  $region19: #{text_model_forward.3} parent=0 // pred_check_branch
    %1786 = sbr.rel (0) target = $region21
  $region20: #{text_model_forward.3} parent=0 // pred_region
    _
  $region21: #{text_model_forward.3} parent=0 // pred_fallthru
    _

</llo_original>
